<compile_context>
chip_gen: v7x
topology: tpu7x:2x2x1
jax: 0.10.0
libtpu: 0.0.40
codegen_flags: <defaults>
</compile_context>

<pallas_src>
import functools
import math

import jax
import jax.numpy as jnp
from jax.experimental import pallas as pl
from jax.experimental.pallas import tpu as pltpu

NEG_SLOPE = 0.2
ACT_GAIN = math.sqrt(2.0)


def _round_up(x, m):
    return ((x + m - 1) // m) * m


# ----------------------------- Pallas kernel -------------------------------- #
def _matmul_bias_act_kernel(p_ref, w_ref, b_ref, o_ref, acc_ref, *, apply_act):
    # p_ref : (tm, tk) bf16  activations / im2col patches
    # w_ref : (tk, tn) bf16  scaled weights
    # b_ref : (1, tn)  f32   fused bias (conv bias + FusedLeakyReLU bias)
    # o_ref : (tm, tn) f32   output tile
    # acc_ref: (tm, tn) f32  VMEM accumulator (persists across the K grid axis)
    @pl.when(pl.program_id(2) == 0)
    def _():
        acc_ref[...] = jnp.zeros_like(acc_ref)

    acc_ref[...] += jnp.dot(p_ref[...], w_ref[...],
                            preferred_element_type=jnp.float32)

    @pl.when(pl.program_id(2) == pl.num_programs(2) - 1)
    def _():
        out = acc_ref[...] + b_ref[...]
        if apply_act:
            out = jnp.maximum(out, out * NEG_SLOPE) * ACT_GAIN
        o_ref[...] = out.astype(o_ref.dtype)


# ------------------------- gridded fused matmul ------------------------------ #
def _fused_matmul(p, w, bias, *, apply_act):
    """out = [fused_leaky_relu](p @ w + bias); bf16 MXU inputs, f32 accumulate."""
    M, Kd = p.shape
    Kd2, N = w.shape
    assert Kd == Kd2

    # --- tile sizes (128-aligned, sized to fit v7x's 64 MiB VMEM comfortably) ---
    if M >= 512:
        tm = 512
        Mp = _round_up(M, tm)
    else:
        Mp = _round_up(M, 8)
        tm = Mp
    if Kd >= 512:
        tk = 512
        Kp = _round_up(Kd, tk)
    else:
        Kp = _round_up(Kd, 128)
        tk = Kp
    Np = _round_up(N, 128)
    tn = 256 if Np % 256 == 0 else 128

    # --- pad (zero padding does not change the matmul) + cast to bf16 ---
    p_pad = jnp.pad(p.astype(jnp.bfloat16), ((0, Mp - M), (0, Kp - Kd)))
    w_pad = jnp.pad(w.astype(jnp.bfloat16), ((0, Kp - Kd), (0, Np - N)))
    if bias is None:
        bias = jnp.zeros((N,), jnp.float32)
    b_pad = jnp.pad(bias.astype(jnp.float32).reshape(1, N), ((0, 0), (0, Np - N)))

    grid = (Mp // tm, Np // tn, Kp // tk)

    cost = pl.CostEstimate(
        flops=2 * Mp * Kp * Np,
        transcendentals=0,
        bytes_accessed=Mp * Kp * 2 + Kp * Np * 2 + Mp * Np * 4 + Np * 4,
    )

    out = pl.pallas_call(
        functools.partial(_matmul_bias_act_kernel, apply_act=apply_act),
        out_shape=jax.ShapeDtypeStruct((Mp, Np), jnp.float32),
        grid_spec=pltpu.PrefetchScalarGridSpec(
            num_scalar_prefetch=0,
            grid=grid,
            in_specs=[
                pl.BlockSpec((tm, tk), lambda i, j, k: (i, k)),
                pl.BlockSpec((tk, tn), lambda i, j, k: (k, j)),
                pl.BlockSpec((1, tn), lambda i, j, k: (0, j)),
            ],
            out_specs=pl.BlockSpec((tm, tn), lambda i, j, k: (i, j)),
            scratch_shapes=[pltpu.VMEM((tm, tn), jnp.float32)],
        ),
        compiler_params=pltpu.CompilerParams(
            dimension_semantics=("parallel", "parallel", "arbitrary"),
            vmem_limit_bytes=32 * 1024 * 1024,
        ),
        cost_estimate=cost,
    )(p_pad, w_pad, b_pad)

    return out[:M, :N]


# --------------------------- layer wrappers ---------------------------------- #
def discriminator_block(x, conv_w, conv_b, act_b, *, stride=2, padding=1):
    """EqualConv2d(k=4, s=2, p=1) + FusedLeakyReLU.  x: (N, Cin, H, W) f32."""
    Nb, Cin, H, W = x.shape
    Cout, _, K, _ = conv_w.shape
    Ho = (H + 2 * padding - K) // stride + 1
    Wo = (W + 2 * padding - K) // stride + 1

    wscale = 1.0 / math.sqrt(Cin * K * K)
    w2d = (conv_w * wscale).reshape(Cout, Cin * K * K).T          # (Kd, Cout)

    # im2col glue (fused in the same jit; patches are cast to bf16 inside _fused_matmul)
    # TODO(synk): stream strided conv windows via a BlockSpec index_map instead of
    # materializing the K*K-replicated patch matrix in HBM.
    xp = jnp.pad(x, ((0, 0), (0, 0), (padding, padding), (padding, padding)))
    cols = jnp.stack(
        [xp[:, :, kh:kh + stride * Ho:stride, kw:kw + stride * Wo:stride]
         for kh in range(K) for kw in range(K)],
        axis=2,
    )                                                             # (N, Cin, K*K, Ho, Wo)
    patches = (cols.reshape(Nb, Cin * K * K, Ho, Wo)
               .transpose(0, 2, 3, 1)
               .reshape(Nb * Ho * Wo, Cin * K * K))               # (M, Kd), (c,kh,kw) order

    fused_bias = conv_b.astype(jnp.float32) + act_b.astype(jnp.float32)
    out2d = _fused_matmul(patches, w2d, fused_bias, apply_act=True)
    return out2d.reshape(Nb, Ho, Wo, Cout).transpose(0, 3, 1, 2)  # NCHW


def equal_linear(x, weight, bias, *, lr_mul=1.0, activation=False):
    """EqualLinear: y = x @ (w*scale).T [+ bias*lr_mul] [fused_leaky_relu]."""
    out_dim, in_dim = weight.shape
    scale = 1.0 / math.sqrt(in_dim) * lr_mul
    w2d = (weight * scale).T                                      # (in, out)
    b = None if bias is None else bias * lr_mul
    return _fused_matmul(x, w2d, b, apply_act=activation)


# --------------------------- Discriminator ----------------------------------- #
def init_discriminator_params(key, img_shape=(3, 32, 32), c_dim=12, n_strided=3):
    channels, _, _ = img_shape
    keys = iter(jax.random.split(key, 4 + 2 * n_strided))

    plan = [(channels, 64)]
    curr = 64
    for _ in range(n_strided - 1):
        plan.append((min(curr, 1024), min(curr * 2, 1024)))
        curr *= 2
    curr = min(curr, 1024)

    blocks = []
    for ci, co in plan:
        blocks.append(dict(
            w=jax.random.normal(next(keys), (co, ci, 4, 4), dtype=jnp.float32),
            b_conv=jnp.zeros((co,), jnp.float32),
            b_act=jnp.zeros((co,), jnp.float32),
        ))

    feat_dim = curr * 4 ** 2
    return dict(
        blocks=blocks,
        out1_l1_w=jax.random.normal(next(keys), (1024, feat_dim), dtype=jnp.float32),
        out1_l1_b=jnp.zeros((1024,), jnp.float32),
        out1_l2_w=jax.random.normal(next(keys), (1, 1024), dtype=jnp.float32),
        out2_l1_w=jax.random.normal(next(keys), (1024, feat_dim), dtype=jnp.float32),
        out2_l1_b=jnp.zeros((1024,), jnp.float32),
        out2_l2_w=jax.random.normal(next(keys), (c_dim, 1024), dtype=jnp.float32),
    )


def discriminator_forward(params, x):
    # TODO(synk): step=2/3 branches (space_to_depth / adaptive_avg_pool2d heads) not
    # implemented; this follows the module's default step=1 forward path.
    for blk in params["blocks"]:
        x = discriminator_block(x, blk["w"], blk["b_conv"], blk["b_act"])
    n = x.shape[0]
    feat = x.reshape(n, -1)                       # nn.Flatten on NCHW

    h1 = equal_linear(feat, params["out1_l1_w"], params["out1_l1_b"], activation=True)
    out_adv = equal_linear(h1, params["out1_l2_w"], None, activation=False)

    h2 = equal_linear(feat, params["out2_l1_w"], params["out2_l1_b"], activation=True)
    out_cls = equal_linear(h2, params["out2_l2_w"], None, activation=False)

    return out_adv.reshape(n, -1), out_cls.reshape(n, -1)


# ------------------------------ reference ------------------------------------ #
def _reference_forward(params, x):
    def block_ref(x, w, b_conv, b_act):
        Cin = x.shape[1]
        K = w.shape[-1]
        scale = 1.0 / math.sqrt(Cin * K * K)
        y = jax.lax.conv_general_dilated(
            x, w * scale, window_strides=(2, 2),
            padding=[(1, 1), (1, 1)],
            dimension_numbers=("NCHW", "OIHW", "NCHW"))
        y = y + b_conv.reshape(1, -1, 1, 1) + b_act.reshape(1, -1, 1, 1)
        return jnp.where(y >= 0, y, y * NEG_SLOPE) * ACT_GAIN

    def linear_ref(x, w, b, activation):
        scale = 1.0 / math.sqrt(w.shape[1])
        y = x @ (w * scale).T
        if b is not None:
            y = y + b
        if activation:
            y = jnp.where(y >= 0, y, y * NEG_SLOPE) * ACT_GAIN
        return y

    for blk in params["blocks"]:
        x = block_ref(x, blk["w"], blk["b_conv"], blk["b_act"])
    n = x.shape[0]
    feat = x.reshape(n, -1)
    h1 = linear_ref(feat, params["out1_l1_w"], params["out1_l1_b"], True)
    out_adv = linear_ref(h1, params["out1_l2_w"], None, False)
    h2 = linear_ref(feat, params["out2_l1_w"], params["out2_l1_b"], True)
    out_cls = linear_ref(h2, params["out2_l2_w"], None, False)
    return out_adv.reshape(n, -1), out_cls.reshape(n, -1)


# -------------------------------- main ---------------------------------------- #
if __name__ == "__main__":
    key = jax.random.PRNGKey(0)
    k_params, k_x = jax.random.split(key)

    # Small variant consistent with the module: img 32x32 with n_strided=3 downsamples
    # still ends at 4x4 spatial, so the curr_dim*4**2 heads are exercised as written.
    img_shape = (3, 32, 32)
    c_dim = 12
    n_strided = 3
    batch = 2

    params = init_discriminator_params(k_params, img_shape, c_dim, n_strided)
    x = jax.random.normal(k_x, (batch,) + img_shape, dtype=jnp.float32)

    fwd = jax.jit(discriminator_forward)
    out_adv, out_cls = fwd(params, x)
    out_adv, out_cls = jax.block_until_ready((out_adv, out_cls))

    ref_adv, ref_cls = _reference_forward(params, x)

    assert out_adv.shape == (batch, 1), out_adv.shape
    assert out_cls.shape == (batch, c_dim), out_cls.shape
    # bf16 MXU inputs with f32 accumulation vs a pure-f32 reference -> few-% tolerance.
    assert jnp.allclose(out_adv, ref_adv, rtol=5e-2, atol=5e-2), "out_adv mismatch"
    assert jnp.allclose(out_cls, ref_cls, rtol=5e-2, atol=5e-2), "out_cls mismatch"

    print("KERNEL_OK")
</pallas_src>

<mosaic_0001>
module attributes {stable_mosaic.version = 11 : i64} {
  func.func @_matmul_bias_act_kernel(%arg0: i32, %arg1: i32, %arg2: i32, %arg3: memref<512x128xbf16, #tpu.memory_space<vmem>>, %arg4: memref<128x128xbf16, #tpu.memory_space<vmem>>, %arg5: memref<1x128xf32, #tpu.memory_space<vmem>>, %arg6: memref<512x128xf32, #tpu.memory_space<vmem>>, %arg7: memref<512x128xf32, #tpu.memory_space<vmem>>) attributes {dimension_semantics = [#tpu.dimension_semantics<parallel>, #tpu.dimension_semantics<parallel>, #tpu.dimension_semantics<arbitrary>], iteration_bounds = array<i64: 1, 1, 1>, scalar_prefetch = 0 : i64, scratch_operands = 1 : i64, tpu.core_type = #tpu.core_type<tc>, window_params = [{transform_indices = @transform_0, window_bounds = array<i64: 512, 128>}, {transform_indices = @transform_1, window_bounds = array<i64: 128, 128>}, {transform_indices = @transform_2, window_bounds = array<i64: 1, 128>}, {transform_indices = @transform_3, window_bounds = array<i64: 512, 128>}]} {
    %c0_i32 = arith.constant 0 : i32
    %0 = arith.cmpi eq, %arg2, %c0_i32 : i32
    %1 = arith.extui %0 : i1 to i32
    %c0_i32_0 = arith.constant 0 : i32
    %2 = arith.cmpi ne, %1, %c0_i32_0 : i32
    scf.if %2 {
      %cst_10 = arith.constant 0.000000e+00 : f32
      %12 = vector.broadcast %cst_10 : f32 to vector<512x128xf32>
      %c0_11 = arith.constant 0 : index
      %c0_12 = arith.constant 0 : index
      %13 = vector.load %arg7[%c0_11, %c0_12] : memref<512x128xf32, #tpu.memory_space<vmem>>, vector<512x128xf32>
      tpu.vector_store %arg7[%c0_11, %c0_12], %12 {strides = array<i32>} : memref<512x128xf32, #tpu.memory_space<vmem>>, vector<512x128xf32>,
    } else {
    }
    %c0 = arith.constant 0 : index
    %c0_1 = arith.constant 0 : index
    %3 = vector.load %arg7[%c0, %c0_1] : memref<512x128xf32, #tpu.memory_space<vmem>>, vector<512x128xf32>
    %c0_2 = arith.constant 0 : index
    %c0_3 = arith.constant 0 : index
    %4 = vector.load %arg3[%c0_2, %c0_3] : memref<512x128xbf16, #tpu.memory_space<vmem>>, vector<512x128xbf16>
    %c0_4 = arith.constant 0 : index
    %c0_5 = arith.constant 0 : index
    %5 = vector.load %arg4[%c0_4, %c0_5] : memref<128x128xbf16, #tpu.memory_space<vmem>>, vector<128x128xbf16>
    %cst = arith.constant dense<0.000000e+00> : vector<512x128xf32>
    %6 = tpu.matmul %4, %5, %cst {dimension_numbers = #tpu.dot_dimension_numbers<[1], [0], [0], [1], [0, 0, 1, 1], [], []>} : vector<512x128xbf16>, vector<128x128xbf16>, vector<512x128xf32> -> vector<512x128xf32>
    %7 = arith.addf %3, %6 : vector<512x128xf32>
    %c0_6 = arith.constant 0 : index
    %c0_7 = arith.constant 0 : index
    %8 = vector.load %arg7[%c0_6, %c0_7] : memref<512x128xf32, #tpu.memory_space<vmem>>, vector<512x128xf32>
    tpu.vector_store %arg7[%c0_6, %c0_7], %7 {strides = array<i32>} : memref<512x128xf32, #tpu.memory_space<vmem>>, vector<512x128xf32>,
    %c0_i32_8 = arith.constant 0 : i32
    %9 = arith.cmpi eq, %arg2, %c0_i32_8 : i32
    %10 = arith.extui %9 : i1 to i32
    %c0_i32_9 = arith.constant 0 : i32
    %11 = arith.cmpi ne, %10, %c0_i32_9 : i32
    scf.if %11 {
      %c0_10 = arith.constant 0 : index
      %c0_11 = arith.constant 0 : index
      %12 = vector.load %arg7[%c0_10, %c0_11] : memref<512x128xf32, #tpu.memory_space<vmem>>, vector<512x128xf32>
      %c0_12 = arith.constant 0 : index
      %c0_13 = arith.constant 0 : index
      %13 = vector.load %arg5[%c0_12, %c0_13] : memref<1x128xf32, #tpu.memory_space<vmem>>, vector<1x128xf32>
      %14 = vector.broadcast %13 : vector<1x128xf32> to vector<512x128xf32>
      %15 = arith.addf %12, %14 : vector<512x128xf32>
      %cst_14 = arith.constant 2.000000e-01 : f32
      %16 = vector.broadcast %cst_14 : f32 to vector<512x128xf32>
      %17 = arith.mulf %15, %16 : vector<512x128xf32>
      %18 = arith.maximumf %15, %17 : vector<512x128xf32>
      %cst_15 = arith.constant 1.41421354 : f32
      %19 = vector.broadcast %cst_15 : f32 to vector<512x128xf32>
      %20 = arith.mulf %18, %19 : vector<512x128xf32>
      %c0_16 = arith.constant 0 : index
      %c0_17 = arith.constant 0 : index
      %21 = vector.load %arg6[%c0_16, %c0_17] : memref<512x128xf32, #tpu.memory_space<vmem>>, vector<512x128xf32>
      tpu.vector_store %arg6[%c0_16, %c0_17], %20 {strides = array<i32>} : memref<512x128xf32, #tpu.memory_space<vmem>>, vector<512x128xf32>,
    } else {
    }
    return
  }
  func.func @transform_0(%arg0: i32, %arg1: i32, %arg2: i32) -> (i32, i32) {
    %c0_i32 = arith.constant 0 : i32
    return %arg0, %arg2 : i32, i32
  }
  func.func @transform_1(%arg0: i32, %arg1: i32, %arg2: i32) -> (i32, i32) {
    %c0_i32 = arith.constant 0 : i32
    return %arg2, %arg1 : i32, i32
  }
  func.func @transform_2(%arg0: i32, %arg1: i32, %arg2: i32) -> (i32, i32) {
    %c0_i32 = arith.constant 0 : i32
    %c0_i32_0 = arith.constant 0 : i32
    return %c0_i32, %arg1 : i32, i32
  }
  func.func @transform_3(%arg0: i32, %arg1: i32, %arg2: i32) -> (i32, i32) {
    %c0_i32 = arith.constant 0 : i32
    return %arg0, %arg1 : i32, i32
  }
}

module attributes {stable_mosaic.version = 11 : i64} {
  func.func @_matmul_bias_act_kernel(%arg0: i32, %arg1: i32, %arg2: i32, %arg3: memref<128x512xbf16, #tpu.memory_space<vmem>>, %arg4: memref<512x128xbf16, #tpu.memory_space<vmem>>, %arg5: memref<1x128xf32, #tpu.memory_space<vmem>>, %arg6: memref<128x128xf32, #tpu.memory_space<vmem>>, %arg7: memref<128x128xf32, #tpu.memory_space<vmem>>) attributes {dimension_semantics = [#tpu.dimension_semantics<parallel>, #tpu.dimension_semantics<parallel>, #tpu.dimension_semantics<arbitrary>], iteration_bounds = array<i64: 1, 1, 2>, scalar_prefetch = 0 : i64, scratch_operands = 1 : i64, tpu.core_type = #tpu.core_type<tc>, window_params = [{transform_indices = @transform_0, window_bounds = array<i64: 128, 512>}, {transform_indices = @transform_1, window_bounds = array<i64: 512, 128>}, {transform_indices = @transform_2, window_bounds = array<i64: 1, 128>}, {transform_indices = @transform_3, window_bounds = array<i64: 128, 128>}]} {
    %c0_i32 = arith.constant 0 : i32
    %0 = arith.cmpi eq, %arg2, %c0_i32 : i32
    %1 = arith.extui %0 : i1 to i32
    %c0_i32_0 = arith.constant 0 : i32
    %2 = arith.cmpi ne, %1, %c0_i32_0 : i32
    scf.if %2 {
      %cst_9 = arith.constant 0.000000e+00 : f32
      %12 = vector.broadcast %cst_9 : f32 to vector<128x128xf32>
      %c0_10 = arith.constant 0 : index
      %c0_11 = arith.constant 0 : index
      %13 = vector.load %arg7[%c0_10, %c0_11] : memref<128x128xf32, #tpu.memory_space<vmem>>, vector<128x128xf32>
      tpu.vector_store %arg7[%c0_10, %c0_11], %12 {strides = array<i32>} : memref<128x128xf32, #tpu.memory_space<vmem>>, vector<128x128xf32>,
    } else {
    }
    %c0 = arith.constant 0 : index
    %c0_1 = arith.constant 0 : index
    %3 = vector.load %arg7[%c0, %c0_1] : memref<128x128xf32, #tpu.memory_space<vmem>>, vector<128x128xf32>
    %c0_2 = arith.constant 0 : index
    %c0_3 = arith.constant 0 : index
    %4 = vector.load %arg3[%c0_2, %c0_3] : memref<128x512xbf16, #tpu.memory_space<vmem>>, vector<128x512xbf16>
    %c0_4 = arith.constant 0 : index
    %c0_5 = arith.constant 0 : index
    %5 = vector.load %arg4[%c0_4, %c0_5] : memref<512x128xbf16, #tpu.memory_space<vmem>>, vector<512x128xbf16>
    %cst = arith.constant dense<0.000000e+00> : vector<128x128xf32>
    %6 = tpu.matmul %4, %5, %cst {dimension_numbers = #tpu.dot_dimension_numbers<[1], [0], [0], [1], [0, 0, 1, 1], [], []>} : vector<128x512xbf16>, vector<512x128xbf16>, vector<128x128xf32> -> vector<128x128xf32>
    %7 = arith.addf %3, %6 : vector<128x128xf32>
    %c0_6 = arith.constant 0 : index
    %c0_7 = arith.constant 0 : index
    %8 = vector.load %arg7[%c0_6, %c0_7] : memref<128x128xf32, #tpu.memory_space<vmem>>, vector<128x128xf32>
    tpu.vector_store %arg7[%c0_6, %c0_7], %7 {strides = array<i32>} : memref<128x128xf32, #tpu.memory_space<vmem>>, vector<128x128xf32>,
    %c1_i32 = arith.constant 1 : i32
    %9 = arith.cmpi eq, %arg2, %c1_i32 : i32
    %10 = arith.extui %9 : i1 to i32
    %c0_i32_8 = arith.constant 0 : i32
    %11 = arith.cmpi ne, %10, %c0_i32_8 : i32
    scf.if %11 {
      %c0_9 = arith.constant 0 : index
      %c0_10 = arith.constant 0 : index
      %12 = vector.load %arg7[%c0_9, %c0_10] : memref<128x128xf32, #tpu.memory_space<vmem>>, vector<128x128xf32>
      %c0_11 = arith.constant 0 : index
      %c0_12 = arith.constant 0 : index
      %13 = vector.load %arg5[%c0_11, %c0_12] : memref<1x128xf32, #tpu.memory_space<vmem>>, vector<1x128xf32>
      %14 = vector.broadcast %13 : vector<1x128xf32> to vector<128x128xf32>
      %15 = arith.addf %12, %14 : vector<128x128xf32>
      %cst_13 = arith.constant 2.000000e-01 : f32
      %16 = vector.broadcast %cst_13 : f32 to vector<128x128xf32>
      %17 = arith.mulf %15, %16 : vector<128x128xf32>
      %18 = arith.maximumf %15, %17 : vector<128x128xf32>
      %cst_14 = arith.constant 1.41421354 : f32
      %19 = vector.broadcast %cst_14 : f32 to vector<128x128xf32>
      %20 = arith.mulf %18, %19 : vector<128x128xf32>
      %c0_15 = arith.constant 0 : index
      %c0_16 = arith.constant 0 : index
      %21 = vector.load %arg6[%c0_15, %c0_16] : memref<128x128xf32, #tpu.memory_space<vmem>>, vector<128x128xf32>
      tpu.vector_store %arg6[%c0_15, %c0_16], %20 {strides = array<i32>} : memref<128x128xf32, #tpu.memory_space<vmem>>, vector<128x128xf32>,
    } else {
    }
    return
  }
  func.func @transform_0(%arg0: i32, %arg1: i32, %arg2: i32) -> (i32, i32) {
    %c0_i32 = arith.constant 0 : i32
    return %arg0, %arg2 : i32, i32
  }
  func.func @transform_1(%arg0: i32, %arg1: i32, %arg2: i32) -> (i32, i32) {
    %c0_i32 = arith.constant 0 : i32
    return %arg2, %arg1 : i32, i32
  }
  func.func @transform_2(%arg0: i32, %arg1: i32, %arg2: i32) -> (i32, i32) {
    %c0_i32 = arith.constant 0 : i32
    %c0_i32_0 = arith.constant 0 : i32
    return %c0_i32, %arg1 : i32, i32
  }
  func.func @transform_3(%arg0: i32, %arg1: i32, %arg2: i32) -> (i32, i32) {
    %c0_i32 = arith.constant 0 : i32
    return %arg0, %arg1 : i32, i32
  }
}

module attributes {stable_mosaic.version = 11 : i64} {
  func.func @_matmul_bias_act_kernel(%arg0: i32, %arg1: i32, %arg2: i32, %arg3: memref<32x512xbf16, #tpu.memory_space<vmem>>, %arg4: memref<512x256xbf16, #tpu.memory_space<vmem>>, %arg5: memref<1x256xf32, #tpu.memory_space<vmem>>, %arg6: memref<32x256xf32, #tpu.memory_space<vmem>>, %arg7: memref<32x256xf32, #tpu.memory_space<vmem>>) attributes {dimension_semantics = [#tpu.dimension_semantics<parallel>, #tpu.dimension_semantics<parallel>, #tpu.dimension_semantics<arbitrary>], iteration_bounds = array<i64: 1, 1, 4>, scalar_prefetch = 0 : i64, scratch_operands = 1 : i64, tpu.core_type = #tpu.core_type<tc>, window_params = [{transform_indices = @transform_0, window_bounds = array<i64: 32, 512>}, {transform_indices = @transform_1, window_bounds = array<i64: 512, 256>}, {transform_indices = @transform_2, window_bounds = array<i64: 1, 256>}, {transform_indices = @transform_3, window_bounds = array<i64: 32, 256>}]} {
    %c0_i32 = arith.constant 0 : i32
    %0 = arith.cmpi eq, %arg2, %c0_i32 : i32
    %1 = arith.extui %0 : i1 to i32
    %c0_i32_0 = arith.constant 0 : i32
    %2 = arith.cmpi ne, %1, %c0_i32_0 : i32
    scf.if %2 {
      %cst_9 = arith.constant 0.000000e+00 : f32
      %12 = vector.broadcast %cst_9 : f32 to vector<32x256xf32>
      %c0_10 = arith.constant 0 : index
      %c0_11 = arith.constant 0 : index
      %13 = vector.load %arg7[%c0_10, %c0_11] : memref<32x256xf32, #tpu.memory_space<vmem>>, vector<32x256xf32>
      tpu.vector_store %arg7[%c0_10, %c0_11], %12 {strides = array<i32>} : memref<32x256xf32, #tpu.memory_space<vmem>>, vector<32x256xf32>,
    } else {
    }
    %c0 = arith.constant 0 : index
    %c0_1 = arith.constant 0 : index
    %3 = vector.load %arg7[%c0, %c0_1] : memref<32x256xf32, #tpu.memory_space<vmem>>, vector<32x256xf32>
    %c0_2 = arith.constant 0 : index
    %c0_3 = arith.constant 0 : index
    %4 = vector.load %arg3[%c0_2, %c0_3] : memref<32x512xbf16, #tpu.memory_space<vmem>>, vector<32x512xbf16>
    %c0_4 = arith.constant 0 : index
    %c0_5 = arith.constant 0 : index
    %5 = vector.load %arg4[%c0_4, %c0_5] : memref<512x256xbf16, #tpu.memory_space<vmem>>, vector<512x256xbf16>
    %cst = arith.constant dense<0.000000e+00> : vector<32x256xf32>
    %6 = tpu.matmul %4, %5, %cst {dimension_numbers = #tpu.dot_dimension_numbers<[1], [0], [0], [1], [0, 0, 1, 1], [], []>} : vector<32x512xbf16>, vector<512x256xbf16>, vector<32x256xf32> -> vector<32x256xf32>
    %7 = arith.addf %3, %6 : vector<32x256xf32>
    %c0_6 = arith.constant 0 : index
    %c0_7 = arith.constant 0 : index
    %8 = vector.load %arg7[%c0_6, %c0_7] : memref<32x256xf32, #tpu.memory_space<vmem>>, vector<32x256xf32>
    tpu.vector_store %arg7[%c0_6, %c0_7], %7 {strides = array<i32>} : memref<32x256xf32, #tpu.memory_space<vmem>>, vector<32x256xf32>,
    %c3_i32 = arith.constant 3 : i32
    %9 = arith.cmpi eq, %arg2, %c3_i32 : i32
    %10 = arith.extui %9 : i1 to i32
    %c0_i32_8 = arith.constant 0 : i32
    %11 = arith.cmpi ne, %10, %c0_i32_8 : i32
    scf.if %11 {
      %c0_9 = arith.constant 0 : index
      %c0_10 = arith.constant 0 : index
      %12 = vector.load %arg7[%c0_9, %c0_10] : memref<32x256xf32, #tpu.memory_space<vmem>>, vector<32x256xf32>
      %c0_11 = arith.constant 0 : index
      %c0_12 = arith.constant 0 : index
      %13 = vector.load %arg5[%c0_11, %c0_12] : memref<1x256xf32, #tpu.memory_space<vmem>>, vector<1x256xf32>
      %14 = vector.broadcast %13 : vector<1x256xf32> to vector<32x256xf32>
      %15 = arith.addf %12, %14 : vector<32x256xf32>
      %cst_13 = arith.constant 2.000000e-01 : f32
      %16 = vector.broadcast %cst_13 : f32 to vector<32x256xf32>
      %17 = arith.mulf %15, %16 : vector<32x256xf32>
      %18 = arith.maximumf %15, %17 : vector<32x256xf32>
      %cst_14 = arith.constant 1.41421354 : f32
      %19 = vector.broadcast %cst_14 : f32 to vector<32x256xf32>
      %20 = arith.mulf %18, %19 : vector<32x256xf32>
      %c0_15 = arith.constant 0 : index
      %c0_16 = arith.constant 0 : index
      %21 = vector.load %arg6[%c0_15, %c0_16] : memref<32x256xf32, #tpu.memory_space<vmem>>, vector<32x256xf32>
      tpu.vector_store %arg6[%c0_15, %c0_16], %20 {strides = array<i32>} : memref<32x256xf32, #tpu.memory_space<vmem>>, vector<32x256xf32>,
    } else {
    }
    return
  }
  func.func @transform_0(%arg0: i32, %arg1: i32, %arg2: i32) -> (i32, i32) {
    %c0_i32 = arith.constant 0 : i32
    return %arg0, %arg2 : i32, i32
  }
  func.func @transform_1(%arg0: i32, %arg1: i32, %arg2: i32) -> (i32, i32) {
    %c0_i32 = arith.constant 0 : i32
    return %arg2, %arg1 : i32, i32
  }
  func.func @transform_2(%arg0: i32, %arg1: i32, %arg2: i32) -> (i32, i32) {
    %c0_i32 = arith.constant 0 : i32
    %c0_i32_0 = arith.constant 0 : i32
    return %c0_i32, %arg1 : i32, i32
  }
  func.func @transform_3(%arg0: i32, %arg1: i32, %arg2: i32) -> (i32, i32) {
    %c0_i32 = arith.constant 0 : i32
    return %arg0, %arg1 : i32, i32
  }
}

module attributes {stable_mosaic.version = 11 : i64} {
  func.func @_matmul_bias_act_kernel(%arg0: i32, %arg1: i32, %arg2: i32, %arg3: memref<8x512xbf16, #tpu.memory_space<vmem>>, %arg4: memref<512x256xbf16, #tpu.memory_space<vmem>>, %arg5: memref<1x256xf32, #tpu.memory_space<vmem>>, %arg6: memref<8x256xf32, #tpu.memory_space<vmem>>, %arg7: memref<8x256xf32, #tpu.memory_space<vmem>>) attributes {dimension_semantics = [#tpu.dimension_semantics<parallel>, #tpu.dimension_semantics<parallel>, #tpu.dimension_semantics<arbitrary>], iteration_bounds = array<i64: 1, 4, 8>, scalar_prefetch = 0 : i64, scratch_operands = 1 : i64, tpu.core_type = #tpu.core_type<tc>, window_params = [{transform_indices = @transform_0, window_bounds = array<i64: 8, 512>}, {transform_indices = @transform_1, window_bounds = array<i64: 512, 256>}, {transform_indices = @transform_2, window_bounds = array<i64: 1, 256>}, {transform_indices = @transform_3, window_bounds = array<i64: 8, 256>}]} {
    %c0_i32 = arith.constant 0 : i32
    %0 = arith.cmpi eq, %arg2, %c0_i32 : i32
    %1 = arith.extui %0 : i1 to i32
    %c0_i32_0 = arith.constant 0 : i32
    %2 = arith.cmpi ne, %1, %c0_i32_0 : i32
    scf.if %2 {
      %cst_9 = arith.constant 0.000000e+00 : f32
      %12 = vector.broadcast %cst_9 : f32 to vector<8x256xf32>
      %c0_10 = arith.constant 0 : index
      %c0_11 = arith.constant 0 : index
      %13 = vector.load %arg7[%c0_10, %c0_11] : memref<8x256xf32, #tpu.memory_space<vmem>>, vector<8x256xf32>
      tpu.vector_store %arg7[%c0_10, %c0_11], %12 {strides = array<i32>} : memref<8x256xf32, #tpu.memory_space<vmem>>, vector<8x256xf32>,
    } else {
    }
    %c0 = arith.constant 0 : index
    %c0_1 = arith.constant 0 : index
    %3 = vector.load %arg7[%c0, %c0_1] : memref<8x256xf32, #tpu.memory_space<vmem>>, vector<8x256xf32>
    %c0_2 = arith.constant 0 : index
    %c0_3 = arith.constant 0 : index
    %4 = vector.load %arg3[%c0_2, %c0_3] : memref<8x512xbf16, #tpu.memory_space<vmem>>, vector<8x512xbf16>
    %c0_4 = arith.constant 0 : index
    %c0_5 = arith.constant 0 : index
    %5 = vector.load %arg4[%c0_4, %c0_5] : memref<512x256xbf16, #tpu.memory_space<vmem>>, vector<512x256xbf16>
    %cst = arith.constant dense<0.000000e+00> : vector<8x256xf32>
    %6 = tpu.matmul %4, %5, %cst {dimension_numbers = #tpu.dot_dimension_numbers<[1], [0], [0], [1], [0, 0, 1, 1], [], []>} : vector<8x512xbf16>, vector<512x256xbf16>, vector<8x256xf32> -> vector<8x256xf32>
    %7 = arith.addf %3, %6 : vector<8x256xf32>
    %c0_6 = arith.constant 0 : index
    %c0_7 = arith.constant 0 : index
    %8 = vector.load %arg7[%c0_6, %c0_7] : memref<8x256xf32, #tpu.memory_space<vmem>>, vector<8x256xf32>
    tpu.vector_store %arg7[%c0_6, %c0_7], %7 {strides = array<i32>} : memref<8x256xf32, #tpu.memory_space<vmem>>, vector<8x256xf32>,
    %c7_i32 = arith.constant 7 : i32
    %9 = arith.cmpi eq, %arg2, %c7_i32 : i32
    %10 = arith.extui %9 : i1 to i32
    %c0_i32_8 = arith.constant 0 : i32
    %11 = arith.cmpi ne, %10, %c0_i32_8 : i32
    scf.if %11 {
      %c0_9 = arith.constant 0 : index
      %c0_10 = arith.constant 0 : index
      %12 = vector.load %arg7[%c0_9, %c0_10] : memref<8x256xf32, #tpu.memory_space<vmem>>, vector<8x256xf32>
      %c0_11 = arith.constant 0 : index
      %c0_12 = arith.constant 0 : index
      %13 = vector.load %arg5[%c0_11, %c0_12] : memref<1x256xf32, #tpu.memory_space<vmem>>, vector<1x256xf32>
      %14 = vector.broadcast %13 : vector<1x256xf32> to vector<8x256xf32>
      %15 = arith.addf %12, %14 : vector<8x256xf32>
      %cst_13 = arith.constant 2.000000e-01 : f32
      %16 = vector.broadcast %cst_13 : f32 to vector<8x256xf32>
      %17 = arith.mulf %15, %16 : vector<8x256xf32>
      %18 = arith.maximumf %15, %17 : vector<8x256xf32>
      %cst_14 = arith.constant 1.41421354 : f32
      %19 = vector.broadcast %cst_14 : f32 to vector<8x256xf32>
      %20 = arith.mulf %18, %19 : vector<8x256xf32>
      %c0_15 = arith.constant 0 : index
      %c0_16 = arith.constant 0 : index
      %21 = vector.load %arg6[%c0_15, %c0_16] : memref<8x256xf32, #tpu.memory_space<vmem>>, vector<8x256xf32>
      tpu.vector_store %arg6[%c0_15, %c0_16], %20 {strides = array<i32>} : memref<8x256xf32, #tpu.memory_space<vmem>>, vector<8x256xf32>,
    } else {
    }
    return
  }
  func.func @transform_0(%arg0: i32, %arg1: i32, %arg2: i32) -> (i32, i32) {
    %c0_i32 = arith.constant 0 : i32
    return %arg0, %arg2 : i32, i32
  }
  func.func @transform_1(%arg0: i32, %arg1: i32, %arg2: i32) -> (i32, i32) {
    %c0_i32 = arith.constant 0 : i32
    return %arg2, %arg1 : i32, i32
  }
  func.func @transform_2(%arg0: i32, %arg1: i32, %arg2: i32) -> (i32, i32) {
    %c0_i32 = arith.constant 0 : i32
    %c0_i32_0 = arith.constant 0 : i32
    return %c0_i32, %arg1 : i32, i32
  }
  func.func @transform_3(%arg0: i32, %arg1: i32, %arg2: i32) -> (i32, i32) {
    %c0_i32 = arith.constant 0 : i32
    return %arg0, %arg1 : i32, i32
  }
}

module attributes {stable_mosaic.version = 11 : i64} {
  func.func @_matmul_bias_act_kernel(%arg0: i32, %arg1: i32, %arg2: i32, %arg3: memref<8x512xbf16, #tpu.memory_space<vmem>>, %arg4: memref<512x128xbf16, #tpu.memory_space<vmem>>, %arg5: memref<1x128xf32, #tpu.memory_space<vmem>>, %arg6: memref<8x128xf32, #tpu.memory_space<vmem>>, %arg7: memref<8x128xf32, #tpu.memory_space<vmem>>) attributes {dimension_semantics = [#tpu.dimension_semantics<parallel>, #tpu.dimension_semantics<parallel>, #tpu.dimension_semantics<arbitrary>], iteration_bounds = array<i64: 1, 1, 2>, scalar_prefetch = 0 : i64, scratch_operands = 1 : i64, tpu.core_type = #tpu.core_type<tc>, window_params = [{transform_indices = @transform_0, window_bounds = array<i64: 8, 512>}, {transform_indices = @transform_1, window_bounds = array<i64: 512, 128>}, {transform_indices = @transform_2, window_bounds = array<i64: 1, 128>}, {transform_indices = @transform_3, window_bounds = array<i64: 8, 128>}]} {
    %c0_i32 = arith.constant 0 : i32
    %0 = arith.cmpi eq, %arg2, %c0_i32 : i32
    %1 = arith.extui %0 : i1 to i32
    %c0_i32_0 = arith.constant 0 : i32
    %2 = arith.cmpi ne, %1, %c0_i32_0 : i32
    scf.if %2 {
      %cst_9 = arith.constant 0.000000e+00 : f32
      %12 = vector.broadcast %cst_9 : f32 to vector<8x128xf32>
      %c0_10 = arith.constant 0 : index
      %c0_11 = arith.constant 0 : index
      %13 = vector.load %arg7[%c0_10, %c0_11] : memref<8x128xf32, #tpu.memory_space<vmem>>, vector<8x128xf32>
      tpu.vector_store %arg7[%c0_10, %c0_11], %12 {strides = array<i32>} : memref<8x128xf32, #tpu.memory_space<vmem>>, vector<8x128xf32>,
    } else {
    }
    %c0 = arith.constant 0 : index
    %c0_1 = arith.constant 0 : index
    %3 = vector.load %arg7[%c0, %c0_1] : memref<8x128xf32, #tpu.memory_space<vmem>>, vector<8x128xf32>
    %c0_2 = arith.constant 0 : index
    %c0_3 = arith.constant 0 : index
    %4 = vector.load %arg3[%c0_2, %c0_3] : memref<8x512xbf16, #tpu.memory_space<vmem>>, vector<8x512xbf16>
    %c0_4 = arith.constant 0 : index
    %c0_5 = arith.constant 0 : index
    %5 = vector.load %arg4[%c0_4, %c0_5] : memref<512x128xbf16, #tpu.memory_space<vmem>>, vector<512x128xbf16>
    %cst = arith.constant dense<0.000000e+00> : vector<8x128xf32>
    %6 = tpu.matmul %4, %5, %cst {dimension_numbers = #tpu.dot_dimension_numbers<[1], [0], [0], [1], [0, 0, 1, 1], [], []>} : vector<8x512xbf16>, vector<512x128xbf16>, vector<8x128xf32> -> vector<8x128xf32>
    %7 = arith.addf %3, %6 : vector<8x128xf32>
    %c0_6 = arith.constant 0 : index
    %c0_7 = arith.constant 0 : index
    %8 = vector.load %arg7[%c0_6, %c0_7] : memref<8x128xf32, #tpu.memory_space<vmem>>, vector<8x128xf32>
    tpu.vector_store %arg7[%c0_6, %c0_7], %7 {strides = array<i32>} : memref<8x128xf32, #tpu.memory_space<vmem>>, vector<8x128xf32>,
    %c1_i32 = arith.constant 1 : i32
    %9 = arith.cmpi eq, %arg2, %c1_i32 : i32
    %10 = arith.extui %9 : i1 to i32
    %c0_i32_8 = arith.constant 0 : i32
    %11 = arith.cmpi ne, %10, %c0_i32_8 : i32
    scf.if %11 {
      %c0_9 = arith.constant 0 : index
      %c0_10 = arith.constant 0 : index
      %12 = vector.load %arg7[%c0_9, %c0_10] : memref<8x128xf32, #tpu.memory_space<vmem>>, vector<8x128xf32>
      %c0_11 = arith.constant 0 : index
      %c0_12 = arith.constant 0 : index
      %13 = vector.load %arg5[%c0_11, %c0_12] : memref<1x128xf32, #tpu.memory_space<vmem>>, vector<1x128xf32>
      %14 = vector.broadcast %13 : vector<1x128xf32> to vector<8x128xf32>
      %15 = arith.addf %12, %14 : vector<8x128xf32>
      %c0_13 = arith.constant 0 : index
      %c0_14 = arith.constant 0 : index
      %16 = vector.load %arg6[%c0_13, %c0_14] : memref<8x128xf32, #tpu.memory_space<vmem>>, vector<8x128xf32>
      tpu.vector_store %arg6[%c0_13, %c0_14], %15 {strides = array<i32>} : memref<8x128xf32, #tpu.memory_space<vmem>>, vector<8x128xf32>,
    } else {
    }
    return
  }
  func.func @transform_0(%arg0: i32, %arg1: i32, %arg2: i32) -> (i32, i32) {
    %c0_i32 = arith.constant 0 : i32
    return %arg0, %arg2 : i32, i32
  }
  func.func @transform_1(%arg0: i32, %arg1: i32, %arg2: i32) -> (i32, i32) {
    %c0_i32 = arith.constant 0 : i32
    return %arg2, %arg1 : i32, i32
  }
  func.func @transform_2(%arg0: i32, %arg1: i32, %arg2: i32) -> (i32, i32) {
    %c0_i32 = arith.constant 0 : i32
    %c0_i32_0 = arith.constant 0 : i32
    return %c0_i32, %arg1 : i32, i32
  }
  func.func @transform_3(%arg0: i32, %arg1: i32, %arg2: i32) -> (i32, i32) {
    %c0_i32 = arith.constant 0 : i32
    return %arg0, %arg1 : i32, i32
  }
}

</mosaic_0001>

<llo_original>
// kernel: discriminator_forward.7
$region0: #{discriminator_forward.7}
  #allocation0 [shape = 'u32[]', space=smem, size = 0x4, offset = 0x4, fixed_abs, tag = 'smem constant byte address 0x4 - core index']
  #allocation1 [shape = 'u32[144,128]{1,0:T(1,128)}', space=vmem, size = 0x12000, scoped, tag = 'internal scratch']
  #allocation2 [shape = 'f32[512,128]{1,0:T(8,128)}', space=vmem, size = 0x40000, scoped, tag = 'scratch operand']
  %s0 = inlined_call_operand.vmem [shape: bf16[512,128], index: 0, kind: input, shape index: {}]
  %s1 = inlined_call_operand.vmem [shape: bf16[128,128], index: 1, kind: input, shape index: {}]
  %s2 = inlined_call_operand.vmem [shape: f32[1,128], index: 2, kind: input, shape index: {}]
  %s3 = inlined_call_operand.vmem [shape: f32[512,128], index: 3, kind: output, shape index: {}]
  %s4 = sld [smem:[#allocation0]]
  $region30: #{discriminator_forward.7} parent=0
    _
  %s6 = ssub.s32 1, %s4
  %s7 = scalar_select 0, %s6, %s4
  // Predicated region
  $region2: #{discriminator_forward.7} parent=0 // pred_check
    _
  $region3: #{discriminator_forward.7} parent=0 // pred_check_branch
    %9 = sbr.rel (0) target = $region5
  $region4: #{discriminator_forward.7} parent=0 // pred_region
    _
  $region5: #{discriminator_forward.7} parent=0 // pred_fallthru
    _
  // Predicated region
  $region6: #{discriminator_forward.7} parent=0 // pred_check
    _
  $region7: #{discriminator_forward.7} parent=0 // pred_check_branch
    %11 = sbr.rel (0) target = $region9
  $region8: #{discriminator_forward.7} parent=0 // pred_region
    _
  $region9: #{discriminator_forward.7} parent=0 // pred_fallthru
    _
  // Predicated region
  $region10: #{discriminator_forward.7} parent=0 // pred_check
    _
  $region11: #{discriminator_forward.7} parent=0 // pred_check_branch
    %13 = sbr.rel (0) target = $region13
  $region12: #{discriminator_forward.7} parent=0 // pred_region
    _
  $region13: #{discriminator_forward.7} parent=0 // pred_fallthru
    _
  %p15 = scmp.eq.s32.totalorder 0, 0
  // Predicated region
  $region14: #{discriminator_forward.7} parent=0 // pred_check
    %p16 = pneg %p15
  $region15: #{discriminator_forward.7} parent=0 // pred_check_branch
    %18 = sbr.rel (%p16) target = $region17
  $region16: #{discriminator_forward.7} parent=0 // pred_region
    %19 = vst [vmem:[#allocation2] sm:$0xff] 0.0
    %20 = vst [vmem:[#allocation2 + $0x8] sm:$0xff] 0.0
    %21 = vst [vmem:[#allocation2 + $0x10] sm:$0xff] 0.0
    %22 = vst [vmem:[#allocation2 + $0x18] sm:$0xff] 0.0
    %23 = vst [vmem:[#allocation2 + $0x20] sm:$0xff] 0.0
    %24 = vst [vmem:[#allocation2 + $0x28] sm:$0xff] 0.0
    %25 = vst [vmem:[#allocation2 + $0x30] sm:$0xff] 0.0
    %26 = vst [vmem:[#allocation2 + $0x38] sm:$0xff] 0.0
    %27 = vst [vmem:[#allocation2 + $0x40] sm:$0xff] 0.0
    %28 = vst [vmem:[#allocation2 + $0x48] sm:$0xff] 0.0
    %29 = vst [vmem:[#allocation2 + $0x50] sm:$0xff] 0.0
    %30 = vst [vmem:[#allocation2 + $0x58] sm:$0xff] 0.0
    %31 = vst [vmem:[#allocation2 + $0x60] sm:$0xff] 0.0
    %32 = vst [vmem:[#allocation2 + $0x68] sm:$0xff] 0.0
    %33 = vst [vmem:[#allocation2 + $0x70] sm:$0xff] 0.0
    %34 = vst [vmem:[#allocation2 + $0x78] sm:$0xff] 0.0
    %35 = vst [vmem:[#allocation2 + $0x80] sm:$0xff] 0.0
    %36 = vst [vmem:[#allocation2 + $0x88] sm:$0xff] 0.0
    %37 = vst [vmem:[#allocation2 + $0x90] sm:$0xff] 0.0
    %38 = vst [vmem:[#allocation2 + $0x98] sm:$0xff] 0.0
    %39 = vst [vmem:[#allocation2 + $0xa0] sm:$0xff] 0.0
    %40 = vst [vmem:[#allocation2 + $0xa8] sm:$0xff] 0.0
    %41 = vst [vmem:[#allocation2 + $0xb0] sm:$0xff] 0.0
    %42 = vst [vmem:[#allocation2 + $0xb8] sm:$0xff] 0.0
    %43 = vst [vmem:[#allocation2 + $0xc0] sm:$0xff] 0.0
    %44 = vst [vmem:[#allocation2 + $0xc8] sm:$0xff] 0.0
    %45 = vst [vmem:[#allocation2 + $0xd0] sm:$0xff] 0.0
    %46 = vst [vmem:[#allocation2 + $0xd8] sm:$0xff] 0.0
    %47 = vst [vmem:[#allocation2 + $0xe0] sm:$0xff] 0.0
    %48 = vst [vmem:[#allocation2 + $0xe8] sm:$0xff] 0.0
    %49 = vst [vmem:[#allocation2 + $0xf0] sm:$0xff] 0.0
    %50 = vst [vmem:[#allocation2 + $0xf8] sm:$0xff] 0.0
    %51 = vst [vmem:[#allocation2 + $0x100] sm:$0xff] 0.0
    %52 = vst [vmem:[#allocation2 + $0x108] sm:$0xff] 0.0
    %53 = vst [vmem:[#allocation2 + $0x110] sm:$0xff] 0.0
    %54 = vst [vmem:[#allocation2 + $0x118] sm:$0xff] 0.0
    %55 = vst [vmem:[#allocation2 + $0x120] sm:$0xff] 0.0
    %56 = vst [vmem:[#allocation2 + $0x128] sm:$0xff] 0.0
    %57 = vst [vmem:[#allocation2 + $0x130] sm:$0xff] 0.0
    %58 = vst [vmem:[#allocation2 + $0x138] sm:$0xff] 0.0
    %59 = vst [vmem:[#allocation2 + $0x140] sm:$0xff] 0.0
    %60 = vst [vmem:[#allocation2 + $0x148] sm:$0xff] 0.0
    %61 = vst [vmem:[#allocation2 + $0x150] sm:$0xff] 0.0
    %62 = vst [vmem:[#allocation2 + $0x158] sm:$0xff] 0.0
    %63 = vst [vmem:[#allocation2 + $0x160] sm:$0xff] 0.0
    %64 = vst [vmem:[#allocation2 + $0x168] sm:$0xff] 0.0
    %65 = vst [vmem:[#allocation2 + $0x170] sm:$0xff] 0.0
    %66 = vst [vmem:[#allocation2 + $0x178] sm:$0xff] 0.0
    %67 = vst [vmem:[#allocation2 + $0x180] sm:$0xff] 0.0
    %68 = vst [vmem:[#allocation2 + $0x188] sm:$0xff] 0.0
    %69 = vst [vmem:[#allocation2 + $0x190] sm:$0xff] 0.0
    %70 = vst [vmem:[#allocation2 + $0x198] sm:$0xff] 0.0
    %71 = vst [vmem:[#allocation2 + $0x1a0] sm:$0xff] 0.0
    %72 = vst [vmem:[#allocation2 + $0x1a8] sm:$0xff] 0.0
    %73 = vst [vmem:[#allocation2 + $0x1b0] sm:$0xff] 0.0
    %74 = vst [vmem:[#allocation2 + $0x1b8] sm:$0xff] 0.0
    %75 = vst [vmem:[#allocation2 + $0x1c0] sm:$0xff] 0.0
    %76 = vst [vmem:[#allocation2 + $0x1c8] sm:$0xff] 0.0
    %77 = vst [vmem:[#allocation2 + $0x1d0] sm:$0xff] 0.0
    %78 = vst [vmem:[#allocation2 + $0x1d8] sm:$0xff] 0.0
    %79 = vst [vmem:[#allocation2 + $0x1e0] sm:$0xff] 0.0
    %80 = vst [vmem:[#allocation2 + $0x1e8] sm:$0xff] 0.0
    %81 = vst [vmem:[#allocation2 + $0x1f0] sm:$0xff] 0.0
    %82 = vst [vmem:[#allocation2 + $0x1f8] sm:$0xff] 0.0
  $region17: #{discriminator_forward.7} parent=0 // pred_fallthru
    _
  %v83 = vld [vmem:[#allocation2] sm:$0xff]
  %v84 = vld [vmem:[#allocation2 + $0x8] sm:$0xff]
  %v85 = vld [vmem:[#allocation2 + $0x10] sm:$0xff]
  %v86 = vld [vmem:[#allocation2 + $0x18] sm:$0xff]
  %v87 = vld [vmem:[#allocation2 + $0x20] sm:$0xff]
  %v88 = vld [vmem:[#allocation2 + $0x28] sm:$0xff]
  %v89 = vld [vmem:[#allocation2 + $0x30] sm:$0xff]
  %v90 = vld [vmem:[#allocation2 + $0x38] sm:$0xff]
  %v91 = vld [vmem:[#allocation2 + $0x40] sm:$0xff]
  %v92 = vld [vmem:[#allocation2 + $0x48] sm:$0xff]
  %v93 = vld [vmem:[#allocation2 + $0x50] sm:$0xff]
  %v94 = vld [vmem:[#allocation2 + $0x58] sm:$0xff]
  %v95 = vld [vmem:[#allocation2 + $0x60] sm:$0xff]
  %v96 = vld [vmem:[#allocation2 + $0x68] sm:$0xff]
  %v97 = vld [vmem:[#allocation2 + $0x70] sm:$0xff]
  %v98 = vld [vmem:[#allocation2 + $0x78] sm:$0xff]
  %v99 = vld [vmem:[#allocation2 + $0x80] sm:$0xff]
  %v100 = vld [vmem:[#allocation2 + $0x88] sm:$0xff]
  %v101 = vld [vmem:[#allocation2 + $0x90] sm:$0xff]
  %v102 = vld [vmem:[#allocation2 + $0x98] sm:$0xff]
  %v103 = vld [vmem:[#allocation2 + $0xa0] sm:$0xff]
  %v104 = vld [vmem:[#allocation2 + $0xa8] sm:$0xff]
  %v105 = vld [vmem:[#allocation2 + $0xb0] sm:$0xff]
  %v106 = vld [vmem:[#allocation2 + $0xb8] sm:$0xff]
  %v107 = vld [vmem:[#allocation2 + $0xc0] sm:$0xff]
  %v108 = vld [vmem:[#allocation2 + $0xc8] sm:$0xff]
  %v109 = vld [vmem:[#allocation2 + $0xd0] sm:$0xff]
  %v110 = vld [vmem:[#allocation2 + $0xd8] sm:$0xff]
  %v111 = vld [vmem:[#allocation2 + $0xe0] sm:$0xff]
  %v112 = vld [vmem:[#allocation2 + $0xe8] sm:$0xff]
  %v113 = vld [vmem:[#allocation2 + $0xf0] sm:$0xff]
  %v114 = vld [vmem:[#allocation2 + $0xf8] sm:$0xff]
  %v115 = vld [vmem:[#allocation2 + $0x100] sm:$0xff]
  %v116 = vld [vmem:[#allocation2 + $0x108] sm:$0xff]
  %v117 = vld [vmem:[#allocation2 + $0x110] sm:$0xff]
  %v118 = vld [vmem:[#allocation2 + $0x118] sm:$0xff]
  %v119 = vld [vmem:[#allocation2 + $0x120] sm:$0xff]
  %v120 = vld [vmem:[#allocation2 + $0x128] sm:$0xff]
  %v121 = vld [vmem:[#allocation2 + $0x130] sm:$0xff]
  %v122 = vld [vmem:[#allocation2 + $0x138] sm:$0xff]
  %v123 = vld [vmem:[#allocation2 + $0x140] sm:$0xff]
  %v124 = vld [vmem:[#allocation2 + $0x148] sm:$0xff]
  %v125 = vld [vmem:[#allocation2 + $0x150] sm:$0xff]
  %v126 = vld [vmem:[#allocation2 + $0x158] sm:$0xff]
  %v127 = vld [vmem:[#allocation2 + $0x160] sm:$0xff]
  %v128 = vld [vmem:[#allocation2 + $0x168] sm:$0xff]
  %v129 = vld [vmem:[#allocation2 + $0x170] sm:$0xff]
  %v130 = vld [vmem:[#allocation2 + $0x178] sm:$0xff]
  %v131 = vld [vmem:[#allocation2 + $0x180] sm:$0xff]
  %v132 = vld [vmem:[#allocation2 + $0x188] sm:$0xff]
  %v133 = vld [vmem:[#allocation2 + $0x190] sm:$0xff]
  %v134 = vld [vmem:[#allocation2 + $0x198] sm:$0xff]
  %v135 = vld [vmem:[#allocation2 + $0x1a0] sm:$0xff]
  %v136 = vld [vmem:[#allocation2 + $0x1a8] sm:$0xff]
  %v137 = vld [vmem:[#allocation2 + $0x1b0] sm:$0xff]
  %v138 = vld [vmem:[#allocation2 + $0x1b8] sm:$0xff]
  %v139 = vld [vmem:[#allocation2 + $0x1c0] sm:$0xff]
  %v140 = vld [vmem:[#allocation2 + $0x1c8] sm:$0xff]
  %v141 = vld [vmem:[#allocation2 + $0x1d0] sm:$0xff]
  %v142 = vld [vmem:[#allocation2 + $0x1d8] sm:$0xff]
  %v143 = vld [vmem:[#allocation2 + $0x1e0] sm:$0xff]
  %v144 = vld [vmem:[#allocation2 + $0x1e8] sm:$0xff]
  %v145 = vld [vmem:[#allocation2 + $0x1f0] sm:$0xff]
  %v146 = vld [vmem:[#allocation2 + $0x1f8] sm:$0xff]
  %v147 = vld [vmem:[%s0] sm:$0xf]
  %v148 = vld [vmem:[%s0 + $0x4] sm:$0xf]
  %v149 = vld [vmem:[%s0 + $0x8] sm:$0xf]
  %v150 = vld [vmem:[%s0 + $0xc] sm:$0xf]
  %v151 = vld [vmem:[%s0 + $0x10] sm:$0xf]
  %v152 = vld [vmem:[%s0 + $0x14] sm:$0xf]
  %v153 = vld [vmem:[%s0 + $0x18] sm:$0xf]
  %v154 = vld [vmem:[%s0 + $0x1c] sm:$0xf]
  %v155 = vld [vmem:[%s0 + $0x20] sm:$0xf]
  %v156 = vld [vmem:[%s0 + $0x24] sm:$0xf]
  %v157 = vld [vmem:[%s0 + $0x28] sm:$0xf]
  %v158 = vld [vmem:[%s0 + $0x2c] sm:$0xf]
  %v159 = vld [vmem:[%s0 + $0x30] sm:$0xf]
  %v160 = vld [vmem:[%s0 + $0x34] sm:$0xf]
  %v161 = vld [vmem:[%s0 + $0x38] sm:$0xf]
  %v162 = vld [vmem:[%s0 + $0x3c] sm:$0xf]
  %v163 = vld [vmem:[%s0 + $0x40] sm:$0xf]
  %v164 = vld [vmem:[%s0 + $0x44] sm:$0xf]
  %v165 = vld [vmem:[%s0 + $0x48] sm:$0xf]
  %v166 = vld [vmem:[%s0 + $0x4c] sm:$0xf]
  %v167 = vld [vmem:[%s0 + $0x50] sm:$0xf]
  %v168 = vld [vmem:[%s0 + $0x54] sm:$0xf]
  %v169 = vld [vmem:[%s0 + $0x58] sm:$0xf]
  %v170 = vld [vmem:[%s0 + $0x5c] sm:$0xf]
  %v171 = vld [vmem:[%s0 + $0x60] sm:$0xf]
  %v172 = vld [vmem:[%s0 + $0x64] sm:$0xf]
  %v173 = vld [vmem:[%s0 + $0x68] sm:$0xf]
  %v174 = vld [vmem:[%s0 + $0x6c] sm:$0xf]
  %v175 = vld [vmem:[%s0 + $0x70] sm:$0xf]
  %v176 = vld [vmem:[%s0 + $0x74] sm:$0xf]
  %v177 = vld [vmem:[%s0 + $0x78] sm:$0xf]
  %v178 = vld [vmem:[%s0 + $0x7c] sm:$0xf]
  %v179 = vld [vmem:[%s0 + $0x80] sm:$0xf]
  %v180 = vld [vmem:[%s0 + $0x84] sm:$0xf]
  %v181 = vld [vmem:[%s0 + $0x88] sm:$0xf]
  %v182 = vld [vmem:[%s0 + $0x8c] sm:$0xf]
  %v183 = vld [vmem:[%s0 + $0x90] sm:$0xf]
  %v184 = vld [vmem:[%s0 + $0x94] sm:$0xf]
  %v185 = vld [vmem:[%s0 + $0x98] sm:$0xf]
  %v186 = vld [vmem:[%s0 + $0x9c] sm:$0xf]
  %v187 = vld [vmem:[%s0 + $0xa0] sm:$0xf]
  %v188 = vld [vmem:[%s0 + $0xa4] sm:$0xf]
  %v189 = vld [vmem:[%s0 + $0xa8] sm:$0xf]
  %v190 = vld [vmem:[%s0 + $0xac] sm:$0xf]
  %v191 = vld [vmem:[%s0 + $0xb0] sm:$0xf]
  %v192 = vld [vmem:[%s0 + $0xb4] sm:$0xf]
  %v193 = vld [vmem:[%s0 + $0xb8] sm:$0xf]
  %v194 = vld [vmem:[%s0 + $0xbc] sm:$0xf]
  %v195 = vld [vmem:[%s0 + $0xc0] sm:$0xf]
  %v196 = vld [vmem:[%s0 + $0xc4] sm:$0xf]
  %v197 = vld [vmem:[%s0 + $0xc8] sm:$0xf]
  %v198 = vld [vmem:[%s0 + $0xcc] sm:$0xf]
  %v199 = vld [vmem:[%s0 + $0xd0] sm:$0xf]
  %v200 = vld [vmem:[%s0 + $0xd4] sm:$0xf]
  %v201 = vld [vmem:[%s0 + $0xd8] sm:$0xf]
  %v202 = vld [vmem:[%s0 + $0xdc] sm:$0xf]
  %v203 = vld [vmem:[%s0 + $0xe0] sm:$0xf]
  %v204 = vld [vmem:[%s0 + $0xe4] sm:$0xf]
  %v205 = vld [vmem:[%s0 + $0xe8] sm:$0xf]
  %v206 = vld [vmem:[%s0 + $0xec] sm:$0xf]
  %v207 = vld [vmem:[%s0 + $0xf0] sm:$0xf]
  %v208 = vld [vmem:[%s0 + $0xf4] sm:$0xf]
  %v209 = vld [vmem:[%s0 + $0xf8] sm:$0xf]
  %v210 = vld [vmem:[%s0 + $0xfc] sm:$0xf]
  %v211 = vld [vmem:[%s1] sm:$0xf]
  %v212 = vld [vmem:[%s1 + $0x4] sm:$0xf]
  %v213 = vld [vmem:[%s1 + $0x8] sm:$0xf]
  %v214 = vld [vmem:[%s1 + $0xc] sm:$0xf]
  %v215 = vld [vmem:[%s1 + $0x10] sm:$0xf]
  %v216 = vld [vmem:[%s1 + $0x14] sm:$0xf]
  %v217 = vld [vmem:[%s1 + $0x18] sm:$0xf]
  %v218 = vld [vmem:[%s1 + $0x1c] sm:$0xf]
  %v219 = vld [vmem:[%s1 + $0x20] sm:$0xf]
  %v220 = vld [vmem:[%s1 + $0x24] sm:$0xf]
  %v221 = vld [vmem:[%s1 + $0x28] sm:$0xf]
  %v222 = vld [vmem:[%s1 + $0x2c] sm:$0xf]
  %v223 = vld [vmem:[%s1 + $0x30] sm:$0xf]
  %v224 = vld [vmem:[%s1 + $0x34] sm:$0xf]
  %v225 = vld [vmem:[%s1 + $0x38] sm:$0xf]
  %v226 = vld [vmem:[%s1 + $0x3c] sm:$0xf]
  %v291 = vunpack.c.l.b16 %v147
  %v292 = vunpack.c.l.b16 %v148
  %v293 = vunpack.c.l.b16 %v149
  %v294 = vunpack.c.l.b16 %v150
  %v295 = vunpack.c.l.b16 %v151
  %v296 = vunpack.c.l.b16 %v152
  %v297 = vunpack.c.l.b16 %v153
  %v298 = vunpack.c.l.b16 %v154
  %v299 = vunpack.c.l.b16 %v155
  %v300 = vunpack.c.l.b16 %v156
  %v301 = vunpack.c.l.b16 %v157
  %v302 = vunpack.c.l.b16 %v158
  %v303 = vunpack.c.l.b16 %v159
  %v304 = vunpack.c.l.b16 %v160
  %v305 = vunpack.c.l.b16 %v161
  %v306 = vunpack.c.l.b16 %v162
  %v307 = vunpack.c.l.b16 %v163
  %v308 = vunpack.c.l.b16 %v164
  %v309 = vunpack.c.l.b16 %v165
  %v310 = vunpack.c.l.b16 %v166
  %v311 = vunpack.c.l.b16 %v167
  %v312 = vunpack.c.l.b16 %v168
  %v313 = vunpack.c.l.b16 %v169
  %v314 = vunpack.c.l.b16 %v170
  %v315 = vunpack.c.l.b16 %v171
  %v316 = vunpack.c.l.b16 %v172
  %v317 = vunpack.c.l.b16 %v173
  %v318 = vunpack.c.l.b16 %v174
  %v319 = vunpack.c.l.b16 %v175
  %v320 = vunpack.c.l.b16 %v176
  %v321 = vunpack.c.l.b16 %v177
  %v322 = vunpack.c.l.b16 %v178
  %v323 = vunpack.c.l.b16 %v179
  %v324 = vunpack.c.l.b16 %v180
  %v325 = vunpack.c.l.b16 %v181
  %v326 = vunpack.c.l.b16 %v182
  %v327 = vunpack.c.l.b16 %v183
  %v328 = vunpack.c.l.b16 %v184
  %v329 = vunpack.c.l.b16 %v185
  %v330 = vunpack.c.l.b16 %v186
  %v331 = vunpack.c.l.b16 %v187
  %v332 = vunpack.c.l.b16 %v188
  %v333 = vunpack.c.l.b16 %v189
  %v334 = vunpack.c.l.b16 %v190
  %v335 = vunpack.c.l.b16 %v191
  %v336 = vunpack.c.l.b16 %v192
  %v337 = vunpack.c.l.b16 %v193
  %v338 = vunpack.c.l.b16 %v194
  %v339 = vunpack.c.l.b16 %v195
  %v340 = vunpack.c.l.b16 %v196
  %v341 = vunpack.c.l.b16 %v197
  %v342 = vunpack.c.l.b16 %v198
  %v343 = vunpack.c.l.b16 %v199
  %v344 = vunpack.c.l.b16 %v200
  %v345 = vunpack.c.l.b16 %v201
  %v346 = vunpack.c.l.b16 %v202
  %v347 = vunpack.c.l.b16 %v203
  %v348 = vunpack.c.l.b16 %v204
  %v349 = vunpack.c.l.b16 %v205
  %v350 = vunpack.c.l.b16 %v206
  %v351 = vunpack.c.l.b16 %v207
  %v352 = vunpack.c.l.b16 %v208
  %v353 = vunpack.c.l.b16 %v209
  %v354 = vunpack.c.l.b16 %v210
  %v355 = vpack.c.b16 %v292, %v291
  %v356 = vpack.c.b16 %v294, %v293
  %v357 = vpack.c.b16 %v296, %v295
  %v358 = vpack.c.b16 %v298, %v297
  %v359 = vpack.c.b16 %v300, %v299
  %v360 = vpack.c.b16 %v302, %v301
  %v361 = vpack.c.b16 %v304, %v303
  %v362 = vpack.c.b16 %v306, %v305
  %v363 = vpack.c.b16 %v308, %v307
  %v364 = vpack.c.b16 %v310, %v309
  %v365 = vpack.c.b16 %v312, %v311
  %v366 = vpack.c.b16 %v314, %v313
  %v367 = vpack.c.b16 %v316, %v315
  %v368 = vpack.c.b16 %v318, %v317
  %v369 = vpack.c.b16 %v320, %v319
  %v370 = vpack.c.b16 %v322, %v321
  %v371 = vpack.c.b16 %v324, %v323
  %v372 = vpack.c.b16 %v326, %v325
  %v373 = vpack.c.b16 %v328, %v327
  %v374 = vpack.c.b16 %v330, %v329
  %v375 = vpack.c.b16 %v332, %v331
  %v376 = vpack.c.b16 %v334, %v333
  %v377 = vpack.c.b16 %v336, %v335
  %v378 = vpack.c.b16 %v338, %v337
  %v379 = vpack.c.b16 %v340, %v339
  %v380 = vpack.c.b16 %v342, %v341
  %v381 = vpack.c.b16 %v344, %v343
  %v382 = vpack.c.b16 %v346, %v345
  %v383 = vpack.c.b16 %v348, %v347
  %v384 = vpack.c.b16 %v350, %v349
  %v385 = vpack.c.b16 %v352, %v351
  %v386 = vpack.c.b16 %v354, %v353
  %v435 = vunpack.c.l.b16 %v211
  %v436 = vunpack.c.l.b16 %v212
  %v437 = vunpack.c.l.b16 %v213
  %v438 = vunpack.c.l.b16 %v214
  %v439 = vunpack.c.l.b16 %v215
  %v440 = vunpack.c.l.b16 %v216
  %v441 = vunpack.c.l.b16 %v217
  %v442 = vunpack.c.l.b16 %v218
  %v443 = vunpack.c.l.b16 %v219
  %v444 = vunpack.c.l.b16 %v220
  %v445 = vunpack.c.l.b16 %v221
  %v446 = vunpack.c.l.b16 %v222
  %v447 = vunpack.c.l.b16 %v223
  %v448 = vunpack.c.l.b16 %v224
  %v449 = vunpack.c.l.b16 %v225
  %v450 = vunpack.c.l.b16 %v226
  %v451 = vpack.c.b16 %v436, %v435
  %v452 = vpack.c.b16 %v438, %v437
  %v453 = vpack.c.b16 %v440, %v439
  %v454 = vpack.c.b16 %v442, %v441
  %v455 = vpack.c.b16 %v444, %v443
  %v456 = vpack.c.b16 %v446, %v445
  %v457 = vpack.c.b16 %v448, %v447
  %v458 = vpack.c.b16 %v450, %v449
  %467 = vmatprep.subr.bf16.mxu0 0
  %468 = vmatpush1.bf16.msra.mxu0 %v451
  %469 = vmatprep.subr.bf16.mxu0 0
  %470 = vmatpush1.bf16.msra.mxu0 %v452
  %471 = vmatprep.subr.bf16.mxu0 0
  %472 = vmatpush1.bf16.msra.mxu0 %v453
  %473 = vmatprep.subr.bf16.mxu0 0
  %474 = vmatpush1.bf16.msra.mxu0 %v454
  %475 = vmatprep.subr.bf16.mxu0 0
  %476 = vmatpush1.bf16.msra.mxu0 %v455
  %477 = vmatprep.subr.bf16.mxu0 0
  %478 = vmatpush1.bf16.msra.mxu0 %v456
  %479 = vmatprep.subr.bf16.mxu0 0
  %480 = vmatpush1.bf16.msra.mxu0 %v457
  %481 = vmatprep.subr.bf16.mxu0 0
  %482 = vmatpush1.bf16.msra.mxu0 %v458
  %483 = vmatprep.subr.bf16.mxu0 0
  %484 = vmatpush1.bf16.msra.mxu0 0
  %485 = vmatprep.subr.bf16.mxu0 0
  %486 = vmatpush1.bf16.msra.mxu0 0
  %487 = vmatprep.subr.bf16.mxu0 0
  %488 = vmatpush1.bf16.msra.mxu0 0
  %489 = vmatprep.subr.bf16.mxu0 0
  %490 = vmatpush1.bf16.msra.mxu0 0
  %491 = vmatprep.subr.bf16.mxu0 0
  %492 = vmatpush1.bf16.msra.mxu0 0
  %493 = vmatprep.subr.bf16.mxu0 0
  %494 = vmatpush1.bf16.msra.mxu0 0
  %495 = vmatprep.subr.bf16.mxu0 0
  %496 = vmatpush1.bf16.msra.mxu0 0
  %497 = vmatprep.subr.bf16.mxu0 0
  %498 = vmatpush1.bf16.msra.mxu0 0
  %499 = vmatprep.mubr.bf16.mxu0 0
  %500 = vmatmul.mubr.bf16.gmra.mrb[0].mxu0 %v355
  %v501 = vpop.f32.mrb[0].mxu0
  %v502 = vadd.f32 0.0, %v501
  %v503 = vpop.f32.mrb[0].mxu0
  %v504 = vpop.f32.mrb[0].mxu0
  %v505 = vadd.f32 0.0, %v504
  %v506 = vpop.f32.mrb[0].mxu0
  %507 = vmatprep.mubr.bf16.mxu0 0
  %508 = vmatmul.mubr.bf16.gmra.mrb[0].mxu0 %v356
  %v509 = vpop.f32.mrb[0].mxu0
  %v510 = vadd.f32 0.0, %v509
  %v511 = vpop.f32.mrb[0].mxu0
  %v512 = vpop.f32.mrb[0].mxu0
  %v513 = vadd.f32 0.0, %v512
  %v514 = vpop.f32.mrb[0].mxu0
  %515 = vmatprep.mubr.bf16.mxu0 0
  %516 = vmatmul.mubr.bf16.gmra.mrb[0].mxu0 %v357
  %v517 = vpop.f32.mrb[0].mxu0
  %v518 = vadd.f32 0.0, %v517
  %v519 = vpop.f32.mrb[0].mxu0
  %v520 = vpop.f32.mrb[0].mxu0
  %v521 = vadd.f32 0.0, %v520
  %v522 = vpop.f32.mrb[0].mxu0
  %523 = vmatprep.mubr.bf16.mxu0 0
  %524 = vmatmul.mubr.bf16.gmra.mrb[0].mxu0 %v358
  %v525 = vpop.f32.mrb[0].mxu0
  %v526 = vadd.f32 0.0, %v525
  %v527 = vpop.f32.mrb[0].mxu0
  %v528 = vpop.f32.mrb[0].mxu0
  %v529 = vadd.f32 0.0, %v528
  %v530 = vpop.f32.mrb[0].mxu0
  %531 = vmatprep.mubr.bf16.mxu0 0
  %532 = vmatmul.mubr.bf16.gmra.mrb[0].mxu0 %v359
  %v533 = vpop.f32.mrb[0].mxu0
  %v534 = vadd.f32 0.0, %v533
  %v535 = vpop.f32.mrb[0].mxu0
  %v536 = vpop.f32.mrb[0].mxu0
  %v537 = vadd.f32 0.0, %v536
  %v538 = vpop.f32.mrb[0].mxu0
  %539 = vmatprep.mubr.bf16.mxu0 0
  %540 = vmatmul.mubr.bf16.gmra.mrb[0].mxu0 %v360
  %v541 = vpop.f32.mrb[0].mxu0
  %v542 = vadd.f32 0.0, %v541
  %v543 = vpop.f32.mrb[0].mxu0
  %v544 = vpop.f32.mrb[0].mxu0
  %v545 = vadd.f32 0.0, %v544
  %v546 = vpop.f32.mrb[0].mxu0
  %547 = vmatprep.mubr.bf16.mxu0 0
  %548 = vmatmul.mubr.bf16.gmra.mrb[0].mxu0 %v361
  %v549 = vpop.f32.mrb[0].mxu0
  %v550 = vadd.f32 0.0, %v549
  %v551 = vpop.f32.mrb[0].mxu0
  %v552 = vpop.f32.mrb[0].mxu0
  %v553 = vadd.f32 0.0, %v552
  %v554 = vpop.f32.mrb[0].mxu0
  %555 = vmatprep.mubr.bf16.mxu0 0
  %556 = vmatmul.mubr.bf16.gmra.mrb[0].mxu0 %v362
  %v557 = vpop.f32.mrb[0].mxu0
  %v558 = vadd.f32 0.0, %v557
  %v559 = vpop.f32.mrb[0].mxu0
  %v560 = vpop.f32.mrb[0].mxu0
  %v561 = vadd.f32 0.0, %v560
  %v562 = vpop.f32.mrb[0].mxu0
  %563 = vmatprep.mubr.bf16.mxu0 0
  %564 = vmatmul.mubr.bf16.gmra.mrb[0].mxu0 %v363
  %v565 = vpop.f32.mrb[0].mxu0
  %v566 = vadd.f32 0.0, %v565
  %v567 = vpop.f32.mrb[0].mxu0
  %v568 = vpop.f32.mrb[0].mxu0
  %v569 = vadd.f32 0.0, %v568
  %v570 = vpop.f32.mrb[0].mxu0
  %571 = vmatprep.mubr.bf16.mxu0 0
  %572 = vmatmul.mubr.bf16.gmra.mrb[0].mxu0 %v364
  %v573 = vpop.f32.mrb[0].mxu0
  %v574 = vadd.f32 0.0, %v573
  %v575 = vpop.f32.mrb[0].mxu0
  %v576 = vpop.f32.mrb[0].mxu0
  %v577 = vadd.f32 0.0, %v576
  %v578 = vpop.f32.mrb[0].mxu0
  %579 = vmatprep.mubr.bf16.mxu0 0
  %580 = vmatmul.mubr.bf16.gmra.mrb[0].mxu0 %v365
  %v581 = vpop.f32.mrb[0].mxu0
  %v582 = vadd.f32 0.0, %v581
  %v583 = vpop.f32.mrb[0].mxu0
  %v584 = vpop.f32.mrb[0].mxu0
  %v585 = vadd.f32 0.0, %v584
  %v586 = vpop.f32.mrb[0].mxu0
  %587 = vmatprep.mubr.bf16.mxu0 0
  %588 = vmatmul.mubr.bf16.gmra.mrb[0].mxu0 %v366
  %v589 = vpop.f32.mrb[0].mxu0
  %v590 = vadd.f32 0.0, %v589
  %v591 = vpop.f32.mrb[0].mxu0
  %v592 = vpop.f32.mrb[0].mxu0
  %v593 = vadd.f32 0.0, %v592
  %v594 = vpop.f32.mrb[0].mxu0
  %595 = vmatprep.mubr.bf16.mxu0 0
  %596 = vmatmul.mubr.bf16.gmra.mrb[0].mxu0 %v367
  %v597 = vpop.f32.mrb[0].mxu0
  %v598 = vadd.f32 0.0, %v597
  %v599 = vpop.f32.mrb[0].mxu0
  %v600 = vpop.f32.mrb[0].mxu0
  %v601 = vadd.f32 0.0, %v600
  %v602 = vpop.f32.mrb[0].mxu0
  %603 = vmatprep.mubr.bf16.mxu0 0
  %604 = vmatmul.mubr.bf16.gmra.mrb[0].mxu0 %v368
  %v605 = vpop.f32.mrb[0].mxu0
  %v606 = vadd.f32 0.0, %v605
  %v607 = vpop.f32.mrb[0].mxu0
  %v608 = vpop.f32.mrb[0].mxu0
  %v609 = vadd.f32 0.0, %v608
  %v610 = vpop.f32.mrb[0].mxu0
  %611 = vmatprep.mubr.bf16.mxu0 0
  %612 = vmatmul.mubr.bf16.gmra.mrb[0].mxu0 %v369
  %v613 = vpop.f32.mrb[0].mxu0
  %v614 = vadd.f32 0.0, %v613
  %v615 = vpop.f32.mrb[0].mxu0
  %v616 = vpop.f32.mrb[0].mxu0
  %v617 = vadd.f32 0.0, %v616
  %v618 = vpop.f32.mrb[0].mxu0
  %619 = vmatprep.mubr.bf16.mxu0 0
  %620 = vmatmul.mubr.bf16.gmra.mrb[0].mxu0 %v370
  %v621 = vpop.f32.mrb[0].mxu0
  %v622 = vadd.f32 0.0, %v621
  %v623 = vpop.f32.mrb[0].mxu0
  %v624 = vpop.f32.mrb[0].mxu0
  %v625 = vadd.f32 0.0, %v624
  %v626 = vpop.f32.mrb[0].mxu0
  %627 = vmatprep.mubr.bf16.mxu0 0
  %628 = vmatmul.mubr.bf16.gmra.mrb[0].mxu0 %v371
  %v629 = vpop.f32.mrb[0].mxu0
  %v630 = vadd.f32 0.0, %v629
  %v631 = vpop.f32.mrb[0].mxu0
  %v632 = vpop.f32.mrb[0].mxu0
  %v633 = vadd.f32 0.0, %v632
  %v634 = vpop.f32.mrb[0].mxu0
  %635 = vmatprep.mubr.bf16.mxu0 0
  %636 = vmatmul.mubr.bf16.gmra.mrb[0].mxu0 %v372
  %v637 = vpop.f32.mrb[0].mxu0
  %v638 = vadd.f32 0.0, %v637
  %v639 = vpop.f32.mrb[0].mxu0
  %v640 = vpop.f32.mrb[0].mxu0
  %v641 = vadd.f32 0.0, %v640
  %v642 = vpop.f32.mrb[0].mxu0
  %643 = vmatprep.mubr.bf16.mxu0 0
  %644 = vmatmul.mubr.bf16.gmra.mrb[0].mxu0 %v373
  %v645 = vpop.f32.mrb[0].mxu0
  %v646 = vadd.f32 0.0, %v645
  %v647 = vpop.f32.mrb[0].mxu0
  %v648 = vpop.f32.mrb[0].mxu0
  %v649 = vadd.f32 0.0, %v648
  %v650 = vpop.f32.mrb[0].mxu0
  %651 = vmatprep.mubr.bf16.mxu0 0
  %652 = vmatmul.mubr.bf16.gmra.mrb[0].mxu0 %v374
  %v653 = vpop.f32.mrb[0].mxu0
  %v654 = vadd.f32 0.0, %v653
  %v655 = vpop.f32.mrb[0].mxu0
  %v656 = vpop.f32.mrb[0].mxu0
  %v657 = vadd.f32 0.0, %v656
  %v658 = vpop.f32.mrb[0].mxu0
  %659 = vmatprep.mubr.bf16.mxu0 0
  %660 = vmatmul.mubr.bf16.gmra.mrb[0].mxu0 %v375
  %v661 = vpop.f32.mrb[0].mxu0
  %v662 = vadd.f32 0.0, %v661
  %v663 = vpop.f32.mrb[0].mxu0
  %v664 = vpop.f32.mrb[0].mxu0
  %v665 = vadd.f32 0.0, %v664
  %v666 = vpop.f32.mrb[0].mxu0
  %667 = vmatprep.mubr.bf16.mxu0 0
  %668 = vmatmul.mubr.bf16.gmra.mrb[0].mxu0 %v376
  %v669 = vpop.f32.mrb[0].mxu0
  %v670 = vadd.f32 0.0, %v669
  %v671 = vpop.f32.mrb[0].mxu0
  %v672 = vpop.f32.mrb[0].mxu0
  %v673 = vadd.f32 0.0, %v672
  %v674 = vpop.f32.mrb[0].mxu0
  %675 = vmatprep.mubr.bf16.mxu0 0
  %676 = vmatmul.mubr.bf16.gmra.mrb[0].mxu0 %v377
  %v677 = vpop.f32.mrb[0].mxu0
  %v678 = vadd.f32 0.0, %v677
  %v679 = vpop.f32.mrb[0].mxu0
  %v680 = vpop.f32.mrb[0].mxu0
  %v681 = vadd.f32 0.0, %v680
  %v682 = vpop.f32.mrb[0].mxu0
  %683 = vmatprep.mubr.bf16.mxu0 0
  %684 = vmatmul.mubr.bf16.gmra.mrb[0].mxu0 %v378
  %v685 = vpop.f32.mrb[0].mxu0
  %v686 = vadd.f32 0.0, %v685
  %v687 = vpop.f32.mrb[0].mxu0
  %v688 = vpop.f32.mrb[0].mxu0
  %v689 = vadd.f32 0.0, %v688
  %v690 = vpop.f32.mrb[0].mxu0
  %691 = vmatprep.mubr.bf16.mxu0 0
  %692 = vmatmul.mubr.bf16.gmra.mrb[0].mxu0 %v379
  %v693 = vpop.f32.mrb[0].mxu0
  %v694 = vadd.f32 0.0, %v693
  %v695 = vpop.f32.mrb[0].mxu0
  %v696 = vpop.f32.mrb[0].mxu0
  %v697 = vadd.f32 0.0, %v696
  %v698 = vpop.f32.mrb[0].mxu0
  %699 = vmatprep.mubr.bf16.mxu0 0
  %700 = vmatmul.mubr.bf16.gmra.mrb[0].mxu0 %v380
  %v701 = vpop.f32.mrb[0].mxu0
  %v702 = vadd.f32 0.0, %v701
  %v703 = vpop.f32.mrb[0].mxu0
  %v704 = vpop.f32.mrb[0].mxu0
  %v705 = vadd.f32 0.0, %v704
  %v706 = vpop.f32.mrb[0].mxu0
  %707 = vmatprep.mubr.bf16.mxu0 0
  %708 = vmatmul.mubr.bf16.gmra.mrb[0].mxu0 %v381
  %v709 = vpop.f32.mrb[0].mxu0
  %v710 = vadd.f32 0.0, %v709
  %v711 = vpop.f32.mrb[0].mxu0
  %v712 = vpop.f32.mrb[0].mxu0
  %v713 = vadd.f32 0.0, %v712
  %v714 = vpop.f32.mrb[0].mxu0
  %715 = vmatprep.mubr.bf16.mxu0 0
  %716 = vmatmul.mubr.bf16.gmra.mrb[0].mxu0 %v382
  %v717 = vpop.f32.mrb[0].mxu0
  %v718 = vadd.f32 0.0, %v717
  %v719 = vpop.f32.mrb[0].mxu0
  %v720 = vpop.f32.mrb[0].mxu0
  %v721 = vadd.f32 0.0, %v720
  %v722 = vpop.f32.mrb[0].mxu0
  %723 = vmatprep.mubr.bf16.mxu0 0
  %724 = vmatmul.mubr.bf16.gmra.mrb[0].mxu0 %v383
  %v725 = vpop.f32.mrb[0].mxu0
  %v726 = vadd.f32 0.0, %v725
  %v727 = vpop.f32.mrb[0].mxu0
  %v728 = vpop.f32.mrb[0].mxu0
  %v729 = vadd.f32 0.0, %v728
  %v730 = vpop.f32.mrb[0].mxu0
  %731 = vmatprep.mubr.bf16.mxu0 0
  %732 = vmatmul.mubr.bf16.gmra.mrb[0].mxu0 %v384
  %v733 = vpop.f32.mrb[0].mxu0
  %v734 = vadd.f32 0.0, %v733
  %v735 = vpop.f32.mrb[0].mxu0
  %v736 = vpop.f32.mrb[0].mxu0
  %v737 = vadd.f32 0.0, %v736
  %v738 = vpop.f32.mrb[0].mxu0
  %739 = vmatprep.mubr.bf16.mxu0 0
  %740 = vmatmul.mubr.bf16.gmra.mrb[0].mxu0 %v385
  %v741 = vpop.f32.mrb[0].mxu0
  %v742 = vadd.f32 0.0, %v741
  %v743 = vpop.f32.mrb[0].mxu0
  %v744 = vpop.f32.mrb[0].mxu0
  %v745 = vadd.f32 0.0, %v744
  %v746 = vpop.f32.mrb[0].mxu0
  %747 = vmatprep.mubr.bf16.mxu0 0
  %748 = vmatmul.mubr.bf16.gmra.mrb[0].mxu0 %v386
  %v749 = vpop.f32.mrb[0].mxu0
  %v750 = vadd.f32 0.0, %v749
  %v751 = vpop.f32.mrb[0].mxu0
  %v752 = vpop.f32.mrb[0].mxu0
  %v753 = vadd.f32 0.0, %v752
  %v754 = vpop.f32.mrb[0].mxu0
  %755 = vdwg.mxu0
  %v756 = vadd.f32 %v83, %v502
  %v757 = vadd.f32 %v84, %v505
  %v758 = vadd.f32 %v85, %v510
  %v759 = vadd.f32 %v86, %v513
  %v760 = vadd.f32 %v87, %v518
  %v761 = vadd.f32 %v88, %v521
  %v762 = vadd.f32 %v89, %v526
  %v763 = vadd.f32 %v90, %v529
  %v764 = vadd.f32 %v91, %v534
  %v765 = vadd.f32 %v92, %v537
  %v766 = vadd.f32 %v93, %v542
  %v767 = vadd.f32 %v94, %v545
  %v768 = vadd.f32 %v95, %v550
  %v769 = vadd.f32 %v96, %v553
  %v770 = vadd.f32 %v97, %v558
  %v771 = vadd.f32 %v98, %v561
  %v772 = vadd.f32 %v99, %v566
  %v773 = vadd.f32 %v100, %v569
  %v774 = vadd.f32 %v101, %v574
  %v775 = vadd.f32 %v102, %v577
  %v776 = vadd.f32 %v103, %v582
  %v777 = vadd.f32 %v104, %v585
  %v778 = vadd.f32 %v105, %v590
  %v779 = vadd.f32 %v106, %v593
  %v780 = vadd.f32 %v107, %v598
  %v781 = vadd.f32 %v108, %v601
  %v782 = vadd.f32 %v109, %v606
  %v783 = vadd.f32 %v110, %v609
  %v784 = vadd.f32 %v111, %v614
  %v785 = vadd.f32 %v112, %v617
  %v786 = vadd.f32 %v113, %v622
  %v787 = vadd.f32 %v114, %v625
  %v788 = vadd.f32 %v115, %v630
  %v789 = vadd.f32 %v116, %v633
  %v790 = vadd.f32 %v117, %v638
  %v791 = vadd.f32 %v118, %v641
  %v792 = vadd.f32 %v119, %v646
  %v793 = vadd.f32 %v120, %v649
  %v794 = vadd.f32 %v121, %v654
  %v795 = vadd.f32 %v122, %v657
  %v796 = vadd.f32 %v123, %v662
  %v797 = vadd.f32 %v124, %v665
  %v798 = vadd.f32 %v125, %v670
  %v799 = vadd.f32 %v126, %v673
  %v800 = vadd.f32 %v127, %v678
  %v801 = vadd.f32 %v128, %v681
  %v802 = vadd.f32 %v129, %v686
  %v803 = vadd.f32 %v130, %v689
  %v804 = vadd.f32 %v131, %v694
  %v805 = vadd.f32 %v132, %v697
  %v806 = vadd.f32 %v133, %v702
  %v807 = vadd.f32 %v134, %v705
  %v808 = vadd.f32 %v135, %v710
  %v809 = vadd.f32 %v136, %v713
  %v810 = vadd.f32 %v137, %v718
  %v811 = vadd.f32 %v138, %v721
  %v812 = vadd.f32 %v139, %v726
  %v813 = vadd.f32 %v140, %v729
  %v814 = vadd.f32 %v141, %v734
  %v815 = vadd.f32 %v142, %v737
  %v816 = vadd.f32 %v143, %v742
  %v817 = vadd.f32 %v144, %v745
  %v818 = vadd.f32 %v145, %v750
  %v819 = vadd.f32 %v146, %v753
  %820 = vst [vmem:[#allocation2] sm:$0xff] %v756
  %821 = vst [vmem:[#allocation2 + $0x8] sm:$0xff] %v757
  %822 = vst [vmem:[#allocation2 + $0x10] sm:$0xff] %v758
  %823 = vst [vmem:[#allocation2 + $0x18] sm:$0xff] %v759
  %824 = vst [vmem:[#allocation2 + $0x20] sm:$0xff] %v760
  %825 = vst [vmem:[#allocation2 + $0x28] sm:$0xff] %v761
  %826 = vst [vmem:[#allocation2 + $0x30] sm:$0xff] %v762
  %827 = vst [vmem:[#allocation2 + $0x38] sm:$0xff] %v763
  %828 = vst [vmem:[#allocation2 + $0x40] sm:$0xff] %v764
  %829 = vst [vmem:[#allocation2 + $0x48] sm:$0xff] %v765
  %830 = vst [vmem:[#allocation2 + $0x50] sm:$0xff] %v766
  %831 = vst [vmem:[#allocation2 + $0x58] sm:$0xff] %v767
  %832 = vst [vmem:[#allocation2 + $0x60] sm:$0xff] %v768
  %833 = vst [vmem:[#allocation2 + $0x68] sm:$0xff] %v769
  %834 = vst [vmem:[#allocation2 + $0x70] sm:$0xff] %v770
  %835 = vst [vmem:[#allocation2 + $0x78] sm:$0xff] %v771
  %836 = vst [vmem:[#allocation2 + $0x80] sm:$0xff] %v772
  %837 = vst [vmem:[#allocation2 + $0x88] sm:$0xff] %v773
  %838 = vst [vmem:[#allocation2 + $0x90] sm:$0xff] %v774
  %839 = vst [vmem:[#allocation2 + $0x98] sm:$0xff] %v775
  %840 = vst [vmem:[#allocation2 + $0xa0] sm:$0xff] %v776
  %841 = vst [vmem:[#allocation2 + $0xa8] sm:$0xff] %v777
  %842 = vst [vmem:[#allocation2 + $0xb0] sm:$0xff] %v778
  %843 = vst [vmem:[#allocation2 + $0xb8] sm:$0xff] %v779
  %844 = vst [vmem:[#allocation2 + $0xc0] sm:$0xff] %v780
  %845 = vst [vmem:[#allocation2 + $0xc8] sm:$0xff] %v781
  %846 = vst [vmem:[#allocation2 + $0xd0] sm:$0xff] %v782
  %847 = vst [vmem:[#allocation2 + $0xd8] sm:$0xff] %v783
  %848 = vst [vmem:[#allocation2 + $0xe0] sm:$0xff] %v784
  %849 = vst [vmem:[#allocation2 + $0xe8] sm:$0xff] %v785
  %850 = vst [vmem:[#allocation2 + $0xf0] sm:$0xff] %v786
  %851 = vst [vmem:[#allocation2 + $0xf8] sm:$0xff] %v787
  %852 = vst [vmem:[#allocation2 + $0x100] sm:$0xff] %v788
  %853 = vst [vmem:[#allocation2 + $0x108] sm:$0xff] %v789
  %854 = vst [vmem:[#allocation2 + $0x110] sm:$0xff] %v790
  %855 = vst [vmem:[#allocation2 + $0x118] sm:$0xff] %v791
  %856 = vst [vmem:[#allocation2 + $0x120] sm:$0xff] %v792
  %857 = vst [vmem:[#allocation2 + $0x128] sm:$0xff] %v793
  %858 = vst [vmem:[#allocation2 + $0x130] sm:$0xff] %v794
  %859 = vst [vmem:[#allocation2 + $0x138] sm:$0xff] %v795
  %860 = vst [vmem:[#allocation2 + $0x140] sm:$0xff] %v796
  %861 = vst [vmem:[#allocation2 + $0x148] sm:$0xff] %v797
  %862 = vst [vmem:[#allocation2 + $0x150] sm:$0xff] %v798
  %863 = vst [vmem:[#allocation2 + $0x158] sm:$0xff] %v799
  %864 = vst [vmem:[#allocation2 + $0x160] sm:$0xff] %v800
  %865 = vst [vmem:[#allocation2 + $0x168] sm:$0xff] %v801
  %866 = vst [vmem:[#allocation2 + $0x170] sm:$0xff] %v802
  %867 = vst [vmem:[#allocation2 + $0x178] sm:$0xff] %v803
  %868 = vst [vmem:[#allocation2 + $0x180] sm:$0xff] %v804
  %869 = vst [vmem:[#allocation2 + $0x188] sm:$0xff] %v805
  %870 = vst [vmem:[#allocation2 + $0x190] sm:$0xff] %v806
  %871 = vst [vmem:[#allocation2 + $0x198] sm:$0xff] %v807
  %872 = vst [vmem:[#allocation2 + $0x1a0] sm:$0xff] %v808
  %873 = vst [vmem:[#allocation2 + $0x1a8] sm:$0xff] %v809
  %874 = vst [vmem:[#allocation2 + $0x1b0] sm:$0xff] %v810
  %875 = vst [vmem:[#allocation2 + $0x1b8] sm:$0xff] %v811
  %876 = vst [vmem:[#allocation2 + $0x1c0] sm:$0xff] %v812
  %877 = vst [vmem:[#allocation2 + $0x1c8] sm:$0xff] %v813
  %878 = vst [vmem:[#allocation2 + $0x1d0] sm:$0xff] %v814
  %879 = vst [vmem:[#allocation2 + $0x1d8] sm:$0xff] %v815
  %880 = vst [vmem:[#allocation2 + $0x1e0] sm:$0xff] %v816
  %881 = vst [vmem:[#allocation2 + $0x1e8] sm:$0xff] %v817
  %882 = vst [vmem:[#allocation2 + $0x1f0] sm:$0xff] %v818
  %883 = vst [vmem:[#allocation2 + $0x1f8] sm:$0xff] %v819
  // Predicated region
  $region18: #{discriminator_forward.7} parent=0 // pred_check
    %p884 = pneg %p15
  $region19: #{discriminator_forward.7} parent=0 // pred_check_branch
    %886 = sbr.rel (%p884) target = $region21
  $region20: #{discriminator_forward.7} parent=0 // pred_region
    %v887 = vld [vmem:[#allocation2] sm:$0xff]
    %v888 = vld [vmem:[#allocation2 + $0x8] sm:$0xff]
    %v889 = vld [vmem:[#allocation2 + $0x10] sm:$0xff]
    %v890 = vld [vmem:[#allocation2 + $0x18] sm:$0xff]
    %v891 = vld [vmem:[#allocation2 + $0x20] sm:$0xff]
    %v892 = vld [vmem:[#allocation2 + $0x28] sm:$0xff]
    %v893 = vld [vmem:[#allocation2 + $0x30] sm:$0xff]
    %v894 = vld [vmem:[#allocation2 + $0x38] sm:$0xff]
    %v895 = vld [vmem:[#allocation2 + $0x40] sm:$0xff]
    %v896 = vld [vmem:[#allocation2 + $0x48] sm:$0xff]
    %v897 = vld [vmem:[#allocation2 + $0x50] sm:$0xff]
    %v898 = vld [vmem:[#allocation2 + $0x58] sm:$0xff]
    %v899 = vld [vmem:[#allocation2 + $0x60] sm:$0xff]
    %v900 = vld [vmem:[#allocation2 + $0x68] sm:$0xff]
    %v901 = vld [vmem:[#allocation2 + $0x70] sm:$0xff]
    %v902 = vld [vmem:[#allocation2 + $0x78] sm:$0xff]
    %v903 = vld [vmem:[#allocation2 + $0x80] sm:$0xff]
    %v904 = vld [vmem:[#allocation2 + $0x88] sm:$0xff]
    %v905 = vld [vmem:[#allocation2 + $0x90] sm:$0xff]
    %v906 = vld [vmem:[#allocation2 + $0x98] sm:$0xff]
    %v907 = vld [vmem:[#allocation2 + $0xa0] sm:$0xff]
    %v908 = vld [vmem:[#allocation2 + $0xa8] sm:$0xff]
    %v909 = vld [vmem:[#allocation2 + $0xb0] sm:$0xff]
    %v910 = vld [vmem:[#allocation2 + $0xb8] sm:$0xff]
    %v911 = vld [vmem:[#allocation2 + $0xc0] sm:$0xff]
    %v912 = vld [vmem:[#allocation2 + $0xc8] sm:$0xff]
    %v913 = vld [vmem:[#allocation2 + $0xd0] sm:$0xff]
    %v914 = vld [vmem:[#allocation2 + $0xd8] sm:$0xff]
    %v915 = vld [vmem:[#allocation2 + $0xe0] sm:$0xff]
    %v916 = vld [vmem:[#allocation2 + $0xe8] sm:$0xff]
    %v917 = vld [vmem:[#allocation2 + $0xf0] sm:$0xff]
    %v918 = vld [vmem:[#allocation2 + $0xf8] sm:$0xff]
    %v919 = vld [vmem:[#allocation2 + $0x100] sm:$0xff]
    %v920 = vld [vmem:[#allocation2 + $0x108] sm:$0xff]
    %v921 = vld [vmem:[#allocation2 + $0x110] sm:$0xff]
    %v922 = vld [vmem:[#allocation2 + $0x118] sm:$0xff]
    %v923 = vld [vmem:[#allocation2 + $0x120] sm:$0xff]
    %v924 = vld [vmem:[#allocation2 + $0x128] sm:$0xff]
    %v925 = vld [vmem:[#allocation2 + $0x130] sm:$0xff]
    %v926 = vld [vmem:[#allocation2 + $0x138] sm:$0xff]
    %v927 = vld [vmem:[#allocation2 + $0x140] sm:$0xff]
    %v928 = vld [vmem:[#allocation2 + $0x148] sm:$0xff]
    %v929 = vld [vmem:[#allocation2 + $0x150] sm:$0xff]
    %v930 = vld [vmem:[#allocation2 + $0x158] sm:$0xff]
    %v931 = vld [vmem:[#allocation2 + $0x160] sm:$0xff]
    %v932 = vld [vmem:[#allocation2 + $0x168] sm:$0xff]
    %v933 = vld [vmem:[#allocation2 + $0x170] sm:$0xff]
    %v934 = vld [vmem:[#allocation2 + $0x178] sm:$0xff]
    %v935 = vld [vmem:[#allocation2 + $0x180] sm:$0xff]
    %v936 = vld [vmem:[#allocation2 + $0x188] sm:$0xff]
    %v937 = vld [vmem:[#allocation2 + $0x190] sm:$0xff]
    %v938 = vld [vmem:[#allocation2 + $0x198] sm:$0xff]
    %v939 = vld [vmem:[#allocation2 + $0x1a0] sm:$0xff]
    %v940 = vld [vmem:[#allocation2 + $0x1a8] sm:$0xff]
    %v941 = vld [vmem:[#allocation2 + $0x1b0] sm:$0xff]
    %v942 = vld [vmem:[#allocation2 + $0x1b8] sm:$0xff]
    %v943 = vld [vmem:[#allocation2 + $0x1c0] sm:$0xff]
    %v944 = vld [vmem:[#allocation2 + $0x1c8] sm:$0xff]
    %v945 = vld [vmem:[#allocation2 + $0x1d0] sm:$0xff]
    %v946 = vld [vmem:[#allocation2 + $0x1d8] sm:$0xff]
    %v947 = vld [vmem:[#allocation2 + $0x1e0] sm:$0xff]
    %v948 = vld [vmem:[#allocation2 + $0x1e8] sm:$0xff]
    %v949 = vld [vmem:[#allocation2 + $0x1f0] sm:$0xff]
    %v950 = vld [vmem:[#allocation2 + $0x1f8] sm:$0xff]
    %v951 = vld [vmem:[%s2] sm:$0x1]
    %v953 = vlaneseq
    %v954 = vshrl.u32 %v953, 7
    %v955 = vsub.s32 0, %v954
    %v956 = vrot.slane %v951, %v955
    %v958 = vadd.f32 %v887, %v956
    %v959 = vadd.f32 %v888, %v956
    %v960 = vadd.f32 %v889, %v956
    %v961 = vadd.f32 %v890, %v956
    %v962 = vadd.f32 %v891, %v956
    %v963 = vadd.f32 %v892, %v956
    %v964 = vadd.f32 %v893, %v956
    %v965 = vadd.f32 %v894, %v956
    %v966 = vadd.f32 %v895, %v956
    %v967 = vadd.f32 %v896, %v956
    %v968 = vadd.f32 %v897, %v956
    %v969 = vadd.f32 %v898, %v956
    %v970 = vadd.f32 %v899, %v956
    %v971 = vadd.f32 %v900, %v956
    %v972 = vadd.f32 %v901, %v956
    %v973 = vadd.f32 %v902, %v956
    %v974 = vadd.f32 %v903, %v956
    %v975 = vadd.f32 %v904, %v956
    %v976 = vadd.f32 %v905, %v956
    %v977 = vadd.f32 %v906, %v956
    %v978 = vadd.f32 %v907, %v956
    %v979 = vadd.f32 %v908, %v956
    %v980 = vadd.f32 %v909, %v956
    %v981 = vadd.f32 %v910, %v956
    %v982 = vadd.f32 %v911, %v956
    %v983 = vadd.f32 %v912, %v956
    %v984 = vadd.f32 %v913, %v956
    %v985 = vadd.f32 %v914, %v956
    %v986 = vadd.f32 %v915, %v956
    %v987 = vadd.f32 %v916, %v956
    %v988 = vadd.f32 %v917, %v956
    %v989 = vadd.f32 %v918, %v956
    %v990 = vadd.f32 %v919, %v956
    %v991 = vadd.f32 %v920, %v956
    %v992 = vadd.f32 %v921, %v956
    %v993 = vadd.f32 %v922, %v956
    %v994 = vadd.f32 %v923, %v956
    %v995 = vadd.f32 %v924, %v956
    %v996 = vadd.f32 %v925, %v956
    %v997 = vadd.f32 %v926, %v956
    %v998 = vadd.f32 %v927, %v956
    %v999 = vadd.f32 %v928, %v956
    %v1000 = vadd.f32 %v929, %v956
    %v1001 = vadd.f32 %v930, %v956
    %v1002 = vadd.f32 %v931, %v956
    %v1003 = vadd.f32 %v932, %v956
    %v1004 = vadd.f32 %v933, %v956
    %v1005 = vadd.f32 %v934, %v956
    %v1006 = vadd.f32 %v935, %v956
    %v1007 = vadd.f32 %v936, %v956
    %v1008 = vadd.f32 %v937, %v956
    %v1009 = vadd.f32 %v938, %v956
    %v1010 = vadd.f32 %v939, %v956
    %v1011 = vadd.f32 %v940, %v956
    %v1012 = vadd.f32 %v941, %v956
    %v1013 = vadd.f32 %v942, %v956
    %v1014 = vadd.f32 %v943, %v956
    %v1015 = vadd.f32 %v944, %v956
    %v1016 = vadd.f32 %v945, %v956
    %v1017 = vadd.f32 %v946, %v956
    %v1018 = vadd.f32 %v947, %v956
    %v1019 = vadd.f32 %v948, %v956
    %v1020 = vadd.f32 %v949, %v956
    %v1021 = vadd.f32 %v950, %v956
    %v1022 = vmul.f32 %v958, 0.2
    %v1023 = vmul.f32 %v959, 0.2
    %v1024 = vmul.f32 %v960, 0.2
    %v1025 = vmul.f32 %v961, 0.2
    %v1026 = vmul.f32 %v962, 0.2
    %v1027 = vmul.f32 %v963, 0.2
    %v1028 = vmul.f32 %v964, 0.2
    %v1029 = vmul.f32 %v965, 0.2
    %v1030 = vmul.f32 %v966, 0.2
    %v1031 = vmul.f32 %v967, 0.2
    %v1032 = vmul.f32 %v968, 0.2
    %v1033 = vmul.f32 %v969, 0.2
    %v1034 = vmul.f32 %v970, 0.2
    %v1035 = vmul.f32 %v971, 0.2
    %v1036 = vmul.f32 %v972, 0.2
    %v1037 = vmul.f32 %v973, 0.2
    %v1038 = vmul.f32 %v974, 0.2
    %v1039 = vmul.f32 %v975, 0.2
    %v1040 = vmul.f32 %v976, 0.2
    %v1041 = vmul.f32 %v977, 0.2
    %v1042 = vmul.f32 %v978, 0.2
    %v1043 = vmul.f32 %v979, 0.2
    %v1044 = vmul.f32 %v980, 0.2
    %v1045 = vmul.f32 %v981, 0.2
    %v1046 = vmul.f32 %v982, 0.2
    %v1047 = vmul.f32 %v983, 0.2
    %v1048 = vmul.f32 %v984, 0.2
    %v1049 = vmul.f32 %v985, 0.2
    %v1050 = vmul.f32 %v986, 0.2
    %v1051 = vmul.f32 %v987, 0.2
    %v1052 = vmul.f32 %v988, 0.2
    %v1053 = vmul.f32 %v989, 0.2
    %v1054 = vmul.f32 %v990, 0.2
    %v1055 = vmul.f32 %v991, 0.2
    %v1056 = vmul.f32 %v992, 0.2
    %v1057 = vmul.f32 %v993, 0.2
    %v1058 = vmul.f32 %v994, 0.2
    %v1059 = vmul.f32 %v995, 0.2
    %v1060 = vmul.f32 %v996, 0.2
    %v1061 = vmul.f32 %v997, 0.2
    %v1062 = vmul.f32 %v998, 0.2
    %v1063 = vmul.f32 %v999, 0.2
    %v1064 = vmul.f32 %v1000, 0.2
    %v1065 = vmul.f32 %v1001, 0.2
    %v1066 = vmul.f32 %v1002, 0.2
    %v1067 = vmul.f32 %v1003, 0.2
    %v1068 = vmul.f32 %v1004, 0.2
    %v1069 = vmul.f32 %v1005, 0.2
    %v1070 = vmul.f32 %v1006, 0.2
    %v1071 = vmul.f32 %v1007, 0.2
    %v1072 = vmul.f32 %v1008, 0.2
    %v1073 = vmul.f32 %v1009, 0.2
    %v1074 = vmul.f32 %v1010, 0.2
    %v1075 = vmul.f32 %v1011, 0.2
    %v1076 = vmul.f32 %v1012, 0.2
    %v1077 = vmul.f32 %v1013, 0.2
    %v1078 = vmul.f32 %v1014, 0.2
    %v1079 = vmul.f32 %v1015, 0.2
    %v1080 = vmul.f32 %v1016, 0.2
    %v1081 = vmul.f32 %v1017, 0.2
    %v1082 = vmul.f32 %v1018, 0.2
    %v1083 = vmul.f32 %v1019, 0.2
    %v1084 = vmul.f32 %v1020, 0.2
    %v1085 = vmul.f32 %v1021, 0.2
    %v1086 = vmax.f32 %v958, %v1022
    %v1087 = vmax.f32 %v959, %v1023
    %v1088 = vmax.f32 %v960, %v1024
    %v1089 = vmax.f32 %v961, %v1025
    %v1090 = vmax.f32 %v962, %v1026
    %v1091 = vmax.f32 %v963, %v1027
    %v1092 = vmax.f32 %v964, %v1028
    %v1093 = vmax.f32 %v965, %v1029
    %v1094 = vmax.f32 %v966, %v1030
    %v1095 = vmax.f32 %v967, %v1031
    %v1096 = vmax.f32 %v968, %v1032
    %v1097 = vmax.f32 %v969, %v1033
    %v1098 = vmax.f32 %v970, %v1034
    %v1099 = vmax.f32 %v971, %v1035
    %v1100 = vmax.f32 %v972, %v1036
    %v1101 = vmax.f32 %v973, %v1037
    %v1102 = vmax.f32 %v974, %v1038
    %v1103 = vmax.f32 %v975, %v1039
    %v1104 = vmax.f32 %v976, %v1040
    %v1105 = vmax.f32 %v977, %v1041
    %v1106 = vmax.f32 %v978, %v1042
    %v1107 = vmax.f32 %v979, %v1043
    %v1108 = vmax.f32 %v980, %v1044
    %v1109 = vmax.f32 %v981, %v1045
    %v1110 = vmax.f32 %v982, %v1046
    %v1111 = vmax.f32 %v983, %v1047
    %v1112 = vmax.f32 %v984, %v1048
    %v1113 = vmax.f32 %v985, %v1049
    %v1114 = vmax.f32 %v986, %v1050
    %v1115 = vmax.f32 %v987, %v1051
    %v1116 = vmax.f32 %v988, %v1052
    %v1117 = vmax.f32 %v989, %v1053
    %v1118 = vmax.f32 %v990, %v1054
    %v1119 = vmax.f32 %v991, %v1055
    %v1120 = vmax.f32 %v992, %v1056
    %v1121 = vmax.f32 %v993, %v1057
    %v1122 = vmax.f32 %v994, %v1058
    %v1123 = vmax.f32 %v995, %v1059
    %v1124 = vmax.f32 %v996, %v1060
    %v1125 = vmax.f32 %v997, %v1061
    %v1126 = vmax.f32 %v998, %v1062
    %v1127 = vmax.f32 %v999, %v1063
    %v1128 = vmax.f32 %v1000, %v1064
    %v1129 = vmax.f32 %v1001, %v1065
    %v1130 = vmax.f32 %v1002, %v1066
    %v1131 = vmax.f32 %v1003, %v1067
    %v1132 = vmax.f32 %v1004, %v1068
    %v1133 = vmax.f32 %v1005, %v1069
    %v1134 = vmax.f32 %v1006, %v1070
    %v1135 = vmax.f32 %v1007, %v1071
    %v1136 = vmax.f32 %v1008, %v1072
    %v1137 = vmax.f32 %v1009, %v1073
    %v1138 = vmax.f32 %v1010, %v1074
    %v1139 = vmax.f32 %v1011, %v1075
    %v1140 = vmax.f32 %v1012, %v1076
    %v1141 = vmax.f32 %v1013, %v1077
    %v1142 = vmax.f32 %v1014, %v1078
    %v1143 = vmax.f32 %v1015, %v1079
    %v1144 = vmax.f32 %v1016, %v1080
    %v1145 = vmax.f32 %v1017, %v1081
    %v1146 = vmax.f32 %v1018, %v1082
    %v1147 = vmax.f32 %v1019, %v1083
    %v1148 = vmax.f32 %v1020, %v1084
    %v1149 = vmax.f32 %v1021, %v1085
    %v1150 = vmul.f32 %v1086, 1.4142135
    %v1151 = vmul.f32 %v1087, 1.4142135
    %v1152 = vmul.f32 %v1088, 1.4142135
    %v1153 = vmul.f32 %v1089, 1.4142135
    %v1154 = vmul.f32 %v1090, 1.4142135
    %v1155 = vmul.f32 %v1091, 1.4142135
    %v1156 = vmul.f32 %v1092, 1.4142135
    %v1157 = vmul.f32 %v1093, 1.4142135
    %v1158 = vmul.f32 %v1094, 1.4142135
    %v1159 = vmul.f32 %v1095, 1.4142135
    %v1160 = vmul.f32 %v1096, 1.4142135
    %v1161 = vmul.f32 %v1097, 1.4142135
    %v1162 = vmul.f32 %v1098, 1.4142135
    %v1163 = vmul.f32 %v1099, 1.4142135
    %v1164 = vmul.f32 %v1100, 1.4142135
    %v1165 = vmul.f32 %v1101, 1.4142135
    %v1166 = vmul.f32 %v1102, 1.4142135
    %v1167 = vmul.f32 %v1103, 1.4142135
    %v1168 = vmul.f32 %v1104, 1.4142135
    %v1169 = vmul.f32 %v1105, 1.4142135
    %v1170 = vmul.f32 %v1106, 1.4142135
    %v1171 = vmul.f32 %v1107, 1.4142135
    %v1172 = vmul.f32 %v1108, 1.4142135
    %v1173 = vmul.f32 %v1109, 1.4142135
    %v1174 = vmul.f32 %v1110, 1.4142135
    %v1175 = vmul.f32 %v1111, 1.4142135
    %v1176 = vmul.f32 %v1112, 1.4142135
    %v1177 = vmul.f32 %v1113, 1.4142135
    %v1178 = vmul.f32 %v1114, 1.4142135
    %v1179 = vmul.f32 %v1115, 1.4142135
    %v1180 = vmul.f32 %v1116, 1.4142135
    %v1181 = vmul.f32 %v1117, 1.4142135
    %v1182 = vmul.f32 %v1118, 1.4142135
    %v1183 = vmul.f32 %v1119, 1.4142135
    %v1184 = vmul.f32 %v1120, 1.4142135
    %v1185 = vmul.f32 %v1121, 1.4142135
    %v1186 = vmul.f32 %v1122, 1.4142135
    %v1187 = vmul.f32 %v1123, 1.4142135
    %v1188 = vmul.f32 %v1124, 1.4142135
    %v1189 = vmul.f32 %v1125, 1.4142135
    %v1190 = vmul.f32 %v1126, 1.4142135
    %v1191 = vmul.f32 %v1127, 1.4142135
    %v1192 = vmul.f32 %v1128, 1.4142135
    %v1193 = vmul.f32 %v1129, 1.4142135
    %v1194 = vmul.f32 %v1130, 1.4142135
    %v1195 = vmul.f32 %v1131, 1.4142135
    %v1196 = vmul.f32 %v1132, 1.4142135
    %v1197 = vmul.f32 %v1133, 1.4142135
    %v1198 = vmul.f32 %v1134, 1.4142135
    %v1199 = vmul.f32 %v1135, 1.4142135
    %v1200 = vmul.f32 %v1136, 1.4142135
    %v1201 = vmul.f32 %v1137, 1.4142135
    %v1202 = vmul.f32 %v1138, 1.4142135
    %v1203 = vmul.f32 %v1139, 1.4142135
    %v1204 = vmul.f32 %v1140, 1.4142135
    %v1205 = vmul.f32 %v1141, 1.4142135
    %v1206 = vmul.f32 %v1142, 1.4142135
    %v1207 = vmul.f32 %v1143, 1.4142135
    %v1208 = vmul.f32 %v1144, 1.4142135
    %v1209 = vmul.f32 %v1145, 1.4142135
    %v1210 = vmul.f32 %v1146, 1.4142135
    %v1211 = vmul.f32 %v1147, 1.4142135
    %v1212 = vmul.f32 %v1148, 1.4142135
    %v1213 = vmul.f32 %v1149, 1.4142135
    %1214 = vst [vmem:[%s3] sm:$0xff] %v1150
    %1215 = vst [vmem:[%s3 + $0x8] sm:$0xff] %v1151
    %1216 = vst [vmem:[%s3 + $0x10] sm:$0xff] %v1152
    %1217 = vst [vmem:[%s3 + $0x18] sm:$0xff] %v1153
    %1218 = vst [vmem:[%s3 + $0x20] sm:$0xff] %v1154
    %1219 = vst [vmem:[%s3 + $0x28] sm:$0xff] %v1155
    %1220 = vst [vmem:[%s3 + $0x30] sm:$0xff] %v1156
    %1221 = vst [vmem:[%s3 + $0x38] sm:$0xff] %v1157
    %1222 = vst [vmem:[%s3 + $0x40] sm:$0xff] %v1158
    %1223 = vst [vmem:[%s3 + $0x48] sm:$0xff] %v1159
    %1224 = vst [vmem:[%s3 + $0x50] sm:$0xff] %v1160
    %1225 = vst [vmem:[%s3 + $0x58] sm:$0xff] %v1161
    %1226 = vst [vmem:[%s3 + $0x60] sm:$0xff] %v1162
    %1227 = vst [vmem:[%s3 + $0x68] sm:$0xff] %v1163
    %1228 = vst [vmem:[%s3 + $0x70] sm:$0xff] %v1164
    %1229 = vst [vmem:[%s3 + $0x78] sm:$0xff] %v1165
    %1230 = vst [vmem:[%s3 + $0x80] sm:$0xff] %v1166
    %1231 = vst [vmem:[%s3 + $0x88] sm:$0xff] %v1167
    %1232 = vst [vmem:[%s3 + $0x90] sm:$0xff] %v1168
    %1233 = vst [vmem:[%s3 + $0x98] sm:$0xff] %v1169
    %1234 = vst [vmem:[%s3 + $0xa0] sm:$0xff] %v1170
    %1235 = vst [vmem:[%s3 + $0xa8] sm:$0xff] %v1171
    %1236 = vst [vmem:[%s3 + $0xb0] sm:$0xff] %v1172
    %1237 = vst [vmem:[%s3 + $0xb8] sm:$0xff] %v1173
    %1238 = vst [vmem:[%s3 + $0xc0] sm:$0xff] %v1174
    %1239 = vst [vmem:[%s3 + $0xc8] sm:$0xff] %v1175
    %1240 = vst [vmem:[%s3 + $0xd0] sm:$0xff] %v1176
    %1241 = vst [vmem:[%s3 + $0xd8] sm:$0xff] %v1177
    %1242 = vst [vmem:[%s3 + $0xe0] sm:$0xff] %v1178
    %1243 = vst [vmem:[%s3 + $0xe8] sm:$0xff] %v1179
    %1244 = vst [vmem:[%s3 + $0xf0] sm:$0xff] %v1180
    %1245 = vst [vmem:[%s3 + $0xf8] sm:$0xff] %v1181
    %1246 = vst [vmem:[%s3 + $0x100] sm:$0xff] %v1182
    %1247 = vst [vmem:[%s3 + $0x108] sm:$0xff] %v1183
    %1248 = vst [vmem:[%s3 + $0x110] sm:$0xff] %v1184
    %1249 = vst [vmem:[%s3 + $0x118] sm:$0xff] %v1185
    %1250 = vst [vmem:[%s3 + $0x120] sm:$0xff] %v1186
    %1251 = vst [vmem:[%s3 + $0x128] sm:$0xff] %v1187
    %1252 = vst [vmem:[%s3 + $0x130] sm:$0xff] %v1188
    %1253 = vst [vmem:[%s3 + $0x138] sm:$0xff] %v1189
    %1254 = vst [vmem:[%s3 + $0x140] sm:$0xff] %v1190
    %1255 = vst [vmem:[%s3 + $0x148] sm:$0xff] %v1191
    %1256 = vst [vmem:[%s3 + $0x150] sm:$0xff] %v1192
    %1257 = vst [vmem:[%s3 + $0x158] sm:$0xff] %v1193
    %1258 = vst [vmem:[%s3 + $0x160] sm:$0xff] %v1194
    %1259 = vst [vmem:[%s3 + $0x168] sm:$0xff] %v1195
    %1260 = vst [vmem:[%s3 + $0x170] sm:$0xff] %v1196
    %1261 = vst [vmem:[%s3 + $0x178] sm:$0xff] %v1197
    %1262 = vst [vmem:[%s3 + $0x180] sm:$0xff] %v1198
    %1263 = vst [vmem:[%s3 + $0x188] sm:$0xff] %v1199
    %1264 = vst [vmem:[%s3 + $0x190] sm:$0xff] %v1200
    %1265 = vst [vmem:[%s3 + $0x198] sm:$0xff] %v1201
    %1266 = vst [vmem:[%s3 + $0x1a0] sm:$0xff] %v1202
    %1267 = vst [vmem:[%s3 + $0x1a8] sm:$0xff] %v1203
    %1268 = vst [vmem:[%s3 + $0x1b0] sm:$0xff] %v1204
    %1269 = vst [vmem:[%s3 + $0x1b8] sm:$0xff] %v1205
    %1270 = vst [vmem:[%s3 + $0x1c0] sm:$0xff] %v1206
    %1271 = vst [vmem:[%s3 + $0x1c8] sm:$0xff] %v1207
    %1272 = vst [vmem:[%s3 + $0x1d0] sm:$0xff] %v1208
    %1273 = vst [vmem:[%s3 + $0x1d8] sm:$0xff] %v1209
    %1274 = vst [vmem:[%s3 + $0x1e0] sm:$0xff] %v1210
    %1275 = vst [vmem:[%s3 + $0x1e8] sm:$0xff] %v1211
    %1276 = vst [vmem:[%s3 + $0x1f0] sm:$0xff] %v1212
    %1277 = vst [vmem:[%s3 + $0x1f8] sm:$0xff] %v1213
  $region21: #{discriminator_forward.7} parent=0 // pred_fallthru
    _
  // Predicated region
  $region22: #{discriminator_forward.7} parent=0 // pred_check
    _
  $region23: #{discriminator_forward.7} parent=0 // pred_check_branch
    %1279 = sbr.rel (0) target = $region25
  $region24: #{discriminator_forward.7} parent=0 // pred_region
    _
  $region25: #{discriminator_forward.7} parent=0 // pred_fallthru
    _
  // Predicated region
  $region26: #{discriminator_forward.7} parent=0 // pred_check
    _
  $region27: #{discriminator_forward.7} parent=0 // pred_check_branch
    %1281 = sbr.rel (0) target = $region29
  $region28: #{discriminator_forward.7} parent=0 // pred_region
    _
  $region29: #{discriminator_forward.7} parent=0 // pred_fallthru
    _

// kernel: discriminator_forward.8
$region0: #{discriminator_forward.8}
  #allocation0 [shape = 'u32[]', space=smem, size = 0x4, offset = 0x4, fixed_abs, tag = 'smem constant byte address 0x4 - core index']
  #allocation1 [shape = 'u32[144,128]{1,0:T(1,128)}', space=vmem, size = 0x12000, scoped, tag = 'internal scratch']
  #allocation2 [shape = 'f32[128,128]{1,0:T(8,128)}', space=vmem, size = 0x10000, scoped, tag = 'scratch operand']
  %s0 = inlined_call_operand.vmem [shape: bf16[128,1024], index: 0, kind: input, shape index: {}]
  %s1 = inlined_call_operand.vmem [shape: bf16[1024,128], index: 1, kind: input, shape index: {}]
  %s2 = inlined_call_operand.vmem [shape: f32[1,128], index: 2, kind: input, shape index: {}]
  %s3 = inlined_call_operand.vmem [shape: f32[128,128], index: 3, kind: output, shape index: {}]
  %s4 = sld [smem:[#allocation0]]
  $region76: #{discriminator_forward.8} parent=0
    _
  %s6 = ssub.s32 1, %s4
  %s7 = scalar_select 0, %s6, %s4
  $region1: #{discriminator_forward.8} parent=0
    #allocation3 [shape = 'u8[262144]{0}', space=vmem, size = 0x40000, scoped, tag = 'input window, operand 0']
    loop: start=0, step=1, limit=4
    $region2: #{discriminator_forward.8} parent=1 // loop_pre_header
      _
    $region3: #{discriminator_forward.8} parent=1 // loop_header
      %s9 = sphi 0, %s13
      %p10 = scmp.ge.s32.totalorder %s9, 4
      %s16 = sphi 0, %s35
      %s17 = sphi 0, %s31
      %s18 = sphi 0, %s27
      %s19 = sphi 0, %s16
      %s20 = sphi 0, %s17
      %s21 = sphi 0, %s18
      %s22 = sphi 0, %s19
      %s23 = sphi 0, %s20
      %s24 = sphi 0, %s21
      %s40 = sphi 0, %s42
      %s43 = sphi 0, %s40
      %s44 = sphi 0, %s43
      %s60 = sphi 0, %s44
      %s68 = sphi 0, %s70
      %s71 = sphi 0, %s68
      %s72 = sphi 0, %s71
      %s88 = sphi 0, %s72
      %s94 = sphi 0, %s96
      %s97 = sphi 0, %s94
      %s98 = sphi 0, %s97
      %s114 = sphi 0, %s98
      %s122 = sphi 0, %s124
      %s125 = sphi 0, %s122
      %s126 = sphi 0, %s125
      %s142 = sphi 0, %s126
    $region4: #{discriminator_forward.8} parent=1 // loop_header_branch
      %12 = sbr.rel (%p10) target = $region8
    $region5: #{discriminator_forward.8} parent=1 // loop_body
      %s14 = ssub.s32 %s9, 1
      %s15 = ssub.s32 %s9, 2
      %s25 = sadd.s32 1, %s18
      %p26 = scmp.ge.s32.totalorder %s25, 2
      %s27 = scalar_select %p26, 0, %s25
      %s28 = sadd.s32 1, %s17
      %s29 = scalar_select %p26, %s28, %s17
      %p30 = scmp.ge.s32.totalorder %s29, 1
      %s31 = scalar_select %p30, 0, %s29
      %s32 = sadd.s32 1, %s16
      %s33 = scalar_select %p30, %s32, %s16
      %p34 = scmp.ge.s32.totalorder %s33, 1
      %s35 = scalar_select %p34, 0, %s33
      %s36 = ssub.s32 %s16, %s35
      %s37 = ssub.s32 %s18, %s27
      %s38 = sor.u32 %s36, %s37
      %p39 = scmp.eq.s32.totalorder %s38, 0
      %s41 = sadd.s32 %s40, 1
      %s42 = scalar_select %p39, %s40, %s41
      %p45 = pneg %p39
      %p46 = scmp.eq.s32.totalorder %s9, 1
      %p47 = por %p45, %p46
      %p48 = scmp.ne.s32.totalorder %s40, %s43
      %p49 = scmp.eq.s32.totalorder %s9, 0
      %p50 = por %p48, %p49
      %p51 = scmp.ne.s32.totalorder %s40, %s43
      %p52 = scmp.eq.s32.totalorder %s14, 1
      %p53 = por %p51, %p52
      %p54 = scmp.ne.s32.totalorder %s43, %s44
      %p55 = scmp.eq.s32.totalorder %s14, 0
      %p56 = por %p54, %p55
      %p57 = scmp.ne.s32.totalorder %s43, %s44
      %p58 = scmp.eq.s32.totalorder %s15, 1
      %p59 = por %p57, %p58
      %p61 = scmp.ne.s32.totalorder %s44, %s60
      %p62 = scmp.eq.s32.totalorder %s15, 0
      %p63 = por %p61, %p62
      %s64 = ssub.s32 %s18, %s27
      %s65 = ssub.s32 %s17, %s31
      %s66 = sor.u32 %s64, %s65
      %p67 = scmp.eq.s32.totalorder %s66, 0
      %s69 = sadd.s32 %s68, 1
      %s70 = scalar_select %p67, %s68, %s69
      %p73 = pneg %p67
      %p74 = scmp.eq.s32.totalorder %s9, 1
      %p75 = por %p73, %p74
      %p76 = scmp.ne.s32.totalorder %s68, %s71
      %p77 = scmp.eq.s32.totalorder %s9, 0
      %p78 = por %p76, %p77
      %p79 = scmp.ne.s32.totalorder %s68, %s71
      %p80 = scmp.eq.s32.totalorder %s14, 1
      %p81 = por %p79, %p80
      %p82 = scmp.ne.s32.totalorder %s71, %s72
      %p83 = scmp.eq.s32.totalorder %s14, 0
      %p84 = por %p82, %p83
      %p85 = scmp.ne.s32.totalorder %s71, %s72
      %p86 = scmp.eq.s32.totalorder %s15, 1
      %p87 = por %p85, %p86
      %p89 = scmp.ne.s32.totalorder %s72, %s88
      %p90 = scmp.eq.s32.totalorder %s15, 0
      %p91 = por %p89, %p90
      %s92 = ssub.s32 %s17, %s31
      %p93 = scmp.eq.s32.totalorder %s92, 0
      %s95 = sadd.s32 %s94, 1
      %s96 = scalar_select %p93, %s94, %s95
      %p99 = pneg %p93
      %p100 = scmp.eq.s32.totalorder %s9, 1
      %p101 = por %p99, %p100
      %p102 = scmp.ne.s32.totalorder %s94, %s97
      %p103 = scmp.eq.s32.totalorder %s9, 0
      %p104 = por %p102, %p103
      %p105 = scmp.ne.s32.totalorder %s94, %s97
      %p106 = scmp.eq.s32.totalorder %s14, 1
      %p107 = por %p105, %p106
      %p108 = scmp.ne.s32.totalorder %s97, %s98
      %p109 = scmp.eq.s32.totalorder %s14, 0
      %p110 = por %p108, %p109
      %p111 = scmp.ne.s32.totalorder %s97, %s98
      %p112 = scmp.eq.s32.totalorder %s15, 1
      %p113 = por %p111, %p112
      %p115 = scmp.ne.s32.totalorder %s98, %s114
      %p116 = scmp.eq.s32.totalorder %s15, 0
      %p117 = por %p115, %p116
      %s118 = ssub.s32 %s16, %s35
      %s119 = ssub.s32 %s17, %s31
      %s120 = sor.u32 %s118, %s119
      %p121 = scmp.eq.s32.totalorder %s120, 0
      %s123 = sadd.s32 %s122, 1
      %s124 = scalar_select %p121, %s122, %s123
      %p127 = pneg %p121
      %p128 = scmp.eq.s32.totalorder %s9, 1
      %p129 = por %p127, %p128
      %p130 = scmp.ne.s32.totalorder %s122, %s125
      %p131 = scmp.eq.s32.totalorder %s9, 0
      %p132 = por %p130, %p131
      %p133 = scmp.ne.s32.totalorder %s122, %s125
      %p134 = scmp.eq.s32.totalorder %s14, 1
      %p135 = por %p133, %p134
      %p136 = scmp.ne.s32.totalorder %s125, %s126
      %p137 = scmp.eq.s32.totalorder %s14, 0
      %p138 = por %p136, %p137
      %p139 = scmp.ne.s32.totalorder %s125, %s126
      %p140 = scmp.eq.s32.totalorder %s15, 1
      %p141 = por %p139, %p140
      %p143 = scmp.ne.s32.totalorder %s126, %s142
      %p144 = scmp.eq.s32.totalorder %s15, 0
      %p145 = por %p143, %p144
      %p146 = scmp.le.s32.totalorder 1, %s9
      %p147 = scmp.lt.s32.totalorder %s9, 3
      %p148 = pnand %p146, %p147
      %p149 = pneg %p148
      // Predicated region
      $region9: #{discriminator_forward.8} parent=5 // pred_check
        _
      $region10: #{discriminator_forward.8} parent=5 // pred_check_branch
        %151 = sbr.rel (%p148) target = $region12
      $region11: #{discriminator_forward.8} parent=5 // pred_region
        %s152 = ssub.s32 %s9, 1
        // Predicated region
        $region13: #{discriminator_forward.8} parent=11 // pred_check
          %p153 = pneg %p110
        $region14: #{discriminator_forward.8} parent=11 // pred_check_branch
          %155 = sbr.rel (%p153) target = $region16
        $region15: #{discriminator_forward.8} parent=11 // pred_region
          %p156 = scmp.lt.s32.totalorder %s20, 0
          %s157 = scalar_select %p156, %s20, 0
          %s158 = scalar_lea.vmem %s2, %s157
        $region16: #{discriminator_forward.8} parent=11 // pred_fallthru
          _
      $region12: #{discriminator_forward.8} parent=5 // pred_fallthru
        _
      %p159 = scmp.lt.s32.totalorder %s9, 2
      // Predicated region
      $region17: #{discriminator_forward.8} parent=5 // pred_check
        %p160 = pneg %p159
      $region18: #{discriminator_forward.8} parent=5 // pred_check_branch
        %162 = sbr.rel (%p160) target = $region20
      $region19: #{discriminator_forward.8} parent=5 // pred_region
        // Predicated region
        $region21: #{discriminator_forward.8} parent=19 // pred_check
          %p163 = pneg %p50
        $region22: #{discriminator_forward.8} parent=19 // pred_check_branch
          %165 = sbr.rel (%p163) target = $region24
        $region23: #{discriminator_forward.8} parent=19 // pred_region
          %s166 = sand.u32 %s40, 1
          %s167 = sand.u32 %s40, 1
          %s168 = smul.addr %s167, 256
          %s169 = scalar_lea.vmem [#allocation3], %s168
          %s170 = smul.u32 16, %s16
          %s171 = smul.u32 4, %s18
          %s172 = smul.addr %s170, 8
          %s173 = sadd.s32 %s171, %s172
          %s174 = smul.addr %s173, 4
          %s175 = scalar_lea.vmem %s0, %s174
          // Predicated region
          $region25: #{discriminator_forward.8} parent=23 // pred_check
            _
          $region26: #{discriminator_forward.8} parent=23 // pred_check_branch
            %177 = sbr.rel (0) target = $region28
          $region27: #{discriminator_forward.8} parent=23 // pred_region
            // Predicated region
            $region29: #{discriminator_forward.8} parent=27 // pred_check
              _
            $region30: #{discriminator_forward.8} parent=27 // pred_check_branch
              %179 = sbr.rel (0) target = $region32
            $region31: #{discriminator_forward.8} parent=27 // pred_region
              loop: start=0, step=1, limit=1
              $region33: #{discriminator_forward.8} parent=31 // loop_pre_header
                _
              $region34: #{discriminator_forward.8} parent=31 // loop_header
                %s181 = sphi 0, %s185
                %p182 = scmp.ge.s32.totalorder %s181, 1
                %s186 = sphi %s175, %s175
                %s187 = sphi %s169, %s169
              $region35: #{discriminator_forward.8} parent=31 // loop_header_branch
                %184 = sbr.rel (%p182) target = $region39
              $region36: #{discriminator_forward.8} parent=31 // loop_body
                %v188 = vld [vmem:[%s186] sm:$0xff]
                %189 = vst [vmem:[%s187] sm:$0xff] %v188
                %v190 = vld [vmem:[%s186 + $0x8] sm:$0xff]
                %191 = vst [vmem:[%s187 + $0x8] sm:$0xff] %v190
                %v192 = vld [vmem:[%s186 + $0x20] sm:$0xff]
                %193 = vst [vmem:[%s187 + $0x10] sm:$0xff] %v192
                %v194 = vld [vmem:[%s186 + $0x28] sm:$0xff]
                %195 = vst [vmem:[%s187 + $0x18] sm:$0xff] %v194
                %v196 = vld [vmem:[%s186 + $0x40] sm:$0xff]
                %197 = vst [vmem:[%s187 + $0x20] sm:$0xff] %v196
                %v198 = vld [vmem:[%s186 + $0x48] sm:$0xff]
                %199 = vst [vmem:[%s187 + $0x28] sm:$0xff] %v198
                %v200 = vld [vmem:[%s186 + $0x60] sm:$0xff]
                %201 = vst [vmem:[%s187 + $0x30] sm:$0xff] %v200
                %v202 = vld [vmem:[%s186 + $0x68] sm:$0xff]
                %203 = vst [vmem:[%s187 + $0x38] sm:$0xff] %v202
                %v204 = vld [vmem:[%s186 + $0x80] sm:$0xff]
                %205 = vst [vmem:[%s187 + $0x40] sm:$0xff] %v204
                %v206 = vld [vmem:[%s186 + $0x88] sm:$0xff]
                %207 = vst [vmem:[%s187 + $0x48] sm:$0xff] %v206
                %v208 = vld [vmem:[%s186 + $0xa0] sm:$0xff]
                %209 = vst [vmem:[%s187 + $0x50] sm:$0xff] %v208
                %v210 = vld [vmem:[%s186 + $0xa8] sm:$0xff]
                %211 = vst [vmem:[%s187 + $0x58] sm:$0xff] %v210
                %v212 = vld [vmem:[%s186 + $0xc0] sm:$0xff]
                %213 = vst [vmem:[%s187 + $0x60] sm:$0xff] %v212
                %v214 = vld [vmem:[%s186 + $0xc8] sm:$0xff]
                %215 = vst [vmem:[%s187 + $0x68] sm:$0xff] %v214
                %v216 = vld [vmem:[%s186 + $0xe0] sm:$0xff]
                %217 = vst [vmem:[%s187 + $0x70] sm:$0xff] %v216
                %v218 = vld [vmem:[%s186 + $0xe8] sm:$0xff]
                %219 = vst [vmem:[%s187 + $0x78] sm:$0xff] %v218
                %v220 = vld [vmem:[%s186 + $0x100] sm:$0xff]
                %221 = vst [vmem:[%s187 + $0x80] sm:$0xff] %v220
                %v222 = vld [vmem:[%s186 + $0x108] sm:$0xff]
                %223 = vst [vmem:[%s187 + $0x88] sm:$0xff] %v222
                %v224 = vld [vmem:[%s186 + $0x120] sm:$0xff]
                %225 = vst [vmem:[%s187 + $0x90] sm:$0xff] %v224
                %v226 = vld [vmem:[%s186 + $0x128] sm:$0xff]
                %227 = vst [vmem:[%s187 + $0x98] sm:$0xff] %v226
                %v228 = vld [vmem:[%s186 + $0x140] sm:$0xff]
                %229 = vst [vmem:[%s187 + $0xa0] sm:$0xff] %v228
                %v230 = vld [vmem:[%s186 + $0x148] sm:$0xff]
                %231 = vst [vmem:[%s187 + $0xa8] sm:$0xff] %v230
                %v232 = vld [vmem:[%s186 + $0x160] sm:$0xff]
                %233 = vst [vmem:[%s187 + $0xb0] sm:$0xff] %v232
                %v234 = vld [vmem:[%s186 + $0x168] sm:$0xff]
                %235 = vst [vmem:[%s187 + $0xb8] sm:$0xff] %v234
                %v236 = vld [vmem:[%s186 + $0x180] sm:$0xff]
                %237 = vst [vmem:[%s187 + $0xc0] sm:$0xff] %v236
                %v238 = vld [vmem:[%s186 + $0x188] sm:$0xff]
                %239 = vst [vmem:[%s187 + $0xc8] sm:$0xff] %v238
                %v240 = vld [vmem:[%s186 + $0x1a0] sm:$0xff]
                %241 = vst [vmem:[%s187 + $0xd0] sm:$0xff] %v240
                %v242 = vld [vmem:[%s186 + $0x1a8] sm:$0xff]
                %243 = vst [vmem:[%s187 + $0xd8] sm:$0xff] %v242
                %v244 = vld [vmem:[%s186 + $0x1c0] sm:$0xff]
                %245 = vst [vmem:[%s187 + $0xe0] sm:$0xff] %v244
                %v246 = vld [vmem:[%s186 + $0x1c8] sm:$0xff]
                %247 = vst [vmem:[%s187 + $0xe8] sm:$0xff] %v246
                %v248 = vld [vmem:[%s186 + $0x1e0] sm:$0xff]
                %249 = vst [vmem:[%s187 + $0xf0] sm:$0xff] %v248
                %v250 = vld [vmem:[%s186 + $0x1e8] sm:$0xff]
                %251 = vst [vmem:[%s187 + $0xf8] sm:$0xff] %v250
              $region37: #{discriminator_forward.8} parent=31 // loop_footer
                %s185 = sadd.s32 1, %s181
              $region38: #{discriminator_forward.8} parent=31 // loop_footer_branch
                %180 = sbr.rel target = $region34
              $region39: #{discriminator_forward.8} parent=31 // loop_exit
                _
            $region32: #{discriminator_forward.8} parent=27 // pred_fallthru
              _
            // Predicated region
            $region40: #{discriminator_forward.8} parent=27 // pred_check
              _
            $region41: #{discriminator_forward.8} parent=27 // pred_check_branch
              %253 = sbr.rel target = $region43
            $region42: #{discriminator_forward.8} parent=27 // pred_region
              _
            $region43: #{discriminator_forward.8} parent=27 // pred_fallthru
              _
          $region28: #{discriminator_forward.8} parent=23 // pred_fallthru
            _
          %254 = vnop
        $region24: #{discriminator_forward.8} parent=19 // pred_fallthru
          _
        // Predicated region
        $region44: #{discriminator_forward.8} parent=19 // pred_check
          %p255 = pneg %p78
        $region45: #{discriminator_forward.8} parent=19 // pred_check_branch
          %257 = sbr.rel (%p255) target = $region47
        $region46: #{discriminator_forward.8} parent=19 // pred_region
          %s258 = smul.u32 64, %s18
          %p259 = scmp.lt.s32.totalorder %s258, 127
          %s260 = scalar_select %p259, %s258, 127
          %p261 = scmp.lt.s32.totalorder %s17, 0
          %s262 = scalar_select %p261, %s17, 0
          %s263 = sadd.s32 %s262, %s260
          %s264 = smul.addr %s263, 4
          %s265 = scalar_lea.vmem %s1, %s264
          %s266 = smul.u32 64, %s18
        $region47: #{discriminator_forward.8} parent=19 // pred_fallthru
          _
      $region20: #{discriminator_forward.8} parent=5 // pred_fallthru
        _
      %p267 = scmp.le.s32.totalorder 1, %s9
      %p268 = scmp.lt.s32.totalorder %s9, 3
      %p269 = pnand %p267, %p268
      %p270 = pneg %p269
      // Predicated region
      $region48: #{discriminator_forward.8} parent=5 // pred_check
        _
      $region49: #{discriminator_forward.8} parent=5 // pred_check_branch
        %272 = sbr.rel (%p269) target = $region51
      $region50: #{discriminator_forward.8} parent=5 // pred_region
        %s273 = ssub.s32 %s9, 1
        %s274 = sand.u32 %s43, 1
        %s275 = sand.u32 %s43, 1
        %s276 = smul.addr %s275, 256
        %s277 = scalar_lea.vmem [#allocation3], %s276
        // Predicated region
        $region52: #{discriminator_forward.8} parent=50 // pred_check
          %p278 = pneg %p56
        $region53: #{discriminator_forward.8} parent=50 // pred_check_branch
          %280 = sbr.rel (%p278) target = $region55
        $region54: #{discriminator_forward.8} parent=50 // pred_region
          _
        $region55: #{discriminator_forward.8} parent=50 // pred_fallthru
          _
        %s281 = sand.u32 %s43, 1
        %s282 = sand.u32 %s43, 1
        %s283 = smul.addr %s282, 256
        %s284 = scalar_lea.vmem [#allocation3], %s283
        %p285 = pneg %p56
        %p286 = pneg %p53
        %s287 = smul.u32 64, %s21
        %p288 = scmp.lt.s32.totalorder %s287, 127
        %s289 = scalar_select %p288, %s287, 127
        %p290 = scmp.lt.s32.totalorder %s20, 0
        %s291 = scalar_select %p290, %s20, 0
        %s292 = sadd.s32 %s291, %s289
        %s293 = smul.addr %s292, 4
        %s294 = scalar_lea.vmem %s1, %s293
        %p295 = pneg %p84
        %p296 = pneg %p81
        %p297 = scmp.lt.s32.totalorder %s20, 0
        %s298 = scalar_select %p297, %s20, 0
        %s299 = scalar_lea.vmem %s2, %s298
        %p300 = pneg %p110
        %p301 = pneg %p107
        %p302 = pneg %p138
        %p303 = pneg %p135
        %s304 = smul.u32 16, %s19
        %p305 = scmp.lt.s32.totalorder %s304, 15
        %s306 = scalar_select %p305, %s304, 15
        %p307 = scmp.lt.s32.totalorder %s20, 0
        %s308 = scalar_select %p307, %s20, 0
        %s309 = sadd.s32 %s308, %s306
        %s310 = smul.addr %s309, 8
        %s311 = scalar_lea.vmem %s3, %s310
        %s312 = smul.u32 16, %s19
        %s313 = smul.u32 4, %s21
        %s314 = smul.u32 64, %s21
        %p315 = scmp.lt.s32.totalorder %s314, 127
        %s316 = scalar_select %p315, %s314, 127
        %p317 = scmp.lt.s32.totalorder %s20, 0
        %s318 = scalar_select %p317, %s20, 0
        %s319 = sadd.s32 %s318, %s316
        %s320 = smul.addr %s319, 4
        %s321 = scalar_lea.vmem %s1, %s320
        %s322 = smul.u32 64, %s21
        %p323 = scmp.lt.s32.totalorder %s20, 0
        %s324 = scalar_select %p323, %s20, 0
        %s325 = scalar_lea.vmem %s2, %s324
        %s326 = smul.u32 16, %s19
        %p327 = scmp.lt.s32.totalorder %s326, 15
        %s328 = scalar_select %p327, %s326, 15
        %p329 = scmp.lt.s32.totalorder %s20, 0
        %s330 = scalar_select %p329, %s20, 0
        %s331 = sadd.s32 %s330, %s328
        %s332 = smul.addr %s331, 8
        %s333 = scalar_lea.vmem %s3, %s332
        %s334 = smul.u32 16, %s19
        %p336 = scmp.eq.s32.totalorder %s21, 0
        // Predicated region
        $region56: #{discriminator_forward.8} parent=50 // pred_check
          %p337 = pneg %p336
        $region57: #{discriminator_forward.8} parent=50 // pred_check_branch
          %339 = sbr.rel (%p337) target = $region59
        $region58: #{discriminator_forward.8} parent=50 // pred_region
          %340 = vst [vmem:[#allocation2] sm:$0xff] 0.0
          %341 = vst [vmem:[#allocation2 + $0x8] sm:$0xff] 0.0
          %342 = vst [vmem:[#allocation2 + $0x10] sm:$0xff] 0.0
          %343 = vst [vmem:[#allocation2 + $0x18] sm:$0xff] 0.0
          %344 = vst [vmem:[#allocation2 + $0x20] sm:$0xff] 0.0
          %345 = vst [vmem:[#allocation2 + $0x28] sm:$0xff] 0.0
          %346 = vst [vmem:[#allocation2 + $0x30] sm:$0xff] 0.0
          %347 = vst [vmem:[#allocation2 + $0x38] sm:$0xff] 0.0
          %348 = vst [vmem:[#allocation2 + $0x40] sm:$0xff] 0.0
          %349 = vst [vmem:[#allocation2 + $0x48] sm:$0xff] 0.0
          %350 = vst [vmem:[#allocation2 + $0x50] sm:$0xff] 0.0
          %351 = vst [vmem:[#allocation2 + $0x58] sm:$0xff] 0.0
          %352 = vst [vmem:[#allocation2 + $0x60] sm:$0xff] 0.0
          %353 = vst [vmem:[#allocation2 + $0x68] sm:$0xff] 0.0
          %354 = vst [vmem:[#allocation2 + $0x70] sm:$0xff] 0.0
          %355 = vst [vmem:[#allocation2 + $0x78] sm:$0xff] 0.0
        $region59: #{discriminator_forward.8} parent=50 // pred_fallthru
          _
        %v356 = vld [vmem:[#allocation2] sm:$0xff]
        %v357 = vld [vmem:[#allocation2 + $0x8] sm:$0xff]
        %v358 = vld [vmem:[#allocation2 + $0x10] sm:$0xff]
        %v359 = vld [vmem:[#allocation2 + $0x18] sm:$0xff]
        %v360 = vld [vmem:[#allocation2 + $0x20] sm:$0xff]
        %v361 = vld [vmem:[#allocation2 + $0x28] sm:$0xff]
        %v362 = vld [vmem:[#allocation2 + $0x30] sm:$0xff]
        %v363 = vld [vmem:[#allocation2 + $0x38] sm:$0xff]
        %v364 = vld [vmem:[#allocation2 + $0x40] sm:$0xff]
        %v365 = vld [vmem:[#allocation2 + $0x48] sm:$0xff]
        %v366 = vld [vmem:[#allocation2 + $0x50] sm:$0xff]
        %v367 = vld [vmem:[#allocation2 + $0x58] sm:$0xff]
        %v368 = vld [vmem:[#allocation2 + $0x60] sm:$0xff]
        %v369 = vld [vmem:[#allocation2 + $0x68] sm:$0xff]
        %v370 = vld [vmem:[#allocation2 + $0x70] sm:$0xff]
        %v371 = vld [vmem:[#allocation2 + $0x78] sm:$0xff]
        %v372 = vld [vmem:[%s277] sm:$0xff]
        %v373 = vld [vmem:[%s277 + $0x8] sm:$0xff]
        %v374 = vld [vmem:[%s277 + $0x10] sm:$0xff]
        %v375 = vld [vmem:[%s277 + $0x18] sm:$0xff]
        %v376 = vld [vmem:[%s277 + $0x20] sm:$0xff]
        %v377 = vld [vmem:[%s277 + $0x28] sm:$0xff]
        %v378 = vld [vmem:[%s277 + $0x30] sm:$0xff]
        %v379 = vld [vmem:[%s277 + $0x38] sm:$0xff]
        %v380 = vld [vmem:[%s277 + $0x40] sm:$0xff]
        %v381 = vld [vmem:[%s277 + $0x48] sm:$0xff]
        %v382 = vld [vmem:[%s277 + $0x50] sm:$0xff]
        %v383 = vld [vmem:[%s277 + $0x58] sm:$0xff]
        %v384 = vld [vmem:[%s277 + $0x60] sm:$0xff]
        %v385 = vld [vmem:[%s277 + $0x68] sm:$0xff]
        %v386 = vld [vmem:[%s277 + $0x70] sm:$0xff]
        %v387 = vld [vmem:[%s277 + $0x78] sm:$0xff]
        %v388 = vld [vmem:[%s277 + $0x80] sm:$0xff]
        %v389 = vld [vmem:[%s277 + $0x88] sm:$0xff]
        %v390 = vld [vmem:[%s277 + $0x90] sm:$0xff]
        %v391 = vld [vmem:[%s277 + $0x98] sm:$0xff]
        %v392 = vld [vmem:[%s277 + $0xa0] sm:$0xff]
        %v393 = vld [vmem:[%s277 + $0xa8] sm:$0xff]
        %v394 = vld [vmem:[%s277 + $0xb0] sm:$0xff]
        %v395 = vld [vmem:[%s277 + $0xb8] sm:$0xff]
        %v396 = vld [vmem:[%s277 + $0xc0] sm:$0xff]
        %v397 = vld [vmem:[%s277 + $0xc8] sm:$0xff]
        %v398 = vld [vmem:[%s277 + $0xd0] sm:$0xff]
        %v399 = vld [vmem:[%s277 + $0xd8] sm:$0xff]
        %v400 = vld [vmem:[%s277 + $0xe0] sm:$0xff]
        %v401 = vld [vmem:[%s277 + $0xe8] sm:$0xff]
        %v402 = vld [vmem:[%s277 + $0xf0] sm:$0xff]
        %v403 = vld [vmem:[%s277 + $0xf8] sm:$0xff]
        %v404 = vld [vmem:[%s321] sm:$0xf]
        %v405 = vld [vmem:[%s321 + $0x4] sm:$0xf]
        %v406 = vld [vmem:[%s321 + $0x8] sm:$0xf]
        %v407 = vld [vmem:[%s321 + $0xc] sm:$0xf]
        %v408 = vld [vmem:[%s321 + $0x10] sm:$0xf]
        %v409 = vld [vmem:[%s321 + $0x14] sm:$0xf]
        %v410 = vld [vmem:[%s321 + $0x18] sm:$0xf]
        %v411 = vld [vmem:[%s321 + $0x1c] sm:$0xf]
        %v412 = vld [vmem:[%s321 + $0x20] sm:$0xf]
        %v413 = vld [vmem:[%s321 + $0x24] sm:$0xf]
        %v414 = vld [vmem:[%s321 + $0x28] sm:$0xf]
        %v415 = vld [vmem:[%s321 + $0x2c] sm:$0xf]
        %v416 = vld [vmem:[%s321 + $0x30] sm:$0xf]
        %v417 = vld [vmem:[%s321 + $0x34] sm:$0xf]
        %v418 = vld [vmem:[%s321 + $0x38] sm:$0xf]
        %v419 = vld [vmem:[%s321 + $0x3c] sm:$0xf]
        %v420 = vld [vmem:[%s321 + $0x40] sm:$0xf]
        %v421 = vld [vmem:[%s321 + $0x44] sm:$0xf]
        %v422 = vld [vmem:[%s321 + $0x48] sm:$0xf]
        %v423 = vld [vmem:[%s321 + $0x4c] sm:$0xf]
        %v424 = vld [vmem:[%s321 + $0x50] sm:$0xf]
        %v425 = vld [vmem:[%s321 + $0x54] sm:$0xf]
        %v426 = vld [vmem:[%s321 + $0x58] sm:$0xf]
        %v427 = vld [vmem:[%s321 + $0x5c] sm:$0xf]
        %v428 = vld [vmem:[%s321 + $0x60] sm:$0xf]
        %v429 = vld [vmem:[%s321 + $0x64] sm:$0xf]
        %v430 = vld [vmem:[%s321 + $0x68] sm:$0xf]
        %v431 = vld [vmem:[%s321 + $0x6c] sm:$0xf]
        %v432 = vld [vmem:[%s321 + $0x70] sm:$0xf]
        %v433 = vld [vmem:[%s321 + $0x74] sm:$0xf]
        %v434 = vld [vmem:[%s321 + $0x78] sm:$0xf]
        %v435 = vld [vmem:[%s321 + $0x7c] sm:$0xf]
        %v436 = vld [vmem:[%s321 + $0x80] sm:$0xf]
        %v437 = vld [vmem:[%s321 + $0x84] sm:$0xf]
        %v438 = vld [vmem:[%s321 + $0x88] sm:$0xf]
        %v439 = vld [vmem:[%s321 + $0x8c] sm:$0xf]
        %v440 = vld [vmem:[%s321 + $0x90] sm:$0xf]
        %v441 = vld [vmem:[%s321 + $0x94] sm:$0xf]
        %v442 = vld [vmem:[%s321 + $0x98] sm:$0xf]
        %v443 = vld [vmem:[%s321 + $0x9c] sm:$0xf]
        %v444 = vld [vmem:[%s321 + $0xa0] sm:$0xf]
        %v445 = vld [vmem:[%s321 + $0xa4] sm:$0xf]
        %v446 = vld [vmem:[%s321 + $0xa8] sm:$0xf]
        %v447 = vld [vmem:[%s321 + $0xac] sm:$0xf]
        %v448 = vld [vmem:[%s321 + $0xb0] sm:$0xf]
        %v449 = vld [vmem:[%s321 + $0xb4] sm:$0xf]
        %v450 = vld [vmem:[%s321 + $0xb8] sm:$0xf]
        %v451 = vld [vmem:[%s321 + $0xbc] sm:$0xf]
        %v452 = vld [vmem:[%s321 + $0xc0] sm:$0xf]
        %v453 = vld [vmem:[%s321 + $0xc4] sm:$0xf]
        %v454 = vld [vmem:[%s321 + $0xc8] sm:$0xf]
        %v455 = vld [vmem:[%s321 + $0xcc] sm:$0xf]
        %v456 = vld [vmem:[%s321 + $0xd0] sm:$0xf]
        %v457 = vld [vmem:[%s321 + $0xd4] sm:$0xf]
        %v458 = vld [vmem:[%s321 + $0xd8] sm:$0xf]
        %v459 = vld [vmem:[%s321 + $0xdc] sm:$0xf]
        %v460 = vld [vmem:[%s321 + $0xe0] sm:$0xf]
        %v461 = vld [vmem:[%s321 + $0xe4] sm:$0xf]
        %v462 = vld [vmem:[%s321 + $0xe8] sm:$0xf]
        %v463 = vld [vmem:[%s321 + $0xec] sm:$0xf]
        %v464 = vld [vmem:[%s321 + $0xf0] sm:$0xf]
        %v465 = vld [vmem:[%s321 + $0xf4] sm:$0xf]
        %v466 = vld [vmem:[%s321 + $0xf8] sm:$0xf]
        %v467 = vld [vmem:[%s321 + $0xfc] sm:$0xf]
        %v500 = vunpack.c.l.b16 %v372
        %v501 = vunpack.c.h.b16 %v372
        %v502 = vunpack.c.l.b16 %v373
        %v503 = vunpack.c.h.b16 %v373
        %v504 = vunpack.c.l.b16 %v374
        %v505 = vunpack.c.h.b16 %v374
        %v506 = vunpack.c.l.b16 %v375
        %v507 = vunpack.c.h.b16 %v375
        %v508 = vunpack.c.l.b16 %v376
        %v509 = vunpack.c.h.b16 %v376
        %v510 = vunpack.c.l.b16 %v377
        %v511 = vunpack.c.h.b16 %v377
        %v512 = vunpack.c.l.b16 %v378
        %v513 = vunpack.c.h.b16 %v378
        %v514 = vunpack.c.l.b16 %v379
        %v515 = vunpack.c.h.b16 %v379
        %v516 = vunpack.c.l.b16 %v380
        %v517 = vunpack.c.h.b16 %v380
        %v518 = vunpack.c.l.b16 %v381
        %v519 = vunpack.c.h.b16 %v381
        %v520 = vunpack.c.l.b16 %v382
        %v521 = vunpack.c.h.b16 %v382
        %v522 = vunpack.c.l.b16 %v383
        %v523 = vunpack.c.h.b16 %v383
        %v524 = vunpack.c.l.b16 %v384
        %v525 = vunpack.c.h.b16 %v384
        %v526 = vunpack.c.l.b16 %v385
        %v527 = vunpack.c.h.b16 %v385
        %v528 = vunpack.c.l.b16 %v386
        %v529 = vunpack.c.h.b16 %v386
        %v530 = vunpack.c.l.b16 %v387
        %v531 = vunpack.c.h.b16 %v387
        %v532 = vunpack.c.l.b16 %v388
        %v533 = vunpack.c.h.b16 %v388
        %v534 = vunpack.c.l.b16 %v389
        %v535 = vunpack.c.h.b16 %v389
        %v536 = vunpack.c.l.b16 %v390
        %v537 = vunpack.c.h.b16 %v390
        %v538 = vunpack.c.l.b16 %v391
        %v539 = vunpack.c.h.b16 %v391
        %v540 = vunpack.c.l.b16 %v392
        %v541 = vunpack.c.h.b16 %v392
        %v542 = vunpack.c.l.b16 %v393
        %v543 = vunpack.c.h.b16 %v393
        %v544 = vunpack.c.l.b16 %v394
        %v545 = vunpack.c.h.b16 %v394
        %v546 = vunpack.c.l.b16 %v395
        %v547 = vunpack.c.h.b16 %v395
        %v548 = vunpack.c.l.b16 %v396
        %v549 = vunpack.c.h.b16 %v396
        %v550 = vunpack.c.l.b16 %v397
        %v551 = vunpack.c.h.b16 %v397
        %v552 = vunpack.c.l.b16 %v398
        %v553 = vunpack.c.h.b16 %v398
        %v554 = vunpack.c.l.b16 %v399
        %v555 = vunpack.c.h.b16 %v399
        %v556 = vunpack.c.l.b16 %v400
        %v557 = vunpack.c.h.b16 %v400
        %v558 = vunpack.c.l.b16 %v401
        %v559 = vunpack.c.h.b16 %v401
        %v560 = vunpack.c.l.b16 %v402
        %v561 = vunpack.c.h.b16 %v402
        %v562 = vunpack.c.l.b16 %v403
        %v563 = vunpack.c.h.b16 %v403
        %v564 = vpack.c.b16 %v504, %v500
        %v565 = vpack.c.b16 %v505, %v501
        %v566 = vpack.c.b16 %v506, %v502
        %v567 = vpack.c.b16 %v507, %v503
        %v568 = vpack.c.b16 %v512, %v508
        %v569 = vpack.c.b16 %v513, %v509
        %v570 = vpack.c.b16 %v514, %v510
        %v571 = vpack.c.b16 %v515, %v511
        %v572 = vpack.c.b16 %v520, %v516
        %v573 = vpack.c.b16 %v521, %v517
        %v574 = vpack.c.b16 %v522, %v518
        %v575 = vpack.c.b16 %v523, %v519
        %v576 = vpack.c.b16 %v528, %v524
        %v577 = vpack.c.b16 %v529, %v525
        %v578 = vpack.c.b16 %v530, %v526
        %v579 = vpack.c.b16 %v531, %v527
        %v580 = vpack.c.b16 %v536, %v532
        %v581 = vpack.c.b16 %v537, %v533
        %v582 = vpack.c.b16 %v538, %v534
        %v583 = vpack.c.b16 %v539, %v535
        %v584 = vpack.c.b16 %v544, %v540
        %v585 = vpack.c.b16 %v545, %v541
        %v586 = vpack.c.b16 %v546, %v542
        %v587 = vpack.c.b16 %v547, %v543
        %v588 = vpack.c.b16 %v552, %v548
        %v589 = vpack.c.b16 %v553, %v549
        %v590 = vpack.c.b16 %v554, %v550
        %v591 = vpack.c.b16 %v555, %v551
        %v592 = vpack.c.b16 %v560, %v556
        %v593 = vpack.c.b16 %v561, %v557
        %v594 = vpack.c.b16 %v562, %v558
        %v595 = vpack.c.b16 %v563, %v559
        %v692 = vunpack.c.l.b16 %v404
        %v693 = vunpack.c.l.b16 %v405
        %v694 = vunpack.c.l.b16 %v406
        %v695 = vunpack.c.l.b16 %v407
        %v696 = vunpack.c.l.b16 %v408
        %v697 = vunpack.c.l.b16 %v409
        %v698 = vunpack.c.l.b16 %v410
        %v699 = vunpack.c.l.b16 %v411
        %v700 = vunpack.c.l.b16 %v412
        %v701 = vunpack.c.l.b16 %v413
        %v702 = vunpack.c.l.b16 %v414
        %v703 = vunpack.c.l.b16 %v415
        %v704 = vunpack.c.l.b16 %v416
        %v705 = vunpack.c.l.b16 %v417
        %v706 = vunpack.c.l.b16 %v418
        %v707 = vunpack.c.l.b16 %v419
        %v708 = vunpack.c.l.b16 %v420
        %v709 = vunpack.c.l.b16 %v421
        %v710 = vunpack.c.l.b16 %v422
        %v711 = vunpack.c.l.b16 %v423
        %v712 = vunpack.c.l.b16 %v424
        %v713 = vunpack.c.l.b16 %v425
        %v714 = vunpack.c.l.b16 %v426
        %v715 = vunpack.c.l.b16 %v427
        %v716 = vunpack.c.l.b16 %v428
        %v717 = vunpack.c.l.b16 %v429
        %v718 = vunpack.c.l.b16 %v430
        %v719 = vunpack.c.l.b16 %v431
        %v720 = vunpack.c.l.b16 %v432
        %v721 = vunpack.c.l.b16 %v433
        %v722 = vunpack.c.l.b16 %v434
        %v723 = vunpack.c.l.b16 %v435
        %v724 = vunpack.c.l.b16 %v436
        %v725 = vunpack.c.l.b16 %v437
        %v726 = vunpack.c.l.b16 %v438
        %v727 = vunpack.c.l.b16 %v439
        %v728 = vunpack.c.l.b16 %v440
        %v729 = vunpack.c.l.b16 %v441
        %v730 = vunpack.c.l.b16 %v442
        %v731 = vunpack.c.l.b16 %v443
        %v732 = vunpack.c.l.b16 %v444
        %v733 = vunpack.c.l.b16 %v445
        %v734 = vunpack.c.l.b16 %v446
        %v735 = vunpack.c.l.b16 %v447
        %v736 = vunpack.c.l.b16 %v448
        %v737 = vunpack.c.l.b16 %v449
        %v738 = vunpack.c.l.b16 %v450
        %v739 = vunpack.c.l.b16 %v451
        %v740 = vunpack.c.l.b16 %v452
        %v741 = vunpack.c.l.b16 %v453
        %v742 = vunpack.c.l.b16 %v454
        %v743 = vunpack.c.l.b16 %v455
        %v744 = vunpack.c.l.b16 %v456
        %v745 = vunpack.c.l.b16 %v457
        %v746 = vunpack.c.l.b16 %v458
        %v747 = vunpack.c.l.b16 %v459
        %v748 = vunpack.c.l.b16 %v460
        %v749 = vunpack.c.l.b16 %v461
        %v750 = vunpack.c.l.b16 %v462
        %v751 = vunpack.c.l.b16 %v463
        %v752 = vunpack.c.l.b16 %v464
        %v753 = vunpack.c.l.b16 %v465
        %v754 = vunpack.c.l.b16 %v466
        %v755 = vunpack.c.l.b16 %v467
        %v756 = vpack.c.b16 %v693, %v692
        %v757 = vpack.c.b16 %v695, %v694
        %v758 = vpack.c.b16 %v697, %v696
        %v759 = vpack.c.b16 %v699, %v698
        %v760 = vpack.c.b16 %v701, %v700
        %v761 = vpack.c.b16 %v703, %v702
        %v762 = vpack.c.b16 %v705, %v704
        %v763 = vpack.c.b16 %v707, %v706
        %v764 = vpack.c.b16 %v709, %v708
        %v765 = vpack.c.b16 %v711, %v710
        %v766 = vpack.c.b16 %v713, %v712
        %v767 = vpack.c.b16 %v715, %v714
        %v768 = vpack.c.b16 %v717, %v716
        %v769 = vpack.c.b16 %v719, %v718
        %v770 = vpack.c.b16 %v721, %v720
        %v771 = vpack.c.b16 %v723, %v722
        %v772 = vpack.c.b16 %v725, %v724
        %v773 = vpack.c.b16 %v727, %v726
        %v774 = vpack.c.b16 %v729, %v728
        %v775 = vpack.c.b16 %v731, %v730
        %v776 = vpack.c.b16 %v733, %v732
        %v777 = vpack.c.b16 %v735, %v734
        %v778 = vpack.c.b16 %v737, %v736
        %v779 = vpack.c.b16 %v739, %v738
        %v780 = vpack.c.b16 %v741, %v740
        %v781 = vpack.c.b16 %v743, %v742
        %v782 = vpack.c.b16 %v745, %v744
        %v783 = vpack.c.b16 %v747, %v746
        %v784 = vpack.c.b16 %v749, %v748
        %v785 = vpack.c.b16 %v751, %v750
        %v786 = vpack.c.b16 %v753, %v752
        %v787 = vpack.c.b16 %v755, %v754
        %820 = vmatprep.subr.bf16.mxu0 0
        %821 = vmatpush1.bf16.msra.mxu0 %v756
        %822 = vmatprep.subr.bf16.mxu0 0
        %823 = vmatpush1.bf16.msra.mxu0 %v757
        %824 = vmatprep.subr.bf16.mxu0 0
        %825 = vmatpush1.bf16.msra.mxu0 %v758
        %826 = vmatprep.subr.bf16.mxu0 0
        %827 = vmatpush1.bf16.msra.mxu0 %v759
        %828 = vmatprep.subr.bf16.mxu0 0
        %829 = vmatpush1.bf16.msra.mxu0 %v760
        %830 = vmatprep.subr.bf16.mxu0 0
        %831 = vmatpush1.bf16.msra.mxu0 %v761
        %832 = vmatprep.subr.bf16.mxu0 0
        %833 = vmatpush1.bf16.msra.mxu0 %v762
        %834 = vmatprep.subr.bf16.mxu0 0
        %835 = vmatpush1.bf16.msra.mxu0 %v763
        %836 = vmatprep.subr.bf16.mxu0 0
        %837 = vmatpush1.bf16.msra.mxu0 %v764
        %838 = vmatprep.subr.bf16.mxu0 0
        %839 = vmatpush1.bf16.msra.mxu0 %v765
        %840 = vmatprep.subr.bf16.mxu0 0
        %841 = vmatpush1.bf16.msra.mxu0 %v766
        %842 = vmatprep.subr.bf16.mxu0 0
        %843 = vmatpush1.bf16.msra.mxu0 %v767
        %844 = vmatprep.subr.bf16.mxu0 0
        %845 = vmatpush1.bf16.msra.mxu0 %v768
        %846 = vmatprep.subr.bf16.mxu0 0
        %847 = vmatpush1.bf16.msra.mxu0 %v769
        %848 = vmatprep.subr.bf16.mxu0 0
        %849 = vmatpush1.bf16.msra.mxu0 %v770
        %850 = vmatprep.subr.bf16.mxu0 0
        %851 = vmatpush1.bf16.msra.mxu0 %v771
        %852 = vmatprep.mubr.bf16.mxu0 %v565
        %853 = vmatmul.mubr.bf16.gmra.mrb[0].mxu0 %v564
        %v854 = vpop.f32.mrb[0].mxu0
        %v855 = vadd.f32 0.0, %v854
        %v856 = vpop.f32.mrb[0].mxu0
        %v857 = vpop.f32.mrb[0].mxu0
        %v858 = vadd.f32 0.0, %v857
        %v859 = vpop.f32.mrb[0].mxu0
        %860 = vmatprep.mubr.bf16.mxu0 %v569
        %861 = vmatmul.mubr.bf16.gmra.mrb[0].mxu0 %v568
        %v862 = vpop.f32.mrb[0].mxu0
        %v863 = vadd.f32 0.0, %v862
        %v864 = vpop.f32.mrb[0].mxu0
        %v865 = vpop.f32.mrb[0].mxu0
        %v866 = vadd.f32 0.0, %v865
        %v867 = vpop.f32.mrb[0].mxu0
        %868 = vmatprep.mubr.bf16.mxu0 %v573
        %869 = vmatmul.mubr.bf16.gmra.mrb[0].mxu0 %v572
        %v870 = vpop.f32.mrb[0].mxu0
        %v871 = vadd.f32 0.0, %v870
        %v872 = vpop.f32.mrb[0].mxu0
        %v873 = vpop.f32.mrb[0].mxu0
        %v874 = vadd.f32 0.0, %v873
        %v875 = vpop.f32.mrb[0].mxu0
        %876 = vmatprep.mubr.bf16.mxu0 %v577
        %877 = vmatmul.mubr.bf16.gmra.mrb[0].mxu0 %v576
        %v878 = vpop.f32.mrb[0].mxu0
        %v879 = vadd.f32 0.0, %v878
        %v880 = vpop.f32.mrb[0].mxu0
        %v881 = vpop.f32.mrb[0].mxu0
        %v882 = vadd.f32 0.0, %v881
        %v883 = vpop.f32.mrb[0].mxu0
        %884 = vmatprep.mubr.bf16.mxu0 %v581
        %885 = vmatmul.mubr.bf16.gmra.mrb[0].mxu0 %v580
        %v886 = vpop.f32.mrb[0].mxu0
        %v887 = vadd.f32 0.0, %v886
        %v888 = vpop.f32.mrb[0].mxu0
        %v889 = vpop.f32.mrb[0].mxu0
        %v890 = vadd.f32 0.0, %v889
        %v891 = vpop.f32.mrb[0].mxu0
        %892 = vmatprep.mubr.bf16.mxu0 %v585
        %893 = vmatmul.mubr.bf16.gmra.mrb[0].mxu0 %v584
        %v894 = vpop.f32.mrb[0].mxu0
        %v895 = vadd.f32 0.0, %v894
        %v896 = vpop.f32.mrb[0].mxu0
        %v897 = vpop.f32.mrb[0].mxu0
        %v898 = vadd.f32 0.0, %v897
        %v899 = vpop.f32.mrb[0].mxu0
        %900 = vmatprep.mubr.bf16.mxu0 %v589
        %901 = vmatmul.mubr.bf16.gmra.mrb[0].mxu0 %v588
        %v902 = vpop.f32.mrb[0].mxu0
        %v903 = vadd.f32 0.0, %v902
        %v904 = vpop.f32.mrb[0].mxu0
        %v905 = vpop.f32.mrb[0].mxu0
        %v906 = vadd.f32 0.0, %v905
        %v907 = vpop.f32.mrb[0].mxu0
        %908 = vmatprep.mubr.bf16.mxu0 %v593
        %909 = vmatmul.mubr.bf16.gmra.mrb[0].mxu0 %v592
        %v910 = vpop.f32.mrb[0].mxu0
        %v911 = vadd.f32 0.0, %v910
        %v912 = vpop.f32.mrb[0].mxu0
        %v913 = vpop.f32.mrb[0].mxu0
        %v914 = vadd.f32 0.0, %v913
        %v915 = vpop.f32.mrb[0].mxu0
        %916 = vdwg.mxu0
        %917 = vmatprep.subr.bf16.mxu0 0
        %918 = vmatpush1.bf16.msra.mxu0 %v772
        %919 = vmatprep.subr.bf16.mxu0 0
        %920 = vmatpush1.bf16.msra.mxu0 %v773
        %921 = vmatprep.subr.bf16.mxu0 0
        %922 = vmatpush1.bf16.msra.mxu0 %v774
        %923 = vmatprep.subr.bf16.mxu0 0
        %924 = vmatpush1.bf16.msra.mxu0 %v775
        %925 = vmatprep.subr.bf16.mxu0 0
        %926 = vmatpush1.bf16.msra.mxu0 %v776
        %927 = vmatprep.subr.bf16.mxu0 0
        %928 = vmatpush1.bf16.msra.mxu0 %v777
        %929 = vmatprep.subr.bf16.mxu0 0
        %930 = vmatpush1.bf16.msra.mxu0 %v778
        %931 = vmatprep.subr.bf16.mxu0 0
        %932 = vmatpush1.bf16.msra.mxu0 %v779
        %933 = vmatprep.subr.bf16.mxu0 0
        %934 = vmatpush1.bf16.msra.mxu0 %v780
        %935 = vmatprep.subr.bf16.mxu0 0
        %936 = vmatpush1.bf16.msra.mxu0 %v781
        %937 = vmatprep.subr.bf16.mxu0 0
        %938 = vmatpush1.bf16.msra.mxu0 %v782
        %939 = vmatprep.subr.bf16.mxu0 0
        %940 = vmatpush1.bf16.msra.mxu0 %v783
        %941 = vmatprep.subr.bf16.mxu0 0
        %942 = vmatpush1.bf16.msra.mxu0 %v784
        %943 = vmatprep.subr.bf16.mxu0 0
        %944 = vmatpush1.bf16.msra.mxu0 %v785
        %945 = vmatprep.subr.bf16.mxu0 0
        %946 = vmatpush1.bf16.msra.mxu0 %v786
        %947 = vmatprep.subr.bf16.mxu0 0
        %948 = vmatpush1.bf16.msra.mxu0 %v787
        %949 = vmatprep.mubr.bf16.mxu0 %v567
        %950 = vmatmul.mubr.bf16.gmra.mrb[0].mxu0 %v566
        %v951 = vpop.f32.mrb[0].mxu0
        %v952 = vadd.f32 %v855, %v951
        %v953 = vpop.f32.mrb[0].mxu0
        %v954 = vpop.f32.mrb[0].mxu0
        %v955 = vadd.f32 %v858, %v954
        %v956 = vpop.f32.mrb[0].mxu0
        %957 = vmatprep.mubr.bf16.mxu0 %v571
        %958 = vmatmul.mubr.bf16.gmra.mrb[0].mxu0 %v570
        %v959 = vpop.f32.mrb[0].mxu0
        %v960 = vadd.f32 %v863, %v959
        %v961 = vpop.f32.mrb[0].mxu0
        %v962 = vpop.f32.mrb[0].mxu0
        %v963 = vadd.f32 %v866, %v962
        %v964 = vpop.f32.mrb[0].mxu0
        %965 = vmatprep.mubr.bf16.mxu0 %v575
        %966 = vmatmul.mubr.bf16.gmra.mrb[0].mxu0 %v574
        %v967 = vpop.f32.mrb[0].mxu0
        %v968 = vadd.f32 %v871, %v967
        %v969 = vpop.f32.mrb[0].mxu0
        %v970 = vpop.f32.mrb[0].mxu0
        %v971 = vadd.f32 %v874, %v970
        %v972 = vpop.f32.mrb[0].mxu0
        %973 = vmatprep.mubr.bf16.mxu0 %v579
        %974 = vmatmul.mubr.bf16.gmra.mrb[0].mxu0 %v578
        %v975 = vpop.f32.mrb[0].mxu0
        %v976 = vadd.f32 %v879, %v975
        %v977 = vpop.f32.mrb[0].mxu0
        %v978 = vpop.f32.mrb[0].mxu0
        %v979 = vadd.f32 %v882, %v978
        %v980 = vpop.f32.mrb[0].mxu0
        %981 = vmatprep.mubr.bf16.mxu0 %v583
        %982 = vmatmul.mubr.bf16.gmra.mrb[0].mxu0 %v582
        %v983 = vpop.f32.mrb[0].mxu0
        %v984 = vadd.f32 %v887, %v983
        %v985 = vpop.f32.mrb[0].mxu0
        %v986 = vpop.f32.mrb[0].mxu0
        %v987 = vadd.f32 %v890, %v986
        %v988 = vpop.f32.mrb[0].mxu0
        %989 = vmatprep.mubr.bf16.mxu0 %v587
        %990 = vmatmul.mubr.bf16.gmra.mrb[0].mxu0 %v586
        %v991 = vpop.f32.mrb[0].mxu0
        %v992 = vadd.f32 %v895, %v991
        %v993 = vpop.f32.mrb[0].mxu0
        %v994 = vpop.f32.mrb[0].mxu0
        %v995 = vadd.f32 %v898, %v994
        %v996 = vpop.f32.mrb[0].mxu0
        %997 = vmatprep.mubr.bf16.mxu0 %v591
        %998 = vmatmul.mubr.bf16.gmra.mrb[0].mxu0 %v590
        %v999 = vpop.f32.mrb[0].mxu0
        %v1000 = vadd.f32 %v903, %v999
        %v1001 = vpop.f32.mrb[0].mxu0
        %v1002 = vpop.f32.mrb[0].mxu0
        %v1003 = vadd.f32 %v906, %v1002
        %v1004 = vpop.f32.mrb[0].mxu0
        %1005 = vmatprep.mubr.bf16.mxu0 %v595
        %1006 = vmatmul.mubr.bf16.gmra.mrb[0].mxu0 %v594
        %v1007 = vpop.f32.mrb[0].mxu0
        %v1008 = vadd.f32 %v911, %v1007
        %v1009 = vpop.f32.mrb[0].mxu0
        %v1010 = vpop.f32.mrb[0].mxu0
        %v1011 = vadd.f32 %v914, %v1010
        %v1012 = vpop.f32.mrb[0].mxu0
        %1013 = vdwg.mxu0
        %v1014 = vadd.f32 %v356, %v952
        %v1015 = vadd.f32 %v357, %v955
        %v1016 = vadd.f32 %v358, %v960
        %v1017 = vadd.f32 %v359, %v963
        %v1018 = vadd.f32 %v360, %v968
        %v1019 = vadd.f32 %v361, %v971
        %v1020 = vadd.f32 %v362, %v976
        %v1021 = vadd.f32 %v363, %v979
        %v1022 = vadd.f32 %v364, %v984
        %v1023 = vadd.f32 %v365, %v987
        %v1024 = vadd.f32 %v366, %v992
        %v1025 = vadd.f32 %v367, %v995
        %v1026 = vadd.f32 %v368, %v1000
        %v1027 = vadd.f32 %v369, %v1003
        %v1028 = vadd.f32 %v370, %v1008
        %v1029 = vadd.f32 %v371, %v1011
        %1030 = vst [vmem:[#allocation2] sm:$0xff] %v1014
        %1031 = vst [vmem:[#allocation2 + $0x8] sm:$0xff] %v1015
        %1032 = vst [vmem:[#allocation2 + $0x10] sm:$0xff] %v1016
        %1033 = vst [vmem:[#allocation2 + $0x18] sm:$0xff] %v1017
        %1034 = vst [vmem:[#allocation2 + $0x20] sm:$0xff] %v1018
        %1035 = vst [vmem:[#allocation2 + $0x28] sm:$0xff] %v1019
        %1036 = vst [vmem:[#allocation2 + $0x30] sm:$0xff] %v1020
        %1037 = vst [vmem:[#allocation2 + $0x38] sm:$0xff] %v1021
        %1038 = vst [vmem:[#allocation2 + $0x40] sm:$0xff] %v1022
        %1039 = vst [vmem:[#allocation2 + $0x48] sm:$0xff] %v1023
        %1040 = vst [vmem:[#allocation2 + $0x50] sm:$0xff] %v1024
        %1041 = vst [vmem:[#allocation2 + $0x58] sm:$0xff] %v1025
        %1042 = vst [vmem:[#allocation2 + $0x60] sm:$0xff] %v1026
        %1043 = vst [vmem:[#allocation2 + $0x68] sm:$0xff] %v1027
        %1044 = vst [vmem:[#allocation2 + $0x70] sm:$0xff] %v1028
        %1045 = vst [vmem:[#allocation2 + $0x78] sm:$0xff] %v1029
        %p1046 = scmp.eq.s32.totalorder %s21, 1
        // Predicated region
        $region60: #{discriminator_forward.8} parent=50 // pred_check
          %p1047 = pneg %p1046
        $region61: #{discriminator_forward.8} parent=50 // pred_check_branch
          %1049 = sbr.rel (%p1047) target = $region63
        $region62: #{discriminator_forward.8} parent=50 // pred_region
          %v1050 = vld [vmem:[#allocation2] sm:$0xff]
          %v1051 = vld [vmem:[#allocation2 + $0x8] sm:$0xff]
          %v1052 = vld [vmem:[#allocation2 + $0x10] sm:$0xff]
          %v1053 = vld [vmem:[#allocation2 + $0x18] sm:$0xff]
          %v1054 = vld [vmem:[#allocation2 + $0x20] sm:$0xff]
          %v1055 = vld [vmem:[#allocation2 + $0x28] sm:$0xff]
          %v1056 = vld [vmem:[#allocation2 + $0x30] sm:$0xff]
          %v1057 = vld [vmem:[#allocation2 + $0x38] sm:$0xff]
          %v1058 = vld [vmem:[#allocation2 + $0x40] sm:$0xff]
          %v1059 = vld [vmem:[#allocation2 + $0x48] sm:$0xff]
          %v1060 = vld [vmem:[#allocation2 + $0x50] sm:$0xff]
          %v1061 = vld [vmem:[#allocation2 + $0x58] sm:$0xff]
          %v1062 = vld [vmem:[#allocation2 + $0x60] sm:$0xff]
          %v1063 = vld [vmem:[#allocation2 + $0x68] sm:$0xff]
          %v1064 = vld [vmem:[#allocation2 + $0x70] sm:$0xff]
          %v1065 = vld [vmem:[#allocation2 + $0x78] sm:$0xff]
          %v1066 = vld [vmem:[%s325] sm:$0x1]
          %v1068 = vlaneseq
          %v1069 = vshrl.u32 %v1068, 7
          %v1070 = vsub.s32 0, %v1069
          %v1071 = vrot.slane %v1066, %v1070
          %v1073 = vadd.f32 %v1050, %v1071
          %v1074 = vadd.f32 %v1051, %v1071
          %v1075 = vadd.f32 %v1052, %v1071
          %v1076 = vadd.f32 %v1053, %v1071
          %v1077 = vadd.f32 %v1054, %v1071
          %v1078 = vadd.f32 %v1055, %v1071
          %v1079 = vadd.f32 %v1056, %v1071
          %v1080 = vadd.f32 %v1057, %v1071
          %v1081 = vadd.f32 %v1058, %v1071
          %v1082 = vadd.f32 %v1059, %v1071
          %v1083 = vadd.f32 %v1060, %v1071
          %v1084 = vadd.f32 %v1061, %v1071
          %v1085 = vadd.f32 %v1062, %v1071
          %v1086 = vadd.f32 %v1063, %v1071
          %v1087 = vadd.f32 %v1064, %v1071
          %v1088 = vadd.f32 %v1065, %v1071
          %v1089 = vmul.f32 %v1073, 0.2
          %v1090 = vmul.f32 %v1074, 0.2
          %v1091 = vmul.f32 %v1075, 0.2
          %v1092 = vmul.f32 %v1076, 0.2
          %v1093 = vmul.f32 %v1077, 0.2
          %v1094 = vmul.f32 %v1078, 0.2
          %v1095 = vmul.f32 %v1079, 0.2
          %v1096 = vmul.f32 %v1080, 0.2
          %v1097 = vmul.f32 %v1081, 0.2
          %v1098 = vmul.f32 %v1082, 0.2
          %v1099 = vmul.f32 %v1083, 0.2
          %v1100 = vmul.f32 %v1084, 0.2
          %v1101 = vmul.f32 %v1085, 0.2
          %v1102 = vmul.f32 %v1086, 0.2
          %v1103 = vmul.f32 %v1087, 0.2
          %v1104 = vmul.f32 %v1088, 0.2
          %v1105 = vmax.f32 %v1073, %v1089
          %v1106 = vmax.f32 %v1074, %v1090
          %v1107 = vmax.f32 %v1075, %v1091
          %v1108 = vmax.f32 %v1076, %v1092
          %v1109 = vmax.f32 %v1077, %v1093
          %v1110 = vmax.f32 %v1078, %v1094
          %v1111 = vmax.f32 %v1079, %v1095
          %v1112 = vmax.f32 %v1080, %v1096
          %v1113 = vmax.f32 %v1081, %v1097
          %v1114 = vmax.f32 %v1082, %v1098
          %v1115 = vmax.f32 %v1083, %v1099
          %v1116 = vmax.f32 %v1084, %v1100
          %v1117 = vmax.f32 %v1085, %v1101
          %v1118 = vmax.f32 %v1086, %v1102
          %v1119 = vmax.f32 %v1087, %v1103
          %v1120 = vmax.f32 %v1088, %v1104
          %v1121 = vmul.f32 %v1105, 1.4142135
          %v1122 = vmul.f32 %v1106, 1.4142135
          %v1123 = vmul.f32 %v1107, 1.4142135
          %v1124 = vmul.f32 %v1108, 1.4142135
          %v1125 = vmul.f32 %v1109, 1.4142135
          %v1126 = vmul.f32 %v1110, 1.4142135
          %v1127 = vmul.f32 %v1111, 1.4142135
          %v1128 = vmul.f32 %v1112, 1.4142135
          %v1129 = vmul.f32 %v1113, 1.4142135
          %v1130 = vmul.f32 %v1114, 1.4142135
          %v1131 = vmul.f32 %v1115, 1.4142135
          %v1132 = vmul.f32 %v1116, 1.4142135
          %v1133 = vmul.f32 %v1117, 1.4142135
          %v1134 = vmul.f32 %v1118, 1.4142135
          %v1135 = vmul.f32 %v1119, 1.4142135
          %v1136 = vmul.f32 %v1120, 1.4142135
          %1137 = vst [vmem:[%s333] sm:$0xff] %v1121
          %1138 = vst [vmem:[%s333 + $0x8] sm:$0xff] %v1122
          %1139 = vst [vmem:[%s333 + $0x10] sm:$0xff] %v1123
          %1140 = vst [vmem:[%s333 + $0x18] sm:$0xff] %v1124
          %1141 = vst [vmem:[%s333 + $0x20] sm:$0xff] %v1125
          %1142 = vst [vmem:[%s333 + $0x28] sm:$0xff] %v1126
          %1143 = vst [vmem:[%s333 + $0x30] sm:$0xff] %v1127
          %1144 = vst [vmem:[%s333 + $0x38] sm:$0xff] %v1128
          %1145 = vst [vmem:[%s333 + $0x40] sm:$0xff] %v1129
          %1146 = vst [vmem:[%s333 + $0x48] sm:$0xff] %v1130
          %1147 = vst [vmem:[%s333 + $0x50] sm:$0xff] %v1131
          %1148 = vst [vmem:[%s333 + $0x58] sm:$0xff] %v1132
          %1149 = vst [vmem:[%s333 + $0x60] sm:$0xff] %v1133
          %1150 = vst [vmem:[%s333 + $0x68] sm:$0xff] %v1134
          %1151 = vst [vmem:[%s333 + $0x70] sm:$0xff] %v1135
          %1152 = vst [vmem:[%s333 + $0x78] sm:$0xff] %v1136
        $region63: #{discriminator_forward.8} parent=50 // pred_fallthru
          _
        %s1153 = smul.u32 16, %s19
        %p1154 = scmp.lt.s32.totalorder %s1153, 15
        %s1155 = scalar_select %p1154, %s1153, 15
        %p1156 = scmp.lt.s32.totalorder %s20, 0
        %s1157 = scalar_select %p1156, %s20, 0
        %s1158 = sadd.s32 %s1157, %s1155
        %s1159 = smul.addr %s1158, 8
        %s1160 = scalar_lea.vmem %s3, %s1159
        // Predicated region
        $region64: #{discriminator_forward.8} parent=50 // pred_check
          %p1161 = pneg %p135
        $region65: #{discriminator_forward.8} parent=50 // pred_check_branch
          %1163 = sbr.rel (%p1161) target = $region67
        $region66: #{discriminator_forward.8} parent=50 // pred_region
          %s1164 = smul.u32 16, %s19
        $region67: #{discriminator_forward.8} parent=50 // pred_fallthru
          _
        // Predicated region
        $region68: #{discriminator_forward.8} parent=50 // pred_check
          %p1165 = pneg %p135
        $region69: #{discriminator_forward.8} parent=50 // pred_check_branch
          %1167 = sbr.rel (%p1165) target = $region71
        $region70: #{discriminator_forward.8} parent=50 // pred_region
          %s1168 = smul.u32 16, %s19
          %p1169 = scmp.lt.s32.totalorder %s1168, 15
          %s1170 = scalar_select %p1169, %s1168, 15
          %p1171 = scmp.lt.s32.totalorder %s20, 0
          %s1172 = scalar_select %p1171, %s20, 0
          %s1173 = sadd.s32 %s1172, %s1170
          %s1174 = smul.addr %s1173, 8
          %s1175 = scalar_lea.vmem %s3, %s1174
        $region71: #{discriminator_forward.8} parent=50 // pred_fallthru
          _
      $region51: #{discriminator_forward.8} parent=5 // pred_fallthru
        _
      %p1176 = scmp.le.s32.totalorder 2, %s9
      // Predicated region
      $region72: #{discriminator_forward.8} parent=5 // pred_check
        %p1177 = pneg %p1176
      $region73: #{discriminator_forward.8} parent=5 // pred_check_branch
        %1179 = sbr.rel (%p1177) target = $region75
      $region74: #{discriminator_forward.8} parent=5 // pred_region
        %s1180 = ssub.s32 %s9, 2
      $region75: #{discriminator_forward.8} parent=5 // pred_fallthru
        _
    $region6: #{discriminator_forward.8} parent=1 // loop_footer
      %s13 = sadd.s32 1, %s9
    $region7: #{discriminator_forward.8} parent=1 // loop_footer_branch
      %8 = sbr.rel target = $region3
    $region8: #{discriminator_forward.8} parent=1 // loop_exit
      _

// kernel: discriminator_forward.9
$region0: #{discriminator_forward.9}
  #allocation0 [shape = 'u32[]', space=smem, size = 0x4, offset = 0x4, fixed_abs, tag = 'smem constant byte address 0x4 - core index']
  #allocation1 [shape = 'u32[144,128]{1,0:T(1,128)}', space=vmem, size = 0x12000, scoped, tag = 'internal scratch']
  #allocation2 [shape = 'f32[32,256]{1,0:T(8,128)}', space=vmem, size = 0x8000, scoped, tag = 'scratch operand']
  %s0 = inlined_call_operand.vmem [shape: bf16[32,2048], index: 0, kind: input, shape index: {}]
  %s1 = inlined_call_operand.vmem [shape: bf16[2048,256], index: 1, kind: input, shape index: {}]
  %s2 = inlined_call_operand.vmem [shape: f32[1,256], index: 2, kind: input, shape index: {}]
  %s3 = inlined_call_operand.vmem [shape: f32[32,256], index: 3, kind: output, shape index: {}]
  %s4 = sld [smem:[#allocation0]]
  $region76: #{discriminator_forward.9} parent=0
    _
  %s6 = ssub.s32 1, %s4
  %s7 = scalar_select 0, %s6, %s4
  $region1: #{discriminator_forward.9} parent=0
    #allocation3 [shape = 'u8[65536]{0}', space=vmem, size = 0x10000, scoped, tag = 'input window, operand 0']
    loop: start=0, step=1, limit=6
    $region2: #{discriminator_forward.9} parent=1 // loop_pre_header
      _
    $region3: #{discriminator_forward.9} parent=1 // loop_header
      %s9 = sphi 0, %s13
      %p10 = scmp.ge.s32.totalorder %s9, 6
      %s16 = sphi 0, %s35
      %s17 = sphi 0, %s31
      %s18 = sphi 0, %s27
      %s19 = sphi 0, %s16
      %s20 = sphi 0, %s17
      %s21 = sphi 0, %s18
      %s22 = sphi 0, %s19
      %s23 = sphi 0, %s20
      %s24 = sphi 0, %s21
      %s40 = sphi 0, %s42
      %s43 = sphi 0, %s40
      %s44 = sphi 0, %s43
      %s60 = sphi 0, %s44
      %s68 = sphi 0, %s70
      %s71 = sphi 0, %s68
      %s72 = sphi 0, %s71
      %s88 = sphi 0, %s72
      %s94 = sphi 0, %s96
      %s97 = sphi 0, %s94
      %s98 = sphi 0, %s97
      %s114 = sphi 0, %s98
      %s122 = sphi 0, %s124
      %s125 = sphi 0, %s122
      %s126 = sphi 0, %s125
      %s142 = sphi 0, %s126
    $region4: #{discriminator_forward.9} parent=1 // loop_header_branch
      %12 = sbr.rel (%p10) target = $region8
    $region5: #{discriminator_forward.9} parent=1 // loop_body
      %s14 = ssub.s32 %s9, 1
      %s15 = ssub.s32 %s9, 2
      %s25 = sadd.s32 1, %s18
      %p26 = scmp.ge.s32.totalorder %s25, 4
      %s27 = scalar_select %p26, 0, %s25
      %s28 = sadd.s32 1, %s17
      %s29 = scalar_select %p26, %s28, %s17
      %p30 = scmp.ge.s32.totalorder %s29, 1
      %s31 = scalar_select %p30, 0, %s29
      %s32 = sadd.s32 1, %s16
      %s33 = scalar_select %p30, %s32, %s16
      %p34 = scmp.ge.s32.totalorder %s33, 1
      %s35 = scalar_select %p34, 0, %s33
      %s36 = ssub.s32 %s16, %s35
      %s37 = ssub.s32 %s18, %s27
      %s38 = sor.u32 %s36, %s37
      %p39 = scmp.eq.s32.totalorder %s38, 0
      %s41 = sadd.s32 %s40, 1
      %s42 = scalar_select %p39, %s40, %s41
      %p45 = pneg %p39
      %p46 = scmp.eq.s32.totalorder %s9, 3
      %p47 = por %p45, %p46
      %p48 = scmp.ne.s32.totalorder %s40, %s43
      %p49 = scmp.eq.s32.totalorder %s9, 0
      %p50 = por %p48, %p49
      %p51 = scmp.ne.s32.totalorder %s40, %s43
      %p52 = scmp.eq.s32.totalorder %s14, 3
      %p53 = por %p51, %p52
      %p54 = scmp.ne.s32.totalorder %s43, %s44
      %p55 = scmp.eq.s32.totalorder %s14, 0
      %p56 = por %p54, %p55
      %p57 = scmp.ne.s32.totalorder %s43, %s44
      %p58 = scmp.eq.s32.totalorder %s15, 3
      %p59 = por %p57, %p58
      %p61 = scmp.ne.s32.totalorder %s44, %s60
      %p62 = scmp.eq.s32.totalorder %s15, 0
      %p63 = por %p61, %p62
      %s64 = ssub.s32 %s18, %s27
      %s65 = ssub.s32 %s17, %s31
      %s66 = sor.u32 %s64, %s65
      %p67 = scmp.eq.s32.totalorder %s66, 0
      %s69 = sadd.s32 %s68, 1
      %s70 = scalar_select %p67, %s68, %s69
      %p73 = pneg %p67
      %p74 = scmp.eq.s32.totalorder %s9, 3
      %p75 = por %p73, %p74
      %p76 = scmp.ne.s32.totalorder %s68, %s71
      %p77 = scmp.eq.s32.totalorder %s9, 0
      %p78 = por %p76, %p77
      %p79 = scmp.ne.s32.totalorder %s68, %s71
      %p80 = scmp.eq.s32.totalorder %s14, 3
      %p81 = por %p79, %p80
      %p82 = scmp.ne.s32.totalorder %s71, %s72
      %p83 = scmp.eq.s32.totalorder %s14, 0
      %p84 = por %p82, %p83
      %p85 = scmp.ne.s32.totalorder %s71, %s72
      %p86 = scmp.eq.s32.totalorder %s15, 3
      %p87 = por %p85, %p86
      %p89 = scmp.ne.s32.totalorder %s72, %s88
      %p90 = scmp.eq.s32.totalorder %s15, 0
      %p91 = por %p89, %p90
      %s92 = ssub.s32 %s17, %s31
      %p93 = scmp.eq.s32.totalorder %s92, 0
      %s95 = sadd.s32 %s94, 1
      %s96 = scalar_select %p93, %s94, %s95
      %p99 = pneg %p93
      %p100 = scmp.eq.s32.totalorder %s9, 3
      %p101 = por %p99, %p100
      %p102 = scmp.ne.s32.totalorder %s94, %s97
      %p103 = scmp.eq.s32.totalorder %s9, 0
      %p104 = por %p102, %p103
      %p105 = scmp.ne.s32.totalorder %s94, %s97
      %p106 = scmp.eq.s32.totalorder %s14, 3
      %p107 = por %p105, %p106
      %p108 = scmp.ne.s32.totalorder %s97, %s98
      %p109 = scmp.eq.s32.totalorder %s14, 0
      %p110 = por %p108, %p109
      %p111 = scmp.ne.s32.totalorder %s97, %s98
      %p112 = scmp.eq.s32.totalorder %s15, 3
      %p113 = por %p111, %p112
      %p115 = scmp.ne.s32.totalorder %s98, %s114
      %p116 = scmp.eq.s32.totalorder %s15, 0
      %p117 = por %p115, %p116
      %s118 = ssub.s32 %s16, %s35
      %s119 = ssub.s32 %s17, %s31
      %s120 = sor.u32 %s118, %s119
      %p121 = scmp.eq.s32.totalorder %s120, 0
      %s123 = sadd.s32 %s122, 1
      %s124 = scalar_select %p121, %s122, %s123
      %p127 = pneg %p121
      %p128 = scmp.eq.s32.totalorder %s9, 3
      %p129 = por %p127, %p128
      %p130 = scmp.ne.s32.totalorder %s122, %s125
      %p131 = scmp.eq.s32.totalorder %s9, 0
      %p132 = por %p130, %p131
      %p133 = scmp.ne.s32.totalorder %s122, %s125
      %p134 = scmp.eq.s32.totalorder %s14, 3
      %p135 = por %p133, %p134
      %p136 = scmp.ne.s32.totalorder %s125, %s126
      %p137 = scmp.eq.s32.totalorder %s14, 0
      %p138 = por %p136, %p137
      %p139 = scmp.ne.s32.totalorder %s125, %s126
      %p140 = scmp.eq.s32.totalorder %s15, 3
      %p141 = por %p139, %p140
      %p143 = scmp.ne.s32.totalorder %s126, %s142
      %p144 = scmp.eq.s32.totalorder %s15, 0
      %p145 = por %p143, %p144
      %p146 = scmp.le.s32.totalorder 1, %s9
      %p147 = scmp.lt.s32.totalorder %s9, 5
      %p148 = pnand %p146, %p147
      %p149 = pneg %p148
      // Predicated region
      $region9: #{discriminator_forward.9} parent=5 // pred_check
        _
      $region10: #{discriminator_forward.9} parent=5 // pred_check_branch
        %151 = sbr.rel (%p148) target = $region12
      $region11: #{discriminator_forward.9} parent=5 // pred_region
        %s152 = ssub.s32 %s9, 1
        // Predicated region
        $region13: #{discriminator_forward.9} parent=11 // pred_check
          %p153 = pneg %p110
        $region14: #{discriminator_forward.9} parent=11 // pred_check_branch
          %155 = sbr.rel (%p153) target = $region16
        $region15: #{discriminator_forward.9} parent=11 // pred_region
          %s156 = smul.u32 2, %s20
          %p157 = scmp.lt.s32.totalorder %s156, 1
          %s158 = scalar_select %p157, %s156, 1
          %s159 = scalar_lea.vmem %s2, %s158
          %s160 = smul.u32 2, %s20
        $region16: #{discriminator_forward.9} parent=11 // pred_fallthru
          _
      $region12: #{discriminator_forward.9} parent=5 // pred_fallthru
        _
      %p161 = scmp.lt.s32.totalorder %s9, 4
      // Predicated region
      $region17: #{discriminator_forward.9} parent=5 // pred_check
        %p162 = pneg %p161
      $region18: #{discriminator_forward.9} parent=5 // pred_check_branch
        %164 = sbr.rel (%p162) target = $region20
      $region19: #{discriminator_forward.9} parent=5 // pred_region
        // Predicated region
        $region21: #{discriminator_forward.9} parent=19 // pred_check
          %p165 = pneg %p50
        $region22: #{discriminator_forward.9} parent=19 // pred_check_branch
          %167 = sbr.rel (%p165) target = $region24
        $region23: #{discriminator_forward.9} parent=19 // pred_region
          %s168 = sand.u32 %s40, 1
          %s169 = sand.u32 %s40, 1
          %s170 = smul.addr %s169, 64
          %s171 = scalar_lea.vmem [#allocation3], %s170
          %s172 = smul.u32 4, %s16
          %s173 = smul.u32 4, %s18
          %s174 = smul.addr %s172, 16
          %s175 = sadd.s32 %s173, %s174
          %s176 = smul.addr %s175, 4
          %s177 = scalar_lea.vmem %s0, %s176
          // Predicated region
          $region25: #{discriminator_forward.9} parent=23 // pred_check
            _
          $region26: #{discriminator_forward.9} parent=23 // pred_check_branch
            %179 = sbr.rel (0) target = $region28
          $region27: #{discriminator_forward.9} parent=23 // pred_region
            // Predicated region
            $region29: #{discriminator_forward.9} parent=27 // pred_check
              _
            $region30: #{discriminator_forward.9} parent=27 // pred_check_branch
              %181 = sbr.rel (0) target = $region32
            $region31: #{discriminator_forward.9} parent=27 // pred_region
              loop: start=0, step=1, limit=1
              $region33: #{discriminator_forward.9} parent=31 // loop_pre_header
                _
              $region34: #{discriminator_forward.9} parent=31 // loop_header
                %s183 = sphi 0, %s187
                %p184 = scmp.ge.s32.totalorder %s183, 1
                %s188 = sphi %s177, %s177
                %s189 = sphi %s171, %s171
              $region35: #{discriminator_forward.9} parent=31 // loop_header_branch
                %186 = sbr.rel (%p184) target = $region39
              $region36: #{discriminator_forward.9} parent=31 // loop_body
                %v190 = vld [vmem:[%s188] sm:$0xff]
                %191 = vst [vmem:[%s189] sm:$0xff] %v190
                %v192 = vld [vmem:[%s188 + $0x8] sm:$0xff]
                %193 = vst [vmem:[%s189 + $0x8] sm:$0xff] %v192
                %v194 = vld [vmem:[%s188 + $0x40] sm:$0xff]
                %195 = vst [vmem:[%s189 + $0x10] sm:$0xff] %v194
                %v196 = vld [vmem:[%s188 + $0x48] sm:$0xff]
                %197 = vst [vmem:[%s189 + $0x18] sm:$0xff] %v196
                %v198 = vld [vmem:[%s188 + $0x80] sm:$0xff]
                %199 = vst [vmem:[%s189 + $0x20] sm:$0xff] %v198
                %v200 = vld [vmem:[%s188 + $0x88] sm:$0xff]
                %201 = vst [vmem:[%s189 + $0x28] sm:$0xff] %v200
                %v202 = vld [vmem:[%s188 + $0xc0] sm:$0xff]
                %203 = vst [vmem:[%s189 + $0x30] sm:$0xff] %v202
                %v204 = vld [vmem:[%s188 + $0xc8] sm:$0xff]
                %205 = vst [vmem:[%s189 + $0x38] sm:$0xff] %v204
              $region37: #{discriminator_forward.9} parent=31 // loop_footer
                %s187 = sadd.s32 1, %s183
              $region38: #{discriminator_forward.9} parent=31 // loop_footer_branch
                %182 = sbr.rel target = $region34
              $region39: #{discriminator_forward.9} parent=31 // loop_exit
                _
            $region32: #{discriminator_forward.9} parent=27 // pred_fallthru
              _
            // Predicated region
            $region40: #{discriminator_forward.9} parent=27 // pred_check
              _
            $region41: #{discriminator_forward.9} parent=27 // pred_check_branch
              %207 = sbr.rel target = $region43
            $region42: #{discriminator_forward.9} parent=27 // pred_region
              _
            $region43: #{discriminator_forward.9} parent=27 // pred_fallthru
              _
          $region28: #{discriminator_forward.9} parent=23 // pred_fallthru
            _
          %208 = vnop
        $region24: #{discriminator_forward.9} parent=19 // pred_fallthru
          _
        // Predicated region
        $region44: #{discriminator_forward.9} parent=19 // pred_check
          %p209 = pneg %p78
        $region45: #{discriminator_forward.9} parent=19 // pred_check_branch
          %211 = sbr.rel (%p209) target = $region47
        $region46: #{discriminator_forward.9} parent=19 // pred_region
          %s212 = smul.u32 64, %s18
          %s213 = smul.u32 2, %s17
          %p214 = scmp.lt.s32.totalorder %s212, 255
          %s215 = scalar_select %p214, %s212, 255
          %p216 = scmp.lt.s32.totalorder %s213, 1
          %s217 = scalar_select %p216, %s213, 1
          %s218 = smul.addr %s215, 2
          %s219 = sadd.s32 %s217, %s218
          %s220 = smul.addr %s219, 4
          %s221 = scalar_lea.vmem %s1, %s220
          %s222 = smul.u32 64, %s18
          %s223 = smul.u32 2, %s17
        $region47: #{discriminator_forward.9} parent=19 // pred_fallthru
          _
      $region20: #{discriminator_forward.9} parent=5 // pred_fallthru
        _
      %p224 = scmp.le.s32.totalorder 1, %s9
      %p225 = scmp.lt.s32.totalorder %s9, 5
      %p226 = pnand %p224, %p225
      %p227 = pneg %p226
      // Predicated region
      $region48: #{discriminator_forward.9} parent=5 // pred_check
        _
      $region49: #{discriminator_forward.9} parent=5 // pred_check_branch
        %229 = sbr.rel (%p226) target = $region51
      $region50: #{discriminator_forward.9} parent=5 // pred_region
        %s230 = ssub.s32 %s9, 1
        %s231 = sand.u32 %s43, 1
        %s232 = sand.u32 %s43, 1
        %s233 = smul.addr %s232, 64
        %s234 = scalar_lea.vmem [#allocation3], %s233
        // Predicated region
        $region52: #{discriminator_forward.9} parent=50 // pred_check
          %p235 = pneg %p56
        $region53: #{discriminator_forward.9} parent=50 // pred_check_branch
          %237 = sbr.rel (%p235) target = $region55
        $region54: #{discriminator_forward.9} parent=50 // pred_region
          _
        $region55: #{discriminator_forward.9} parent=50 // pred_fallthru
          _
        %s238 = sand.u32 %s43, 1
        %s239 = sand.u32 %s43, 1
        %s240 = smul.addr %s239, 64
        %s241 = scalar_lea.vmem [#allocation3], %s240
        %p242 = pneg %p56
        %p243 = pneg %p53
        %s244 = smul.u32 64, %s21
        %s245 = smul.u32 2, %s20
        %p246 = scmp.lt.s32.totalorder %s244, 255
        %s247 = scalar_select %p246, %s244, 255
        %p248 = scmp.lt.s32.totalorder %s245, 1
        %s249 = scalar_select %p248, %s245, 1
        %s250 = smul.addr %s247, 2
        %s251 = sadd.s32 %s249, %s250
        %s252 = smul.addr %s251, 4
        %s253 = scalar_lea.vmem %s1, %s252
        %p254 = pneg %p84
        %p255 = pneg %p81
        %s256 = smul.u32 2, %s20
        %p257 = scmp.lt.s32.totalorder %s256, 1
        %s258 = scalar_select %p257, %s256, 1
        %s259 = scalar_lea.vmem %s2, %s258
        %p260 = pneg %p110
        %p261 = pneg %p107
        %p262 = pneg %p138
        %p263 = pneg %p135
        %s264 = smul.u32 4, %s19
        %s265 = smul.u32 2, %s20
        %p266 = scmp.lt.s32.totalorder %s264, 3
        %s267 = scalar_select %p266, %s264, 3
        %p268 = scmp.lt.s32.totalorder %s265, 1
        %s269 = scalar_select %p268, %s265, 1
        %s270 = smul.addr %s267, 2
        %s271 = sadd.s32 %s269, %s270
        %s272 = smul.addr %s271, 8
        %s273 = scalar_lea.vmem %s3, %s272
        %s274 = smul.u32 4, %s19
        %s275 = smul.u32 4, %s21
        %s276 = smul.u32 64, %s21
        %s277 = smul.u32 2, %s20
        %p278 = scmp.lt.s32.totalorder %s276, 255
        %s279 = scalar_select %p278, %s276, 255
        %p280 = scmp.lt.s32.totalorder %s277, 1
        %s281 = scalar_select %p280, %s277, 1
        %s282 = smul.addr %s279, 2
        %s283 = sadd.s32 %s281, %s282
        %s284 = smul.addr %s283, 4
        %s285 = scalar_lea.vmem %s1, %s284
        %s286 = smul.u32 64, %s21
        %s287 = smul.u32 2, %s20
        %s288 = smul.u32 2, %s20
        %p289 = scmp.lt.s32.totalorder %s288, 1
        %s290 = scalar_select %p289, %s288, 1
        %s291 = scalar_lea.vmem %s2, %s290
        %s292 = smul.u32 2, %s20
        %s293 = smul.u32 4, %s19
        %s294 = smul.u32 2, %s20
        %p295 = scmp.lt.s32.totalorder %s293, 3
        %s296 = scalar_select %p295, %s293, 3
        %p297 = scmp.lt.s32.totalorder %s294, 1
        %s298 = scalar_select %p297, %s294, 1
        %s299 = smul.addr %s296, 2
        %s300 = sadd.s32 %s298, %s299
        %s301 = smul.addr %s300, 8
        %s302 = scalar_lea.vmem %s3, %s301
        %s303 = smul.u32 4, %s19
        %s304 = smul.u32 2, %s20
        %p305 = scmp.eq.s32.totalorder %s21, 0
        // Predicated region
        $region56: #{discriminator_forward.9} parent=50 // pred_check
          %p306 = pneg %p305
        $region57: #{discriminator_forward.9} parent=50 // pred_check_branch
          %308 = sbr.rel (%p306) target = $region59
        $region58: #{discriminator_forward.9} parent=50 // pred_region
          %309 = vst [vmem:[#allocation2] sm:$0xff] 0.0
          %310 = vst [vmem:[#allocation2 + $0x8] sm:$0xff] 0.0
          %311 = vst [vmem:[#allocation2 + $0x10] sm:$0xff] 0.0
          %312 = vst [vmem:[#allocation2 + $0x18] sm:$0xff] 0.0
          %313 = vst [vmem:[#allocation2 + $0x20] sm:$0xff] 0.0
          %314 = vst [vmem:[#allocation2 + $0x28] sm:$0xff] 0.0
          %315 = vst [vmem:[#allocation2 + $0x30] sm:$0xff] 0.0
          %316 = vst [vmem:[#allocation2 + $0x38] sm:$0xff] 0.0
        $region59: #{discriminator_forward.9} parent=50 // pred_fallthru
          _
        %v317 = vld [vmem:[#allocation2] sm:$0xff]
        %v318 = vld [vmem:[#allocation2 + $0x8] sm:$0xff]
        %v319 = vld [vmem:[#allocation2 + $0x10] sm:$0xff]
        %v320 = vld [vmem:[#allocation2 + $0x18] sm:$0xff]
        %v321 = vld [vmem:[#allocation2 + $0x20] sm:$0xff]
        %v322 = vld [vmem:[#allocation2 + $0x28] sm:$0xff]
        %v323 = vld [vmem:[#allocation2 + $0x30] sm:$0xff]
        %v324 = vld [vmem:[#allocation2 + $0x38] sm:$0xff]
        %v325 = vld [vmem:[%s234] sm:$0xff]
        %v326 = vld [vmem:[%s234 + $0x8] sm:$0xff]
        %v327 = vld [vmem:[%s234 + $0x10] sm:$0xff]
        %v328 = vld [vmem:[%s234 + $0x18] sm:$0xff]
        %v329 = vld [vmem:[%s234 + $0x20] sm:$0xff]
        %v330 = vld [vmem:[%s234 + $0x28] sm:$0xff]
        %v331 = vld [vmem:[%s234 + $0x30] sm:$0xff]
        %v332 = vld [vmem:[%s234 + $0x38] sm:$0xff]
        %v333 = vld [vmem:[%s285] sm:$0xff]
        %v334 = vld [vmem:[%s285 + $0x8] sm:$0xff]
        %v335 = vld [vmem:[%s285 + $0x10] sm:$0xff]
        %v336 = vld [vmem:[%s285 + $0x18] sm:$0xff]
        %v337 = vld [vmem:[%s285 + $0x20] sm:$0xff]
        %v338 = vld [vmem:[%s285 + $0x28] sm:$0xff]
        %v339 = vld [vmem:[%s285 + $0x30] sm:$0xff]
        %v340 = vld [vmem:[%s285 + $0x38] sm:$0xff]
        %v341 = vld [vmem:[%s285 + $0x40] sm:$0xff]
        %v342 = vld [vmem:[%s285 + $0x48] sm:$0xff]
        %v343 = vld [vmem:[%s285 + $0x50] sm:$0xff]
        %v344 = vld [vmem:[%s285 + $0x58] sm:$0xff]
        %v345 = vld [vmem:[%s285 + $0x60] sm:$0xff]
        %v346 = vld [vmem:[%s285 + $0x68] sm:$0xff]
        %v347 = vld [vmem:[%s285 + $0x70] sm:$0xff]
        %v348 = vld [vmem:[%s285 + $0x78] sm:$0xff]
        %v349 = vld [vmem:[%s285 + $0x80] sm:$0xff]
        %v350 = vld [vmem:[%s285 + $0x88] sm:$0xff]
        %v351 = vld [vmem:[%s285 + $0x90] sm:$0xff]
        %v352 = vld [vmem:[%s285 + $0x98] sm:$0xff]
        %v353 = vld [vmem:[%s285 + $0xa0] sm:$0xff]
        %v354 = vld [vmem:[%s285 + $0xa8] sm:$0xff]
        %v355 = vld [vmem:[%s285 + $0xb0] sm:$0xff]
        %v356 = vld [vmem:[%s285 + $0xb8] sm:$0xff]
        %v357 = vld [vmem:[%s285 + $0xc0] sm:$0xff]
        %v358 = vld [vmem:[%s285 + $0xc8] sm:$0xff]
        %v359 = vld [vmem:[%s285 + $0xd0] sm:$0xff]
        %v360 = vld [vmem:[%s285 + $0xd8] sm:$0xff]
        %v361 = vld [vmem:[%s285 + $0xe0] sm:$0xff]
        %v362 = vld [vmem:[%s285 + $0xe8] sm:$0xff]
        %v363 = vld [vmem:[%s285 + $0xf0] sm:$0xff]
        %v364 = vld [vmem:[%s285 + $0xf8] sm:$0xff]
        %v365 = vld [vmem:[%s285 + $0x100] sm:$0xff]
        %v366 = vld [vmem:[%s285 + $0x108] sm:$0xff]
        %v367 = vld [vmem:[%s285 + $0x110] sm:$0xff]
        %v368 = vld [vmem:[%s285 + $0x118] sm:$0xff]
        %v369 = vld [vmem:[%s285 + $0x120] sm:$0xff]
        %v370 = vld [vmem:[%s285 + $0x128] sm:$0xff]
        %v371 = vld [vmem:[%s285 + $0x130] sm:$0xff]
        %v372 = vld [vmem:[%s285 + $0x138] sm:$0xff]
        %v373 = vld [vmem:[%s285 + $0x140] sm:$0xff]
        %v374 = vld [vmem:[%s285 + $0x148] sm:$0xff]
        %v375 = vld [vmem:[%s285 + $0x150] sm:$0xff]
        %v376 = vld [vmem:[%s285 + $0x158] sm:$0xff]
        %v377 = vld [vmem:[%s285 + $0x160] sm:$0xff]
        %v378 = vld [vmem:[%s285 + $0x168] sm:$0xff]
        %v379 = vld [vmem:[%s285 + $0x170] sm:$0xff]
        %v380 = vld [vmem:[%s285 + $0x178] sm:$0xff]
        %v381 = vld [vmem:[%s285 + $0x180] sm:$0xff]
        %v382 = vld [vmem:[%s285 + $0x188] sm:$0xff]
        %v383 = vld [vmem:[%s285 + $0x190] sm:$0xff]
        %v384 = vld [vmem:[%s285 + $0x198] sm:$0xff]
        %v385 = vld [vmem:[%s285 + $0x1a0] sm:$0xff]
        %v386 = vld [vmem:[%s285 + $0x1a8] sm:$0xff]
        %v387 = vld [vmem:[%s285 + $0x1b0] sm:$0xff]
        %v388 = vld [vmem:[%s285 + $0x1b8] sm:$0xff]
        %v389 = vld [vmem:[%s285 + $0x1c0] sm:$0xff]
        %v390 = vld [vmem:[%s285 + $0x1c8] sm:$0xff]
        %v391 = vld [vmem:[%s285 + $0x1d0] sm:$0xff]
        %v392 = vld [vmem:[%s285 + $0x1d8] sm:$0xff]
        %v393 = vld [vmem:[%s285 + $0x1e0] sm:$0xff]
        %v394 = vld [vmem:[%s285 + $0x1e8] sm:$0xff]
        %v395 = vld [vmem:[%s285 + $0x1f0] sm:$0xff]
        %v396 = vld [vmem:[%s285 + $0x1f8] sm:$0xff]
        %v405 = vunpack.c.l.b16 %v325
        %v406 = vunpack.c.h.b16 %v325
        %v407 = vunpack.c.l.b16 %v326
        %v408 = vunpack.c.h.b16 %v326
        %v409 = vunpack.c.l.b16 %v327
        %v410 = vunpack.c.h.b16 %v327
        %v411 = vunpack.c.l.b16 %v328
        %v412 = vunpack.c.h.b16 %v328
        %v413 = vunpack.c.l.b16 %v329
        %v414 = vunpack.c.h.b16 %v329
        %v415 = vunpack.c.l.b16 %v330
        %v416 = vunpack.c.h.b16 %v330
        %v417 = vunpack.c.l.b16 %v331
        %v418 = vunpack.c.h.b16 %v331
        %v419 = vunpack.c.l.b16 %v332
        %v420 = vunpack.c.h.b16 %v332
        %v421 = vpack.c.b16 %v409, %v405
        %v422 = vpack.c.b16 %v410, %v406
        %v423 = vpack.c.b16 %v411, %v407
        %v424 = vpack.c.b16 %v412, %v408
        %v425 = vpack.c.b16 %v417, %v413
        %v426 = vpack.c.b16 %v418, %v414
        %v427 = vpack.c.b16 %v419, %v415
        %v428 = vpack.c.b16 %v420, %v416
        %v501 = vunpack.c.l.b16 %v333
        %v502 = vunpack.c.h.b16 %v333
        %v503 = vunpack.c.l.b16 %v334
        %v504 = vunpack.c.h.b16 %v334
        %v505 = vunpack.c.l.b16 %v335
        %v506 = vunpack.c.h.b16 %v335
        %v507 = vunpack.c.l.b16 %v336
        %v508 = vunpack.c.h.b16 %v336
        %v509 = vunpack.c.l.b16 %v337
        %v510 = vunpack.c.h.b16 %v337
        %v511 = vunpack.c.l.b16 %v338
        %v512 = vunpack.c.h.b16 %v338
        %v513 = vunpack.c.l.b16 %v339
        %v514 = vunpack.c.h.b16 %v339
        %v515 = vunpack.c.l.b16 %v340
        %v516 = vunpack.c.h.b16 %v340
        %v517 = vunpack.c.l.b16 %v341
        %v518 = vunpack.c.h.b16 %v341
        %v519 = vunpack.c.l.b16 %v342
        %v520 = vunpack.c.h.b16 %v342
        %v521 = vunpack.c.l.b16 %v343
        %v522 = vunpack.c.h.b16 %v343
        %v523 = vunpack.c.l.b16 %v344
        %v524 = vunpack.c.h.b16 %v344
        %v525 = vunpack.c.l.b16 %v345
        %v526 = vunpack.c.h.b16 %v345
        %v527 = vunpack.c.l.b16 %v346
        %v528 = vunpack.c.h.b16 %v346
        %v529 = vunpack.c.l.b16 %v347
        %v530 = vunpack.c.h.b16 %v347
        %v531 = vunpack.c.l.b16 %v348
        %v532 = vunpack.c.h.b16 %v348
        %v533 = vunpack.c.l.b16 %v349
        %v534 = vunpack.c.h.b16 %v349
        %v535 = vunpack.c.l.b16 %v350
        %v536 = vunpack.c.h.b16 %v350
        %v537 = vunpack.c.l.b16 %v351
        %v538 = vunpack.c.h.b16 %v351
        %v539 = vunpack.c.l.b16 %v352
        %v540 = vunpack.c.h.b16 %v352
        %v541 = vunpack.c.l.b16 %v353
        %v542 = vunpack.c.h.b16 %v353
        %v543 = vunpack.c.l.b16 %v354
        %v544 = vunpack.c.h.b16 %v354
        %v545 = vunpack.c.l.b16 %v355
        %v546 = vunpack.c.h.b16 %v355
        %v547 = vunpack.c.l.b16 %v356
        %v548 = vunpack.c.h.b16 %v356
        %v549 = vunpack.c.l.b16 %v357
        %v550 = vunpack.c.h.b16 %v357
        %v551 = vunpack.c.l.b16 %v358
        %v552 = vunpack.c.h.b16 %v358
        %v553 = vunpack.c.l.b16 %v359
        %v554 = vunpack.c.h.b16 %v359
        %v555 = vunpack.c.l.b16 %v360
        %v556 = vunpack.c.h.b16 %v360
        %v557 = vunpack.c.l.b16 %v361
        %v558 = vunpack.c.h.b16 %v361
        %v559 = vunpack.c.l.b16 %v362
        %v560 = vunpack.c.h.b16 %v362
        %v561 = vunpack.c.l.b16 %v363
        %v562 = vunpack.c.h.b16 %v363
        %v563 = vunpack.c.l.b16 %v364
        %v564 = vunpack.c.h.b16 %v364
        %v565 = vunpack.c.l.b16 %v365
        %v566 = vunpack.c.h.b16 %v365
        %v567 = vunpack.c.l.b16 %v366
        %v568 = vunpack.c.h.b16 %v366
        %v569 = vunpack.c.l.b16 %v367
        %v570 = vunpack.c.h.b16 %v367
        %v571 = vunpack.c.l.b16 %v368
        %v572 = vunpack.c.h.b16 %v368
        %v573 = vunpack.c.l.b16 %v369
        %v574 = vunpack.c.h.b16 %v369
        %v575 = vunpack.c.l.b16 %v370
        %v576 = vunpack.c.h.b16 %v370
        %v577 = vunpack.c.l.b16 %v371
        %v578 = vunpack.c.h.b16 %v371
        %v579 = vunpack.c.l.b16 %v372
        %v580 = vunpack.c.h.b16 %v372
        %v581 = vunpack.c.l.b16 %v373
        %v582 = vunpack.c.h.b16 %v373
        %v583 = vunpack.c.l.b16 %v374
        %v584 = vunpack.c.h.b16 %v374
        %v585 = vunpack.c.l.b16 %v375
        %v586 = vunpack.c.h.b16 %v375
        %v587 = vunpack.c.l.b16 %v376
        %v588 = vunpack.c.h.b16 %v376
        %v589 = vunpack.c.l.b16 %v377
        %v590 = vunpack.c.h.b16 %v377
        %v591 = vunpack.c.l.b16 %v378
        %v592 = vunpack.c.h.b16 %v378
        %v593 = vunpack.c.l.b16 %v379
        %v594 = vunpack.c.h.b16 %v379
        %v595 = vunpack.c.l.b16 %v380
        %v596 = vunpack.c.h.b16 %v380
        %v597 = vunpack.c.l.b16 %v381
        %v598 = vunpack.c.h.b16 %v381
        %v599 = vunpack.c.l.b16 %v382
        %v600 = vunpack.c.h.b16 %v382
        %v601 = vunpack.c.l.b16 %v383
        %v602 = vunpack.c.h.b16 %v383
        %v603 = vunpack.c.l.b16 %v384
        %v604 = vunpack.c.h.b16 %v384
        %v605 = vunpack.c.l.b16 %v385
        %v606 = vunpack.c.h.b16 %v385
        %v607 = vunpack.c.l.b16 %v386
        %v608 = vunpack.c.h.b16 %v386
        %v609 = vunpack.c.l.b16 %v387
        %v610 = vunpack.c.h.b16 %v387
        %v611 = vunpack.c.l.b16 %v388
        %v612 = vunpack.c.h.b16 %v388
        %v613 = vunpack.c.l.b16 %v389
        %v614 = vunpack.c.h.b16 %v389
        %v615 = vunpack.c.l.b16 %v390
        %v616 = vunpack.c.h.b16 %v390
        %v617 = vunpack.c.l.b16 %v391
        %v618 = vunpack.c.h.b16 %v391
        %v619 = vunpack.c.l.b16 %v392
        %v620 = vunpack.c.h.b16 %v392
        %v621 = vunpack.c.l.b16 %v393
        %v622 = vunpack.c.h.b16 %v393
        %v623 = vunpack.c.l.b16 %v394
        %v624 = vunpack.c.h.b16 %v394
        %v625 = vunpack.c.l.b16 %v395
        %v626 = vunpack.c.h.b16 %v395
        %v627 = vunpack.c.l.b16 %v396
        %v628 = vunpack.c.h.b16 %v396
        %v629 = vpack.c.b16 %v503, %v501
        %v630 = vpack.c.b16 %v504, %v502
        %v631 = vpack.c.b16 %v507, %v505
        %v632 = vpack.c.b16 %v508, %v506
        %v633 = vpack.c.b16 %v511, %v509
        %v634 = vpack.c.b16 %v512, %v510
        %v635 = vpack.c.b16 %v515, %v513
        %v636 = vpack.c.b16 %v516, %v514
        %v637 = vpack.c.b16 %v519, %v517
        %v638 = vpack.c.b16 %v520, %v518
        %v639 = vpack.c.b16 %v523, %v521
        %v640 = vpack.c.b16 %v524, %v522
        %v641 = vpack.c.b16 %v527, %v525
        %v642 = vpack.c.b16 %v528, %v526
        %v643 = vpack.c.b16 %v531, %v529
        %v644 = vpack.c.b16 %v532, %v530
        %v645 = vpack.c.b16 %v535, %v533
        %v646 = vpack.c.b16 %v536, %v534
        %v647 = vpack.c.b16 %v539, %v537
        %v648 = vpack.c.b16 %v540, %v538
        %v649 = vpack.c.b16 %v543, %v541
        %v650 = vpack.c.b16 %v544, %v542
        %v651 = vpack.c.b16 %v547, %v545
        %v652 = vpack.c.b16 %v548, %v546
        %v653 = vpack.c.b16 %v551, %v549
        %v654 = vpack.c.b16 %v552, %v550
        %v655 = vpack.c.b16 %v555, %v553
        %v656 = vpack.c.b16 %v556, %v554
        %v657 = vpack.c.b16 %v559, %v557
        %v658 = vpack.c.b16 %v560, %v558
        %v659 = vpack.c.b16 %v563, %v561
        %v660 = vpack.c.b16 %v564, %v562
        %v661 = vpack.c.b16 %v567, %v565
        %v662 = vpack.c.b16 %v568, %v566
        %v663 = vpack.c.b16 %v571, %v569
        %v664 = vpack.c.b16 %v572, %v570
        %v665 = vpack.c.b16 %v575, %v573
        %v666 = vpack.c.b16 %v576, %v574
        %v667 = vpack.c.b16 %v579, %v577
        %v668 = vpack.c.b16 %v580, %v578
        %v669 = vpack.c.b16 %v583, %v581
        %v670 = vpack.c.b16 %v584, %v582
        %v671 = vpack.c.b16 %v587, %v585
        %v672 = vpack.c.b16 %v588, %v586
        %v673 = vpack.c.b16 %v591, %v589
        %v674 = vpack.c.b16 %v592, %v590
        %v675 = vpack.c.b16 %v595, %v593
        %v676 = vpack.c.b16 %v596, %v594
        %v677 = vpack.c.b16 %v599, %v597
        %v678 = vpack.c.b16 %v600, %v598
        %v679 = vpack.c.b16 %v603, %v601
        %v680 = vpack.c.b16 %v604, %v602
        %v681 = vpack.c.b16 %v607, %v605
        %v682 = vpack.c.b16 %v608, %v606
        %v683 = vpack.c.b16 %v611, %v609
        %v684 = vpack.c.b16 %v612, %v610
        %v685 = vpack.c.b16 %v615, %v613
        %v686 = vpack.c.b16 %v616, %v614
        %v687 = vpack.c.b16 %v619, %v617
        %v688 = vpack.c.b16 %v620, %v618
        %v689 = vpack.c.b16 %v623, %v621
        %v690 = vpack.c.b16 %v624, %v622
        %v691 = vpack.c.b16 %v627, %v625
        %v692 = vpack.c.b16 %v628, %v626
        %757 = vmatprep.subr.bf16.mxu0 %v630
        %758 = vmatpush1.bf16.msra.mxu0 %v629
        %759 = vmatprep.subr.bf16.mxu0 %v632
        %760 = vmatpush1.bf16.msra.mxu0 %v631
        %761 = vmatprep.subr.bf16.mxu0 %v634
        %762 = vmatpush1.bf16.msra.mxu0 %v633
        %763 = vmatprep.subr.bf16.mxu0 %v636
        %764 = vmatpush1.bf16.msra.mxu0 %v635
        %765 = vmatprep.subr.bf16.mxu0 %v638
        %766 = vmatpush1.bf16.msra.mxu0 %v637
        %767 = vmatprep.subr.bf16.mxu0 %v640
        %768 = vmatpush1.bf16.msra.mxu0 %v639
        %769 = vmatprep.subr.bf16.mxu0 %v642
        %770 = vmatpush1.bf16.msra.mxu0 %v641
        %771 = vmatprep.subr.bf16.mxu0 %v644
        %772 = vmatpush1.bf16.msra.mxu0 %v643
        %773 = vmatprep.subr.bf16.mxu0 %v646
        %774 = vmatpush1.bf16.msra.mxu0 %v645
        %775 = vmatprep.subr.bf16.mxu0 %v648
        %776 = vmatpush1.bf16.msra.mxu0 %v647
        %777 = vmatprep.subr.bf16.mxu0 %v650
        %778 = vmatpush1.bf16.msra.mxu0 %v649
        %779 = vmatprep.subr.bf16.mxu0 %v652
        %780 = vmatpush1.bf16.msra.mxu0 %v651
        %781 = vmatprep.subr.bf16.mxu0 %v654
        %782 = vmatpush1.bf16.msra.mxu0 %v653
        %783 = vmatprep.subr.bf16.mxu0 %v656
        %784 = vmatpush1.bf16.msra.mxu0 %v655
        %785 = vmatprep.subr.bf16.mxu0 %v658
        %786 = vmatpush1.bf16.msra.mxu0 %v657
        %787 = vmatprep.subr.bf16.mxu0 %v660
        %788 = vmatpush1.bf16.msra.mxu0 %v659
        %789 = vmatprep.mubr.bf16.mxu0 %v422
        %790 = vmatmul.mubr.bf16.gmra.mrb[0].mxu0 %v421
        %v791 = vpop.f32.mrb[0].mxu0
        %v792 = vadd.f32 0.0, %v791
        %v793 = vpop.f32.mrb[0].mxu0
        %v794 = vadd.f32 0.0, %v793
        %v795 = vpop.f32.mrb[0].mxu0
        %v796 = vadd.f32 0.0, %v795
        %v797 = vpop.f32.mrb[0].mxu0
        %v798 = vadd.f32 0.0, %v797
        %799 = vmatprep.mubr.bf16.mxu0 %v426
        %800 = vmatmul.mubr.bf16.gmra.mrb[0].mxu0 %v425
        %v801 = vpop.f32.mrb[0].mxu0
        %v802 = vadd.f32 0.0, %v801
        %v803 = vpop.f32.mrb[0].mxu0
        %v804 = vadd.f32 0.0, %v803
        %v805 = vpop.f32.mrb[0].mxu0
        %v806 = vadd.f32 0.0, %v805
        %v807 = vpop.f32.mrb[0].mxu0
        %v808 = vadd.f32 0.0, %v807
        %809 = vdwg.mxu0
        %810 = vmatprep.subr.bf16.mxu0 %v662
        %811 = vmatpush1.bf16.msra.mxu0 %v661
        %812 = vmatprep.subr.bf16.mxu0 %v664
        %813 = vmatpush1.bf16.msra.mxu0 %v663
        %814 = vmatprep.subr.bf16.mxu0 %v666
        %815 = vmatpush1.bf16.msra.mxu0 %v665
        %816 = vmatprep.subr.bf16.mxu0 %v668
        %817 = vmatpush1.bf16.msra.mxu0 %v667
        %818 = vmatprep.subr.bf16.mxu0 %v670
        %819 = vmatpush1.bf16.msra.mxu0 %v669
        %820 = vmatprep.subr.bf16.mxu0 %v672
        %821 = vmatpush1.bf16.msra.mxu0 %v671
        %822 = vmatprep.subr.bf16.mxu0 %v674
        %823 = vmatpush1.bf16.msra.mxu0 %v673
        %824 = vmatprep.subr.bf16.mxu0 %v676
        %825 = vmatpush1.bf16.msra.mxu0 %v675
        %826 = vmatprep.subr.bf16.mxu0 %v678
        %827 = vmatpush1.bf16.msra.mxu0 %v677
        %828 = vmatprep.subr.bf16.mxu0 %v680
        %829 = vmatpush1.bf16.msra.mxu0 %v679
        %830 = vmatprep.subr.bf16.mxu0 %v682
        %831 = vmatpush1.bf16.msra.mxu0 %v681
        %832 = vmatprep.subr.bf16.mxu0 %v684
        %833 = vmatpush1.bf16.msra.mxu0 %v683
        %834 = vmatprep.subr.bf16.mxu0 %v686
        %835 = vmatpush1.bf16.msra.mxu0 %v685
        %836 = vmatprep.subr.bf16.mxu0 %v688
        %837 = vmatpush1.bf16.msra.mxu0 %v687
        %838 = vmatprep.subr.bf16.mxu0 %v690
        %839 = vmatpush1.bf16.msra.mxu0 %v689
        %840 = vmatprep.subr.bf16.mxu0 %v692
        %841 = vmatpush1.bf16.msra.mxu0 %v691
        %842 = vmatprep.mubr.bf16.mxu0 %v424
        %843 = vmatmul.mubr.bf16.gmra.mrb[0].mxu0 %v423
        %v844 = vpop.f32.mrb[0].mxu0
        %v845 = vadd.f32 %v792, %v844
        %v846 = vpop.f32.mrb[0].mxu0
        %v847 = vadd.f32 %v794, %v846
        %v848 = vpop.f32.mrb[0].mxu0
        %v849 = vadd.f32 %v796, %v848
        %v850 = vpop.f32.mrb[0].mxu0
        %v851 = vadd.f32 %v798, %v850
        %852 = vmatprep.mubr.bf16.mxu0 %v428
        %853 = vmatmul.mubr.bf16.gmra.mrb[0].mxu0 %v427
        %v854 = vpop.f32.mrb[0].mxu0
        %v855 = vadd.f32 %v802, %v854
        %v856 = vpop.f32.mrb[0].mxu0
        %v857 = vadd.f32 %v804, %v856
        %v858 = vpop.f32.mrb[0].mxu0
        %v859 = vadd.f32 %v806, %v858
        %v860 = vpop.f32.mrb[0].mxu0
        %v861 = vadd.f32 %v808, %v860
        %862 = vdwg.mxu0
        %v863 = vadd.f32 %v317, %v845
        %v864 = vadd.f32 %v318, %v847
        %v865 = vadd.f32 %v319, %v849
        %v866 = vadd.f32 %v320, %v851
        %v867 = vadd.f32 %v321, %v855
        %v868 = vadd.f32 %v322, %v857
        %v869 = vadd.f32 %v323, %v859
        %v870 = vadd.f32 %v324, %v861
        %871 = vst [vmem:[#allocation2] sm:$0xff] %v863
        %872 = vst [vmem:[#allocation2 + $0x8] sm:$0xff] %v864
        %873 = vst [vmem:[#allocation2 + $0x10] sm:$0xff] %v865
        %874 = vst [vmem:[#allocation2 + $0x18] sm:$0xff] %v866
        %875 = vst [vmem:[#allocation2 + $0x20] sm:$0xff] %v867
        %876 = vst [vmem:[#allocation2 + $0x28] sm:$0xff] %v868
        %877 = vst [vmem:[#allocation2 + $0x30] sm:$0xff] %v869
        %878 = vst [vmem:[#allocation2 + $0x38] sm:$0xff] %v870
        %p879 = scmp.eq.s32.totalorder %s21, 3
        // Predicated region
        $region60: #{discriminator_forward.9} parent=50 // pred_check
          %p880 = pneg %p879
        $region61: #{discriminator_forward.9} parent=50 // pred_check_branch
          %882 = sbr.rel (%p880) target = $region63
        $region62: #{discriminator_forward.9} parent=50 // pred_region
          %v883 = vld [vmem:[#allocation2] sm:$0xff]
          %v884 = vld [vmem:[#allocation2 + $0x8] sm:$0xff]
          %v885 = vld [vmem:[#allocation2 + $0x10] sm:$0xff]
          %v886 = vld [vmem:[#allocation2 + $0x18] sm:$0xff]
          %v887 = vld [vmem:[#allocation2 + $0x20] sm:$0xff]
          %v888 = vld [vmem:[#allocation2 + $0x28] sm:$0xff]
          %v889 = vld [vmem:[#allocation2 + $0x30] sm:$0xff]
          %v890 = vld [vmem:[#allocation2 + $0x38] sm:$0xff]
          %v891 = vld [vmem:[%s291] sm:$0x3]
          %v893 = vlaneseq
          %v894 = vshrl.u32 %v893, 7
          %v895 = vsub.s32 0, %v894
          %v896 = vrot.slane %v891, %v895
          %v897 = vlaneseq
          %v898 = vshrl.u32 %v897, 7
          %v899 = vsub.s32 1, %v898
          %v900 = vrot.slane %v891, %v899
          %v903 = vadd.f32 %v883, %v896
          %v904 = vadd.f32 %v884, %v900
          %v905 = vadd.f32 %v885, %v896
          %v906 = vadd.f32 %v886, %v900
          %v907 = vadd.f32 %v887, %v896
          %v908 = vadd.f32 %v888, %v900
          %v909 = vadd.f32 %v889, %v896
          %v910 = vadd.f32 %v890, %v900
          %v911 = vmul.f32 %v903, 0.2
          %v912 = vmul.f32 %v904, 0.2
          %v913 = vmul.f32 %v905, 0.2
          %v914 = vmul.f32 %v906, 0.2
          %v915 = vmul.f32 %v907, 0.2
          %v916 = vmul.f32 %v908, 0.2
          %v917 = vmul.f32 %v909, 0.2
          %v918 = vmul.f32 %v910, 0.2
          %v919 = vmax.f32 %v903, %v911
          %v920 = vmax.f32 %v904, %v912
          %v921 = vmax.f32 %v905, %v913
          %v922 = vmax.f32 %v906, %v914
          %v923 = vmax.f32 %v907, %v915
          %v924 = vmax.f32 %v908, %v916
          %v925 = vmax.f32 %v909, %v917
          %v926 = vmax.f32 %v910, %v918
          %v927 = vmul.f32 %v919, 1.4142135
          %v928 = vmul.f32 %v920, 1.4142135
          %v929 = vmul.f32 %v921, 1.4142135
          %v930 = vmul.f32 %v922, 1.4142135
          %v931 = vmul.f32 %v923, 1.4142135
          %v932 = vmul.f32 %v924, 1.4142135
          %v933 = vmul.f32 %v925, 1.4142135
          %v934 = vmul.f32 %v926, 1.4142135
          %935 = vst [vmem:[%s302] sm:$0xff] %v927
          %936 = vst [vmem:[%s302 + $0x8] sm:$0xff] %v928
          %937 = vst [vmem:[%s302 + $0x10] sm:$0xff] %v929
          %938 = vst [vmem:[%s302 + $0x18] sm:$0xff] %v930
          %939 = vst [vmem:[%s302 + $0x20] sm:$0xff] %v931
          %940 = vst [vmem:[%s302 + $0x28] sm:$0xff] %v932
          %941 = vst [vmem:[%s302 + $0x30] sm:$0xff] %v933
          %942 = vst [vmem:[%s302 + $0x38] sm:$0xff] %v934
        $region63: #{discriminator_forward.9} parent=50 // pred_fallthru
          _
        %s943 = smul.u32 4, %s19
        %s944 = smul.u32 2, %s20
        %p945 = scmp.lt.s32.totalorder %s943, 3
        %s946 = scalar_select %p945, %s943, 3
        %p947 = scmp.lt.s32.totalorder %s944, 1
        %s948 = scalar_select %p947, %s944, 1
        %s949 = smul.addr %s946, 2
        %s950 = sadd.s32 %s948, %s949
        %s951 = smul.addr %s950, 8
        %s952 = scalar_lea.vmem %s3, %s951
        // Predicated region
        $region64: #{discriminator_forward.9} parent=50 // pred_check
          %p953 = pneg %p135
        $region65: #{discriminator_forward.9} parent=50 // pred_check_branch
          %955 = sbr.rel (%p953) target = $region67
        $region66: #{discriminator_forward.9} parent=50 // pred_region
          %s956 = smul.u32 4, %s19
          %s957 = smul.u32 2, %s20
        $region67: #{discriminator_forward.9} parent=50 // pred_fallthru
          _
        // Predicated region
        $region68: #{discriminator_forward.9} parent=50 // pred_check
          %p958 = pneg %p135
        $region69: #{discriminator_forward.9} parent=50 // pred_check_branch
          %960 = sbr.rel (%p958) target = $region71
        $region70: #{discriminator_forward.9} parent=50 // pred_region
          %s961 = smul.u32 4, %s19
          %s962 = smul.u32 2, %s20
          %p963 = scmp.lt.s32.totalorder %s961, 3
          %s964 = scalar_select %p963, %s961, 3
          %p965 = scmp.lt.s32.totalorder %s962, 1
          %s966 = scalar_select %p965, %s962, 1
          %s967 = smul.addr %s964, 2
          %s968 = sadd.s32 %s966, %s967
          %s969 = smul.addr %s968, 8
          %s970 = scalar_lea.vmem %s3, %s969
        $region71: #{discriminator_forward.9} parent=50 // pred_fallthru
          _
      $region51: #{discriminator_forward.9} parent=5 // pred_fallthru
        _
      %p971 = scmp.le.s32.totalorder 2, %s9
      // Predicated region
      $region72: #{discriminator_forward.9} parent=5 // pred_check
        %p972 = pneg %p971
      $region73: #{discriminator_forward.9} parent=5 // pred_check_branch
        %974 = sbr.rel (%p972) target = $region75
      $region74: #{discriminator_forward.9} parent=5 // pred_region
        %s975 = ssub.s32 %s9, 2
      $region75: #{discriminator_forward.9} parent=5 // pred_fallthru
        _
    $region6: #{discriminator_forward.9} parent=1 // loop_footer
      %s13 = sadd.s32 1, %s9
    $region7: #{discriminator_forward.9} parent=1 // loop_footer_branch
      %8 = sbr.rel target = $region3
    $region8: #{discriminator_forward.9} parent=1 // loop_exit
      _

// kernel: discriminator_forward.10
$region0: #{discriminator_forward.10}
  #allocation0 [shape = 'u32[]', space=smem, size = 0x4, offset = 0x4, fixed_abs, tag = 'smem constant byte address 0x4 - core index']
  #allocation1 [shape = 'u32[144,128]{1,0:T(1,128)}', space=vmem, size = 0x12000, scoped, tag = 'internal scratch']
  #allocation2 [shape = 'f32[8,256]{1,0:T(8,128)}', space=vmem, size = 0x2000, scoped, tag = 'scratch operand']
  %s0 = inlined_call_operand.vmem [shape: bf16[8,4096], index: 0, kind: input, shape index: {}]
  %s1 = inlined_call_operand.vmem [shape: bf16[4096,1024], index: 1, kind: input, shape index: {}]
  %s2 = inlined_call_operand.vmem [shape: f32[1,1024], index: 2, kind: input, shape index: {}]
  %s3 = inlined_call_operand.vmem [shape: f32[8,1024], index: 3, kind: output, shape index: {}]
  %s4 = sld [smem:[#allocation0]]
  $region91: #{discriminator_forward.10} parent=0
    _
  %s6 = ssub.s32 1, %s4
  %s7 = scalar_select 0, %s6, %s4
  $region1: #{discriminator_forward.10} parent=0
    #allocation3 [shape = 'u8[524288]{0}', space=vmem, size = 0x80000, scoped, tag = 'input window, operand 1']
    loop: start=0, step=1, limit=34
    $region2: #{discriminator_forward.10} parent=1 // loop_pre_header
      _
    $region3: #{discriminator_forward.10} parent=1 // loop_header
      %s9 = sphi 0, %s13
      %p10 = scmp.ge.s32.totalorder %s9, 34
      %s16 = sphi 0, %s35
      %s17 = sphi 0, %s31
      %s18 = sphi 0, %s27
      %s19 = sphi 0, %s16
      %s20 = sphi 0, %s17
      %s21 = sphi 0, %s18
      %s22 = sphi 0, %s19
      %s23 = sphi 0, %s20
      %s24 = sphi 0, %s21
      %s40 = sphi 0, %s42
      %s43 = sphi 0, %s40
      %s44 = sphi 0, %s43
      %s60 = sphi 0, %s44
      %s68 = sphi 0, %s70
      %s71 = sphi 0, %s68
      %s72 = sphi 0, %s71
      %s88 = sphi 0, %s72
      %s94 = sphi 0, %s96
      %s97 = sphi 0, %s94
      %s98 = sphi 0, %s97
      %s114 = sphi 0, %s98
      %s122 = sphi 0, %s124
      %s125 = sphi 0, %s122
      %s126 = sphi 0, %s125
      %s142 = sphi 0, %s126
    $region4: #{discriminator_forward.10} parent=1 // loop_header_branch
      %12 = sbr.rel (%p10) target = $region8
    $region5: #{discriminator_forward.10} parent=1 // loop_body
      %s14 = ssub.s32 %s9, 1
      %s15 = ssub.s32 %s9, 2
      %s25 = sadd.s32 1, %s18
      %p26 = scmp.ge.s32.totalorder %s25, 8
      %s27 = scalar_select %p26, 0, %s25
      %s28 = sadd.s32 1, %s17
      %s29 = scalar_select %p26, %s28, %s17
      %p30 = scmp.ge.s32.totalorder %s29, 4
      %s31 = scalar_select %p30, 0, %s29
      %s32 = sadd.s32 1, %s16
      %s33 = scalar_select %p30, %s32, %s16
      %p34 = scmp.ge.s32.totalorder %s33, 1
      %s35 = scalar_select %p34, 0, %s33
      %s36 = ssub.s32 %s16, %s35
      %s37 = ssub.s32 %s18, %s27
      %s38 = sor.u32 %s36, %s37
      %p39 = scmp.eq.s32.totalorder %s38, 0
      %s41 = sadd.s32 %s40, 1
      %s42 = scalar_select %p39, %s40, %s41
      %p45 = pneg %p39
      %p46 = scmp.eq.s32.totalorder %s9, 31
      %p47 = por %p45, %p46
      %p48 = scmp.ne.s32.totalorder %s40, %s43
      %p49 = scmp.eq.s32.totalorder %s9, 0
      %p50 = por %p48, %p49
      %p51 = scmp.ne.s32.totalorder %s40, %s43
      %p52 = scmp.eq.s32.totalorder %s14, 31
      %p53 = por %p51, %p52
      %p54 = scmp.ne.s32.totalorder %s43, %s44
      %p55 = scmp.eq.s32.totalorder %s14, 0
      %p56 = por %p54, %p55
      %p57 = scmp.ne.s32.totalorder %s43, %s44
      %p58 = scmp.eq.s32.totalorder %s15, 31
      %p59 = por %p57, %p58
      %p61 = scmp.ne.s32.totalorder %s44, %s60
      %p62 = scmp.eq.s32.totalorder %s15, 0
      %p63 = por %p61, %p62
      %s64 = ssub.s32 %s18, %s27
      %s65 = ssub.s32 %s17, %s31
      %s66 = sor.u32 %s64, %s65
      %p67 = scmp.eq.s32.totalorder %s66, 0
      %s69 = sadd.s32 %s68, 1
      %s70 = scalar_select %p67, %s68, %s69
      %p73 = pneg %p67
      %p74 = scmp.eq.s32.totalorder %s9, 31
      %p75 = por %p73, %p74
      %p76 = scmp.ne.s32.totalorder %s68, %s71
      %p77 = scmp.eq.s32.totalorder %s9, 0
      %p78 = por %p76, %p77
      %p79 = scmp.ne.s32.totalorder %s68, %s71
      %p80 = scmp.eq.s32.totalorder %s14, 31
      %p81 = por %p79, %p80
      %p82 = scmp.ne.s32.totalorder %s71, %s72
      %p83 = scmp.eq.s32.totalorder %s14, 0
      %p84 = por %p82, %p83
      %p85 = scmp.ne.s32.totalorder %s71, %s72
      %p86 = scmp.eq.s32.totalorder %s15, 31
      %p87 = por %p85, %p86
      %p89 = scmp.ne.s32.totalorder %s72, %s88
      %p90 = scmp.eq.s32.totalorder %s15, 0
      %p91 = por %p89, %p90
      %s92 = ssub.s32 %s17, %s31
      %p93 = scmp.eq.s32.totalorder %s92, 0
      %s95 = sadd.s32 %s94, 1
      %s96 = scalar_select %p93, %s94, %s95
      %p99 = pneg %p93
      %p100 = scmp.eq.s32.totalorder %s9, 31
      %p101 = por %p99, %p100
      %p102 = scmp.ne.s32.totalorder %s94, %s97
      %p103 = scmp.eq.s32.totalorder %s9, 0
      %p104 = por %p102, %p103
      %p105 = scmp.ne.s32.totalorder %s94, %s97
      %p106 = scmp.eq.s32.totalorder %s14, 31
      %p107 = por %p105, %p106
      %p108 = scmp.ne.s32.totalorder %s97, %s98
      %p109 = scmp.eq.s32.totalorder %s14, 0
      %p110 = por %p108, %p109
      %p111 = scmp.ne.s32.totalorder %s97, %s98
      %p112 = scmp.eq.s32.totalorder %s15, 31
      %p113 = por %p111, %p112
      %p115 = scmp.ne.s32.totalorder %s98, %s114
      %p116 = scmp.eq.s32.totalorder %s15, 0
      %p117 = por %p115, %p116
      %s118 = ssub.s32 %s16, %s35
      %s119 = ssub.s32 %s17, %s31
      %s120 = sor.u32 %s118, %s119
      %p121 = scmp.eq.s32.totalorder %s120, 0
      %s123 = sadd.s32 %s122, 1
      %s124 = scalar_select %p121, %s122, %s123
      %p127 = pneg %p121
      %p128 = scmp.eq.s32.totalorder %s9, 31
      %p129 = por %p127, %p128
      %p130 = scmp.ne.s32.totalorder %s122, %s125
      %p131 = scmp.eq.s32.totalorder %s9, 0
      %p132 = por %p130, %p131
      %p133 = scmp.ne.s32.totalorder %s122, %s125
      %p134 = scmp.eq.s32.totalorder %s14, 31
      %p135 = por %p133, %p134
      %p136 = scmp.ne.s32.totalorder %s125, %s126
      %p137 = scmp.eq.s32.totalorder %s14, 0
      %p138 = por %p136, %p137
      %p139 = scmp.ne.s32.totalorder %s125, %s126
      %p140 = scmp.eq.s32.totalorder %s15, 31
      %p141 = por %p139, %p140
      %p143 = scmp.ne.s32.totalorder %s126, %s142
      %p144 = scmp.eq.s32.totalorder %s15, 0
      %p145 = por %p143, %p144
      %p146 = scmp.le.s32.totalorder 1, %s9
      %p147 = scmp.lt.s32.totalorder %s9, 33
      %p148 = pnand %p146, %p147
      %p149 = pneg %p148
      // Predicated region
      $region9: #{discriminator_forward.10} parent=5 // pred_check
        _
      $region10: #{discriminator_forward.10} parent=5 // pred_check_branch
        %151 = sbr.rel (%p148) target = $region12
      $region11: #{discriminator_forward.10} parent=5 // pred_region
        %s152 = ssub.s32 %s9, 1
      $region12: #{discriminator_forward.10} parent=5 // pred_fallthru
        _
      %p153 = scmp.lt.s32.totalorder %s9, 32
      // Predicated region
      $region13: #{discriminator_forward.10} parent=5 // pred_check
        %p154 = pneg %p153
      $region14: #{discriminator_forward.10} parent=5 // pred_check_branch
        %156 = sbr.rel (%p154) target = $region16
      $region15: #{discriminator_forward.10} parent=5 // pred_region
        // Predicated region
        $region17: #{discriminator_forward.10} parent=15 // pred_check
          %p157 = pneg %p50
        $region18: #{discriminator_forward.10} parent=15 // pred_check_branch
          %159 = sbr.rel (%p157) target = $region20
        $region19: #{discriminator_forward.10} parent=15 // pred_region
          %s160 = smul.u32 4, %s18
          %p161 = scmp.lt.s32.totalorder %s16, 0
          %s162 = scalar_select %p161, %s16, 0
          %p163 = scmp.lt.s32.totalorder %s160, 31
          %s164 = scalar_select %p163, %s160, 31
          %s165 = smul.addr %s162, 32
          %s166 = sadd.s32 %s164, %s165
          %s167 = smul.addr %s166, 4
          %s168 = scalar_lea.vmem %s0, %s167
          %s169 = smul.u32 4, %s18
        $region20: #{discriminator_forward.10} parent=15 // pred_fallthru
          _
        // Predicated region
        $region21: #{discriminator_forward.10} parent=15 // pred_check
          %p170 = pneg %p78
        $region22: #{discriminator_forward.10} parent=15 // pred_check_branch
          %172 = sbr.rel (%p170) target = $region24
        $region23: #{discriminator_forward.10} parent=15 // pred_region
          %s173 = sand.u32 %s68, 1
          %s174 = sand.u32 %s68, 1
          %s175 = smul.addr %s174, 512
          %s176 = scalar_lea.vmem [#allocation3], %s175
          %s177 = smul.u32 64, %s18
          %s178 = smul.u32 2, %s17
          %s179 = smul.addr %s177, 8
          %s180 = sadd.s32 %s178, %s179
          %s181 = smul.addr %s180, 4
          %s182 = scalar_lea.vmem %s1, %s181
          // Predicated region
          $region25: #{discriminator_forward.10} parent=23 // pred_check
            _
          $region26: #{discriminator_forward.10} parent=23 // pred_check_branch
            %184 = sbr.rel (0) target = $region28
          $region27: #{discriminator_forward.10} parent=23 // pred_region
            // Predicated region
            $region29: #{discriminator_forward.10} parent=27 // pred_check
              _
            $region30: #{discriminator_forward.10} parent=27 // pred_check_branch
              %186 = sbr.rel (0) target = $region32
            $region31: #{discriminator_forward.10} parent=27 // pred_region
              // Predicated region
              $region44: #{discriminator_forward.10} parent=31 // pred_check
                _
              $region45: #{discriminator_forward.10} parent=31 // pred_check_branch
                %327 = sbr.rel (0) target = $region47
              $region46: #{discriminator_forward.10} parent=31 // pred_region
                loop: start=0, step=1, limit=1
                $region48: #{discriminator_forward.10} parent=46 // loop_pre_header
                  _
                $region49: #{discriminator_forward.10} parent=46 // loop_header
                  %s329 = sphi 0, %s333
                  %p330 = scmp.ge.s32.totalorder %s329, 1
                  %s334 = sphi %s182, %s182
                  %s335 = sphi %s176, %s176
                $region50: #{discriminator_forward.10} parent=46 // loop_header_branch
                  %332 = sbr.rel (%p330) target = $region54
                $region51: #{discriminator_forward.10} parent=46 // loop_body
                  %v336 = vld [vmem:[%s334] sm:$0xff]
                  %337 = vst [vmem:[%s335] sm:$0xff] %v336
                  %v338 = vld [vmem:[%s334 + $0x20] sm:$0xff]
                  %339 = vst [vmem:[%s335 + $0x8] sm:$0xff] %v338
                  %v340 = vld [vmem:[%s334 + $0x40] sm:$0xff]
                  %341 = vst [vmem:[%s335 + $0x10] sm:$0xff] %v340
                  %v342 = vld [vmem:[%s334 + $0x60] sm:$0xff]
                  %343 = vst [vmem:[%s335 + $0x18] sm:$0xff] %v342
                  %v344 = vld [vmem:[%s334 + $0x80] sm:$0xff]
                  %345 = vst [vmem:[%s335 + $0x20] sm:$0xff] %v344
                  %v346 = vld [vmem:[%s334 + $0xa0] sm:$0xff]
                  %347 = vst [vmem:[%s335 + $0x28] sm:$0xff] %v346
                  %v348 = vld [vmem:[%s334 + $0xc0] sm:$0xff]
                  %349 = vst [vmem:[%s335 + $0x30] sm:$0xff] %v348
                  %v350 = vld [vmem:[%s334 + $0xe0] sm:$0xff]
                  %351 = vst [vmem:[%s335 + $0x38] sm:$0xff] %v350
                  %v352 = vld [vmem:[%s334 + $0x100] sm:$0xff]
                  %353 = vst [vmem:[%s335 + $0x40] sm:$0xff] %v352
                  %v354 = vld [vmem:[%s334 + $0x120] sm:$0xff]
                  %355 = vst [vmem:[%s335 + $0x48] sm:$0xff] %v354
                  %v356 = vld [vmem:[%s334 + $0x140] sm:$0xff]
                  %357 = vst [vmem:[%s335 + $0x50] sm:$0xff] %v356
                  %v358 = vld [vmem:[%s334 + $0x160] sm:$0xff]
                  %359 = vst [vmem:[%s335 + $0x58] sm:$0xff] %v358
                  %v360 = vld [vmem:[%s334 + $0x180] sm:$0xff]
                  %361 = vst [vmem:[%s335 + $0x60] sm:$0xff] %v360
                  %v362 = vld [vmem:[%s334 + $0x1a0] sm:$0xff]
                  %363 = vst [vmem:[%s335 + $0x68] sm:$0xff] %v362
                  %v364 = vld [vmem:[%s334 + $0x1c0] sm:$0xff]
                  %365 = vst [vmem:[%s335 + $0x70] sm:$0xff] %v364
                  %v366 = vld [vmem:[%s334 + $0x1e0] sm:$0xff]
                  %367 = vst [vmem:[%s335 + $0x78] sm:$0xff] %v366
                  %v368 = vld [vmem:[%s334 + $0x200] sm:$0xff]
                  %369 = vst [vmem:[%s335 + $0x80] sm:$0xff] %v368
                  %v370 = vld [vmem:[%s334 + $0x220] sm:$0xff]
                  %371 = vst [vmem:[%s335 + $0x88] sm:$0xff] %v370
                  %v372 = vld [vmem:[%s334 + $0x240] sm:$0xff]
                  %373 = vst [vmem:[%s335 + $0x90] sm:$0xff] %v372
                  %v374 = vld [vmem:[%s334 + $0x260] sm:$0xff]
                  %375 = vst [vmem:[%s335 + $0x98] sm:$0xff] %v374
                  %v376 = vld [vmem:[%s334 + $0x280] sm:$0xff]
                  %377 = vst [vmem:[%s335 + $0xa0] sm:$0xff] %v376
                  %v378 = vld [vmem:[%s334 + $0x2a0] sm:$0xff]
                  %379 = vst [vmem:[%s335 + $0xa8] sm:$0xff] %v378
                  %v380 = vld [vmem:[%s334 + $0x2c0] sm:$0xff]
                  %381 = vst [vmem:[%s335 + $0xb0] sm:$0xff] %v380
                  %v382 = vld [vmem:[%s334 + $0x2e0] sm:$0xff]
                  %383 = vst [vmem:[%s335 + $0xb8] sm:$0xff] %v382
                  %v384 = vld [vmem:[%s334 + $0x300] sm:$0xff]
                  %385 = vst [vmem:[%s335 + $0xc0] sm:$0xff] %v384
                  %v386 = vld [vmem:[%s334 + $0x320] sm:$0xff]
                  %387 = vst [vmem:[%s335 + $0xc8] sm:$0xff] %v386
                  %v388 = vld [vmem:[%s334 + $0x340] sm:$0xff]
                  %389 = vst [vmem:[%s335 + $0xd0] sm:$0xff] %v388
                  %v390 = vld [vmem:[%s334 + $0x360] sm:$0xff]
                  %391 = vst [vmem:[%s335 + $0xd8] sm:$0xff] %v390
                  %v392 = vld [vmem:[%s334 + $0x380] sm:$0xff]
                  %393 = vst [vmem:[%s335 + $0xe0] sm:$0xff] %v392
                  %v394 = vld [vmem:[%s334 + $0x3a0] sm:$0xff]
                  %395 = vst [vmem:[%s335 + $0xe8] sm:$0xff] %v394
                  %v396 = vld [vmem:[%s334 + $0x3c0] sm:$0xff]
                  %397 = vst [vmem:[%s335 + $0xf0] sm:$0xff] %v396
                  %v398 = vld [vmem:[%s334 + $0x3e0] sm:$0xff]
                  %399 = vst [vmem:[%s335 + $0xf8] sm:$0xff] %v398
                  %v400 = vld [vmem:[%s334 + $0x400] sm:$0xff]
                  %401 = vst [vmem:[%s335 + $0x100] sm:$0xff] %v400
                  %v402 = vld [vmem:[%s334 + $0x420] sm:$0xff]
                  %403 = vst [vmem:[%s335 + $0x108] sm:$0xff] %v402
                  %v404 = vld [vmem:[%s334 + $0x440] sm:$0xff]
                  %405 = vst [vmem:[%s335 + $0x110] sm:$0xff] %v404
                  %v406 = vld [vmem:[%s334 + $0x460] sm:$0xff]
                  %407 = vst [vmem:[%s335 + $0x118] sm:$0xff] %v406
                  %v408 = vld [vmem:[%s334 + $0x480] sm:$0xff]
                  %409 = vst [vmem:[%s335 + $0x120] sm:$0xff] %v408
                  %v410 = vld [vmem:[%s334 + $0x4a0] sm:$0xff]
                  %411 = vst [vmem:[%s335 + $0x128] sm:$0xff] %v410
                  %v412 = vld [vmem:[%s334 + $0x4c0] sm:$0xff]
                  %413 = vst [vmem:[%s335 + $0x130] sm:$0xff] %v412
                  %v414 = vld [vmem:[%s334 + $0x4e0] sm:$0xff]
                  %415 = vst [vmem:[%s335 + $0x138] sm:$0xff] %v414
                  %v416 = vld [vmem:[%s334 + $0x500] sm:$0xff]
                  %417 = vst [vmem:[%s335 + $0x140] sm:$0xff] %v416
                  %v418 = vld [vmem:[%s334 + $0x520] sm:$0xff]
                  %419 = vst [vmem:[%s335 + $0x148] sm:$0xff] %v418
                  %v420 = vld [vmem:[%s334 + $0x540] sm:$0xff]
                  %421 = vst [vmem:[%s335 + $0x150] sm:$0xff] %v420
                  %v422 = vld [vmem:[%s334 + $0x560] sm:$0xff]
                  %423 = vst [vmem:[%s335 + $0x158] sm:$0xff] %v422
                  %v424 = vld [vmem:[%s334 + $0x580] sm:$0xff]
                  %425 = vst [vmem:[%s335 + $0x160] sm:$0xff] %v424
                  %v426 = vld [vmem:[%s334 + $0x5a0] sm:$0xff]
                  %427 = vst [vmem:[%s335 + $0x168] sm:$0xff] %v426
                  %v428 = vld [vmem:[%s334 + $0x5c0] sm:$0xff]
                  %429 = vst [vmem:[%s335 + $0x170] sm:$0xff] %v428
                  %v430 = vld [vmem:[%s334 + $0x5e0] sm:$0xff]
                  %431 = vst [vmem:[%s335 + $0x178] sm:$0xff] %v430
                  %v432 = vld [vmem:[%s334 + $0x600] sm:$0xff]
                  %433 = vst [vmem:[%s335 + $0x180] sm:$0xff] %v432
                  %v434 = vld [vmem:[%s334 + $0x620] sm:$0xff]
                  %435 = vst [vmem:[%s335 + $0x188] sm:$0xff] %v434
                  %v436 = vld [vmem:[%s334 + $0x640] sm:$0xff]
                  %437 = vst [vmem:[%s335 + $0x190] sm:$0xff] %v436
                  %v438 = vld [vmem:[%s334 + $0x660] sm:$0xff]
                  %439 = vst [vmem:[%s335 + $0x198] sm:$0xff] %v438
                  %v440 = vld [vmem:[%s334 + $0x680] sm:$0xff]
                  %441 = vst [vmem:[%s335 + $0x1a0] sm:$0xff] %v440
                  %v442 = vld [vmem:[%s334 + $0x6a0] sm:$0xff]
                  %443 = vst [vmem:[%s335 + $0x1a8] sm:$0xff] %v442
                  %v444 = vld [vmem:[%s334 + $0x6c0] sm:$0xff]
                  %445 = vst [vmem:[%s335 + $0x1b0] sm:$0xff] %v444
                  %v446 = vld [vmem:[%s334 + $0x6e0] sm:$0xff]
                  %447 = vst [vmem:[%s335 + $0x1b8] sm:$0xff] %v446
                  %v448 = vld [vmem:[%s334 + $0x700] sm:$0xff]
                  %449 = vst [vmem:[%s335 + $0x1c0] sm:$0xff] %v448
                  %v450 = vld [vmem:[%s334 + $0x720] sm:$0xff]
                  %451 = vst [vmem:[%s335 + $0x1c8] sm:$0xff] %v450
                  %v452 = vld [vmem:[%s334 + $0x740] sm:$0xff]
                  %453 = vst [vmem:[%s335 + $0x1d0] sm:$0xff] %v452
                  %v454 = vld [vmem:[%s334 + $0x760] sm:$0xff]
                  %455 = vst [vmem:[%s335 + $0x1d8] sm:$0xff] %v454
                  %v456 = vld [vmem:[%s334 + $0x780] sm:$0xff]
                  %457 = vst [vmem:[%s335 + $0x1e0] sm:$0xff] %v456
                  %v458 = vld [vmem:[%s334 + $0x7a0] sm:$0xff]
                  %459 = vst [vmem:[%s335 + $0x1e8] sm:$0xff] %v458
                  %v460 = vld [vmem:[%s334 + $0x7c0] sm:$0xff]
                  %461 = vst [vmem:[%s335 + $0x1f0] sm:$0xff] %v460
                  %v462 = vld [vmem:[%s334 + $0x7e0] sm:$0xff]
                  %463 = vst [vmem:[%s335 + $0x1f8] sm:$0xff] %v462
                $region52: #{discriminator_forward.10} parent=46 // loop_footer
                  %s333 = sadd.s32 1, %s329
                $region53: #{discriminator_forward.10} parent=46 // loop_footer_branch
                  %328 = sbr.rel target = $region49
                $region54: #{discriminator_forward.10} parent=46 // loop_exit
                  _
              $region47: #{discriminator_forward.10} parent=31 // pred_fallthru
                _
              // Predicated region
              $region55: #{discriminator_forward.10} parent=31 // pred_check
                _
              $region56: #{discriminator_forward.10} parent=31 // pred_check_branch
                %465 = sbr.rel target = $region58
              $region57: #{discriminator_forward.10} parent=31 // pred_region
                _
              $region58: #{discriminator_forward.10} parent=31 // pred_fallthru
                _
            $region32: #{discriminator_forward.10} parent=27 // pred_fallthru
              _
            // Predicated region
            $region33: #{discriminator_forward.10} parent=27 // pred_check
              _
            $region34: #{discriminator_forward.10} parent=27 // pred_check_branch
              %188 = sbr.rel target = $region36
            $region35: #{discriminator_forward.10} parent=27 // pred_region
              loop: start=0, step=1, limit=1
              $region37: #{discriminator_forward.10} parent=35 // loop_pre_header
                _
              $region38: #{discriminator_forward.10} parent=35 // loop_header
                %s191 = sphi 0, %s195
                %p192 = scmp.ge.s32.totalorder %s191, 1
                %s196 = sphi %s182, %s182
                %s197 = sphi %s176, %s176
              $region39: #{discriminator_forward.10} parent=35 // loop_header_branch
                %194 = sbr.rel (%p192) target = $region43
              $region40: #{discriminator_forward.10} parent=35 // loop_body
                %v198 = vld [vmem:[%s196] sm:$0xff]
                %199 = vst [vmem:[%s197] sm:$0xff] %v198
                %v200 = vld [vmem:[%s196 + $0x20] sm:$0xff]
                %201 = vst [vmem:[%s197 + $0x8] sm:$0xff] %v200
                %v202 = vld [vmem:[%s196 + $0x40] sm:$0xff]
                %203 = vst [vmem:[%s197 + $0x10] sm:$0xff] %v202
                %v204 = vld [vmem:[%s196 + $0x60] sm:$0xff]
                %205 = vst [vmem:[%s197 + $0x18] sm:$0xff] %v204
                %v206 = vld [vmem:[%s196 + $0x80] sm:$0xff]
                %207 = vst [vmem:[%s197 + $0x20] sm:$0xff] %v206
                %v208 = vld [vmem:[%s196 + $0xa0] sm:$0xff]
                %209 = vst [vmem:[%s197 + $0x28] sm:$0xff] %v208
                %v210 = vld [vmem:[%s196 + $0xc0] sm:$0xff]
                %211 = vst [vmem:[%s197 + $0x30] sm:$0xff] %v210
                %v212 = vld [vmem:[%s196 + $0xe0] sm:$0xff]
                %213 = vst [vmem:[%s197 + $0x38] sm:$0xff] %v212
                %v214 = vld [vmem:[%s196 + $0x100] sm:$0xff]
                %215 = vst [vmem:[%s197 + $0x40] sm:$0xff] %v214
                %v216 = vld [vmem:[%s196 + $0x120] sm:$0xff]
                %217 = vst [vmem:[%s197 + $0x48] sm:$0xff] %v216
                %v218 = vld [vmem:[%s196 + $0x140] sm:$0xff]
                %219 = vst [vmem:[%s197 + $0x50] sm:$0xff] %v218
                %v220 = vld [vmem:[%s196 + $0x160] sm:$0xff]
                %221 = vst [vmem:[%s197 + $0x58] sm:$0xff] %v220
                %v222 = vld [vmem:[%s196 + $0x180] sm:$0xff]
                %223 = vst [vmem:[%s197 + $0x60] sm:$0xff] %v222
                %v224 = vld [vmem:[%s196 + $0x1a0] sm:$0xff]
                %225 = vst [vmem:[%s197 + $0x68] sm:$0xff] %v224
                %v226 = vld [vmem:[%s196 + $0x1c0] sm:$0xff]
                %227 = vst [vmem:[%s197 + $0x70] sm:$0xff] %v226
                %v228 = vld [vmem:[%s196 + $0x1e0] sm:$0xff]
                %229 = vst [vmem:[%s197 + $0x78] sm:$0xff] %v228
                %v230 = vld [vmem:[%s196 + $0x200] sm:$0xff]
                %231 = vst [vmem:[%s197 + $0x80] sm:$0xff] %v230
                %v232 = vld [vmem:[%s196 + $0x220] sm:$0xff]
                %233 = vst [vmem:[%s197 + $0x88] sm:$0xff] %v232
                %v234 = vld [vmem:[%s196 + $0x240] sm:$0xff]
                %235 = vst [vmem:[%s197 + $0x90] sm:$0xff] %v234
                %v236 = vld [vmem:[%s196 + $0x260] sm:$0xff]
                %237 = vst [vmem:[%s197 + $0x98] sm:$0xff] %v236
                %v238 = vld [vmem:[%s196 + $0x280] sm:$0xff]
                %239 = vst [vmem:[%s197 + $0xa0] sm:$0xff] %v238
                %v240 = vld [vmem:[%s196 + $0x2a0] sm:$0xff]
                %241 = vst [vmem:[%s197 + $0xa8] sm:$0xff] %v240
                %v242 = vld [vmem:[%s196 + $0x2c0] sm:$0xff]
                %243 = vst [vmem:[%s197 + $0xb0] sm:$0xff] %v242
                %v244 = vld [vmem:[%s196 + $0x2e0] sm:$0xff]
                %245 = vst [vmem:[%s197 + $0xb8] sm:$0xff] %v244
                %v246 = vld [vmem:[%s196 + $0x300] sm:$0xff]
                %247 = vst [vmem:[%s197 + $0xc0] sm:$0xff] %v246
                %v248 = vld [vmem:[%s196 + $0x320] sm:$0xff]
                %249 = vst [vmem:[%s197 + $0xc8] sm:$0xff] %v248
                %v250 = vld [vmem:[%s196 + $0x340] sm:$0xff]
                %251 = vst [vmem:[%s197 + $0xd0] sm:$0xff] %v250
                %v252 = vld [vmem:[%s196 + $0x360] sm:$0xff]
                %253 = vst [vmem:[%s197 + $0xd8] sm:$0xff] %v252
                %v254 = vld [vmem:[%s196 + $0x380] sm:$0xff]
                %255 = vst [vmem:[%s197 + $0xe0] sm:$0xff] %v254
                %v256 = vld [vmem:[%s196 + $0x3a0] sm:$0xff]
                %257 = vst [vmem:[%s197 + $0xe8] sm:$0xff] %v256
                %v258 = vld [vmem:[%s196 + $0x3c0] sm:$0xff]
                %259 = vst [vmem:[%s197 + $0xf0] sm:$0xff] %v258
                %v260 = vld [vmem:[%s196 + $0x3e0] sm:$0xff]
                %261 = vst [vmem:[%s197 + $0xf8] sm:$0xff] %v260
                %v262 = vld [vmem:[%s196 + $0x400] sm:$0xff]
                %263 = vst [vmem:[%s197 + $0x100] sm:$0xff] %v262
                %v264 = vld [vmem:[%s196 + $0x420] sm:$0xff]
                %265 = vst [vmem:[%s197 + $0x108] sm:$0xff] %v264
                %v266 = vld [vmem:[%s196 + $0x440] sm:$0xff]
                %267 = vst [vmem:[%s197 + $0x110] sm:$0xff] %v266
                %v268 = vld [vmem:[%s196 + $0x460] sm:$0xff]
                %269 = vst [vmem:[%s197 + $0x118] sm:$0xff] %v268
                %v270 = vld [vmem:[%s196 + $0x480] sm:$0xff]
                %271 = vst [vmem:[%s197 + $0x120] sm:$0xff] %v270
                %v272 = vld [vmem:[%s196 + $0x4a0] sm:$0xff]
                %273 = vst [vmem:[%s197 + $0x128] sm:$0xff] %v272
                %v274 = vld [vmem:[%s196 + $0x4c0] sm:$0xff]
                %275 = vst [vmem:[%s197 + $0x130] sm:$0xff] %v274
                %v276 = vld [vmem:[%s196 + $0x4e0] sm:$0xff]
                %277 = vst [vmem:[%s197 + $0x138] sm:$0xff] %v276
                %v278 = vld [vmem:[%s196 + $0x500] sm:$0xff]
                %279 = vst [vmem:[%s197 + $0x140] sm:$0xff] %v278
                %v280 = vld [vmem:[%s196 + $0x520] sm:$0xff]
                %281 = vst [vmem:[%s197 + $0x148] sm:$0xff] %v280
                %v282 = vld [vmem:[%s196 + $0x540] sm:$0xff]
                %283 = vst [vmem:[%s197 + $0x150] sm:$0xff] %v282
                %v284 = vld [vmem:[%s196 + $0x560] sm:$0xff]
                %285 = vst [vmem:[%s197 + $0x158] sm:$0xff] %v284
                %v286 = vld [vmem:[%s196 + $0x580] sm:$0xff]
                %287 = vst [vmem:[%s197 + $0x160] sm:$0xff] %v286
                %v288 = vld [vmem:[%s196 + $0x5a0] sm:$0xff]
                %289 = vst [vmem:[%s197 + $0x168] sm:$0xff] %v288
                %v290 = vld [vmem:[%s196 + $0x5c0] sm:$0xff]
                %291 = vst [vmem:[%s197 + $0x170] sm:$0xff] %v290
                %v292 = vld [vmem:[%s196 + $0x5e0] sm:$0xff]
                %293 = vst [vmem:[%s197 + $0x178] sm:$0xff] %v292
                %v294 = vld [vmem:[%s196 + $0x600] sm:$0xff]
                %295 = vst [vmem:[%s197 + $0x180] sm:$0xff] %v294
                %v296 = vld [vmem:[%s196 + $0x620] sm:$0xff]
                %297 = vst [vmem:[%s197 + $0x188] sm:$0xff] %v296
                %v298 = vld [vmem:[%s196 + $0x640] sm:$0xff]
                %299 = vst [vmem:[%s197 + $0x190] sm:$0xff] %v298
                %v300 = vld [vmem:[%s196 + $0x660] sm:$0xff]
                %301 = vst [vmem:[%s197 + $0x198] sm:$0xff] %v300
                %v302 = vld [vmem:[%s196 + $0x680] sm:$0xff]
                %303 = vst [vmem:[%s197 + $0x1a0] sm:$0xff] %v302
                %v304 = vld [vmem:[%s196 + $0x6a0] sm:$0xff]
                %305 = vst [vmem:[%s197 + $0x1a8] sm:$0xff] %v304
                %v306 = vld [vmem:[%s196 + $0x6c0] sm:$0xff]
                %307 = vst [vmem:[%s197 + $0x1b0] sm:$0xff] %v306
                %v308 = vld [vmem:[%s196 + $0x6e0] sm:$0xff]
                %309 = vst [vmem:[%s197 + $0x1b8] sm:$0xff] %v308
                %v310 = vld [vmem:[%s196 + $0x700] sm:$0xff]
                %311 = vst [vmem:[%s197 + $0x1c0] sm:$0xff] %v310
                %v312 = vld [vmem:[%s196 + $0x720] sm:$0xff]
                %313 = vst [vmem:[%s197 + $0x1c8] sm:$0xff] %v312
                %v314 = vld [vmem:[%s196 + $0x740] sm:$0xff]
                %315 = vst [vmem:[%s197 + $0x1d0] sm:$0xff] %v314
                %v316 = vld [vmem:[%s196 + $0x760] sm:$0xff]
                %317 = vst [vmem:[%s197 + $0x1d8] sm:$0xff] %v316
                %v318 = vld [vmem:[%s196 + $0x780] sm:$0xff]
                %319 = vst [vmem:[%s197 + $0x1e0] sm:$0xff] %v318
                %v320 = vld [vmem:[%s196 + $0x7a0] sm:$0xff]
                %321 = vst [vmem:[%s197 + $0x1e8] sm:$0xff] %v320
                %v322 = vld [vmem:[%s196 + $0x7c0] sm:$0xff]
                %323 = vst [vmem:[%s197 + $0x1f0] sm:$0xff] %v322
                %v324 = vld [vmem:[%s196 + $0x7e0] sm:$0xff]
                %325 = vst [vmem:[%s197 + $0x1f8] sm:$0xff] %v324
              $region41: #{discriminator_forward.10} parent=35 // loop_footer
                %s195 = sadd.s32 1, %s191
              $region42: #{discriminator_forward.10} parent=35 // loop_footer_branch
                %190 = sbr.rel target = $region38
              $region43: #{discriminator_forward.10} parent=35 // loop_exit
                _
            $region36: #{discriminator_forward.10} parent=27 // pred_fallthru
              _
          $region28: #{discriminator_forward.10} parent=23 // pred_fallthru
            _
          %466 = vnop
        $region24: #{discriminator_forward.10} parent=15 // pred_fallthru
          _
        // Predicated region
        $region59: #{discriminator_forward.10} parent=15 // pred_check
          %p467 = pneg %p104
        $region60: #{discriminator_forward.10} parent=15 // pred_check_branch
          %469 = sbr.rel (%p467) target = $region62
        $region61: #{discriminator_forward.10} parent=15 // pred_region
          %s470 = smul.u32 2, %s17
          %p471 = scmp.lt.s32.totalorder %s470, 7
          %s472 = scalar_select %p471, %s470, 7
          %s473 = scalar_lea.vmem %s2, %s472
          %s474 = smul.u32 2, %s17
        $region62: #{discriminator_forward.10} parent=15 // pred_fallthru
          _
      $region16: #{discriminator_forward.10} parent=5 // pred_fallthru
        _
      %p475 = scmp.le.s32.totalorder 1, %s9
      %p476 = scmp.lt.s32.totalorder %s9, 33
      %p477 = pnand %p475, %p476
      %p478 = pneg %p477
      // Predicated region
      $region63: #{discriminator_forward.10} parent=5 // pred_check
        _
      $region64: #{discriminator_forward.10} parent=5 // pred_check_branch
        %480 = sbr.rel (%p477) target = $region66
      $region65: #{discriminator_forward.10} parent=5 // pred_region
        %s481 = ssub.s32 %s9, 1
        %s482 = sand.u32 %s71, 1
        %s483 = sand.u32 %s71, 1
        %s484 = smul.addr %s483, 512
        %s485 = scalar_lea.vmem [#allocation3], %s484
        // Predicated region
        $region67: #{discriminator_forward.10} parent=65 // pred_check
          %p486 = pneg %p84
        $region68: #{discriminator_forward.10} parent=65 // pred_check_branch
          %488 = sbr.rel (%p486) target = $region70
        $region69: #{discriminator_forward.10} parent=65 // pred_region
          _
        $region70: #{discriminator_forward.10} parent=65 // pred_fallthru
          _
        %s489 = smul.u32 4, %s21
        %p490 = scmp.lt.s32.totalorder %s19, 0
        %s491 = scalar_select %p490, %s19, 0
        %p492 = scmp.lt.s32.totalorder %s489, 31
        %s493 = scalar_select %p492, %s489, 31
        %s494 = smul.addr %s491, 32
        %s495 = sadd.s32 %s493, %s494
        %s496 = smul.addr %s495, 4
        %s497 = scalar_lea.vmem %s0, %s496
        %p498 = pneg %p56
        %p499 = pneg %p53
        %s500 = sand.u32 %s71, 1
        %s501 = sand.u32 %s71, 1
        %s502 = smul.addr %s501, 512
        %s503 = scalar_lea.vmem [#allocation3], %s502
        %p504 = pneg %p84
        %p505 = pneg %p81
        %s506 = smul.u32 2, %s20
        %p507 = scmp.lt.s32.totalorder %s506, 7
        %s508 = scalar_select %p507, %s506, 7
        %s509 = scalar_lea.vmem %s2, %s508
        %p510 = pneg %p110
        %p511 = pneg %p107
        %p512 = pneg %p138
        %p513 = pneg %p135
        %s514 = smul.u32 2, %s20
        %p515 = scmp.lt.s32.totalorder %s19, 0
        %s516 = scalar_select %p515, %s19, 0
        %p517 = scmp.lt.s32.totalorder %s514, 7
        %s518 = scalar_select %p517, %s514, 7
        %s519 = smul.addr %s516, 8
        %s520 = sadd.s32 %s518, %s519
        %s521 = smul.addr %s520, 8
        %s522 = scalar_lea.vmem %s3, %s521
        %s523 = smul.u32 4, %s21
        %p524 = scmp.lt.s32.totalorder %s19, 0
        %s525 = scalar_select %p524, %s19, 0
        %p526 = scmp.lt.s32.totalorder %s523, 31
        %s527 = scalar_select %p526, %s523, 31
        %s528 = smul.addr %s525, 32
        %s529 = sadd.s32 %s527, %s528
        %s530 = smul.addr %s529, 4
        %s531 = scalar_lea.vmem %s0, %s530
        %s532 = smul.u32 4, %s21
        %s533 = smul.u32 64, %s21
        %s534 = smul.u32 2, %s20
        %s535 = smul.u32 2, %s20
        %p536 = scmp.lt.s32.totalorder %s535, 7
        %s537 = scalar_select %p536, %s535, 7
        %s538 = scalar_lea.vmem %s2, %s537
        %s539 = smul.u32 2, %s20
        %s540 = smul.u32 2, %s20
        %p541 = scmp.lt.s32.totalorder %s19, 0
        %s542 = scalar_select %p541, %s19, 0
        %p543 = scmp.lt.s32.totalorder %s540, 7
        %s544 = scalar_select %p543, %s540, 7
        %s545 = smul.addr %s542, 8
        %s546 = sadd.s32 %s544, %s545
        %s547 = smul.addr %s546, 8
        %s548 = scalar_lea.vmem %s3, %s547
        %s549 = smul.u32 2, %s20
        %p550 = scmp.eq.s32.totalorder %s21, 0
        // Predicated region
        $region71: #{discriminator_forward.10} parent=65 // pred_check
          %p551 = pneg %p550
        $region72: #{discriminator_forward.10} parent=65 // pred_check_branch
          %553 = sbr.rel (%p551) target = $region74
        $region73: #{discriminator_forward.10} parent=65 // pred_region
          %554 = vst [vmem:[#allocation2] sm:$0xff] 0.0
          %555 = vst [vmem:[#allocation2 + $0x8] sm:$0xff] 0.0
        $region74: #{discriminator_forward.10} parent=65 // pred_fallthru
          _
        %v556 = vld [vmem:[#allocation2] sm:$0xff]
        %v557 = vld [vmem:[#allocation2 + $0x8] sm:$0xff]
        %v558 = vld [vmem:[%s531] sm:$0xff]
        %v559 = vld [vmem:[%s531 + $0x8] sm:$0xff]
        %v560 = vld [vmem:[%s485] sm:$0xff]
        %v561 = vld [vmem:[%s485 + $0x8] sm:$0xff]
        %v562 = vld [vmem:[%s485 + $0x10] sm:$0xff]
        %v563 = vld [vmem:[%s485 + $0x18] sm:$0xff]
        %v564 = vld [vmem:[%s485 + $0x20] sm:$0xff]
        %v565 = vld [vmem:[%s485 + $0x28] sm:$0xff]
        %v566 = vld [vmem:[%s485 + $0x30] sm:$0xff]
        %v567 = vld [vmem:[%s485 + $0x38] sm:$0xff]
        %v568 = vld [vmem:[%s485 + $0x40] sm:$0xff]
        %v569 = vld [vmem:[%s485 + $0x48] sm:$0xff]
        %v570 = vld [vmem:[%s485 + $0x50] sm:$0xff]
        %v571 = vld [vmem:[%s485 + $0x58] sm:$0xff]
        %v572 = vld [vmem:[%s485 + $0x60] sm:$0xff]
        %v573 = vld [vmem:[%s485 + $0x68] sm:$0xff]
        %v574 = vld [vmem:[%s485 + $0x70] sm:$0xff]
        %v575 = vld [vmem:[%s485 + $0x78] sm:$0xff]
        %v576 = vld [vmem:[%s485 + $0x80] sm:$0xff]
        %v577 = vld [vmem:[%s485 + $0x88] sm:$0xff]
        %v578 = vld [vmem:[%s485 + $0x90] sm:$0xff]
        %v579 = vld [vmem:[%s485 + $0x98] sm:$0xff]
        %v580 = vld [vmem:[%s485 + $0xa0] sm:$0xff]
        %v581 = vld [vmem:[%s485 + $0xa8] sm:$0xff]
        %v582 = vld [vmem:[%s485 + $0xb0] sm:$0xff]
        %v583 = vld [vmem:[%s485 + $0xb8] sm:$0xff]
        %v584 = vld [vmem:[%s485 + $0xc0] sm:$0xff]
        %v585 = vld [vmem:[%s485 + $0xc8] sm:$0xff]
        %v586 = vld [vmem:[%s485 + $0xd0] sm:$0xff]
        %v587 = vld [vmem:[%s485 + $0xd8] sm:$0xff]
        %v588 = vld [vmem:[%s485 + $0xe0] sm:$0xff]
        %v589 = vld [vmem:[%s485 + $0xe8] sm:$0xff]
        %v590 = vld [vmem:[%s485 + $0xf0] sm:$0xff]
        %v591 = vld [vmem:[%s485 + $0xf8] sm:$0xff]
        %v592 = vld [vmem:[%s485 + $0x100] sm:$0xff]
        %v593 = vld [vmem:[%s485 + $0x108] sm:$0xff]
        %v594 = vld [vmem:[%s485 + $0x110] sm:$0xff]
        %v595 = vld [vmem:[%s485 + $0x118] sm:$0xff]
        %v596 = vld [vmem:[%s485 + $0x120] sm:$0xff]
        %v597 = vld [vmem:[%s485 + $0x128] sm:$0xff]
        %v598 = vld [vmem:[%s485 + $0x130] sm:$0xff]
        %v599 = vld [vmem:[%s485 + $0x138] sm:$0xff]
        %v600 = vld [vmem:[%s485 + $0x140] sm:$0xff]
        %v601 = vld [vmem:[%s485 + $0x148] sm:$0xff]
        %v602 = vld [vmem:[%s485 + $0x150] sm:$0xff]
        %v603 = vld [vmem:[%s485 + $0x158] sm:$0xff]
        %v604 = vld [vmem:[%s485 + $0x160] sm:$0xff]
        %v605 = vld [vmem:[%s485 + $0x168] sm:$0xff]
        %v606 = vld [vmem:[%s485 + $0x170] sm:$0xff]
        %v607 = vld [vmem:[%s485 + $0x178] sm:$0xff]
        %v608 = vld [vmem:[%s485 + $0x180] sm:$0xff]
        %v609 = vld [vmem:[%s485 + $0x188] sm:$0xff]
        %v610 = vld [vmem:[%s485 + $0x190] sm:$0xff]
        %v611 = vld [vmem:[%s485 + $0x198] sm:$0xff]
        %v612 = vld [vmem:[%s485 + $0x1a0] sm:$0xff]
        %v613 = vld [vmem:[%s485 + $0x1a8] sm:$0xff]
        %v614 = vld [vmem:[%s485 + $0x1b0] sm:$0xff]
        %v615 = vld [vmem:[%s485 + $0x1b8] sm:$0xff]
        %v616 = vld [vmem:[%s485 + $0x1c0] sm:$0xff]
        %v617 = vld [vmem:[%s485 + $0x1c8] sm:$0xff]
        %v618 = vld [vmem:[%s485 + $0x1d0] sm:$0xff]
        %v619 = vld [vmem:[%s485 + $0x1d8] sm:$0xff]
        %v620 = vld [vmem:[%s485 + $0x1e0] sm:$0xff]
        %v621 = vld [vmem:[%s485 + $0x1e8] sm:$0xff]
        %v622 = vld [vmem:[%s485 + $0x1f0] sm:$0xff]
        %v623 = vld [vmem:[%s485 + $0x1f8] sm:$0xff]
        %v626 = vunpack.c.l.b16 %v558
        %v627 = vunpack.c.h.b16 %v558
        %v628 = vunpack.c.l.b16 %v559
        %v629 = vunpack.c.h.b16 %v559
        %v630 = vpack.c.b16 %v626, %v626
        %v631 = vpack.c.b16 %v627, %v627
        %v632 = vpack.c.b16 %v628, %v628
        %v633 = vpack.c.b16 %v629, %v629
        %v702 = vunpack.c.l.b16 %v560
        %v703 = vunpack.c.h.b16 %v560
        %v704 = vunpack.c.l.b16 %v561
        %v705 = vunpack.c.h.b16 %v561
        %v706 = vunpack.c.l.b16 %v562
        %v707 = vunpack.c.h.b16 %v562
        %v708 = vunpack.c.l.b16 %v563
        %v709 = vunpack.c.h.b16 %v563
        %v710 = vunpack.c.l.b16 %v564
        %v711 = vunpack.c.h.b16 %v564
        %v712 = vunpack.c.l.b16 %v565
        %v713 = vunpack.c.h.b16 %v565
        %v714 = vunpack.c.l.b16 %v566
        %v715 = vunpack.c.h.b16 %v566
        %v716 = vunpack.c.l.b16 %v567
        %v717 = vunpack.c.h.b16 %v567
        %v718 = vunpack.c.l.b16 %v568
        %v719 = vunpack.c.h.b16 %v568
        %v720 = vunpack.c.l.b16 %v569
        %v721 = vunpack.c.h.b16 %v569
        %v722 = vunpack.c.l.b16 %v570
        %v723 = vunpack.c.h.b16 %v570
        %v724 = vunpack.c.l.b16 %v571
        %v725 = vunpack.c.h.b16 %v571
        %v726 = vunpack.c.l.b16 %v572
        %v727 = vunpack.c.h.b16 %v572
        %v728 = vunpack.c.l.b16 %v573
        %v729 = vunpack.c.h.b16 %v573
        %v730 = vunpack.c.l.b16 %v574
        %v731 = vunpack.c.h.b16 %v574
        %v732 = vunpack.c.l.b16 %v575
        %v733 = vunpack.c.h.b16 %v575
        %v734 = vunpack.c.l.b16 %v576
        %v735 = vunpack.c.h.b16 %v576
        %v736 = vunpack.c.l.b16 %v577
        %v737 = vunpack.c.h.b16 %v577
        %v738 = vunpack.c.l.b16 %v578
        %v739 = vunpack.c.h.b16 %v578
        %v740 = vunpack.c.l.b16 %v579
        %v741 = vunpack.c.h.b16 %v579
        %v742 = vunpack.c.l.b16 %v580
        %v743 = vunpack.c.h.b16 %v580
        %v744 = vunpack.c.l.b16 %v581
        %v745 = vunpack.c.h.b16 %v581
        %v746 = vunpack.c.l.b16 %v582
        %v747 = vunpack.c.h.b16 %v582
        %v748 = vunpack.c.l.b16 %v583
        %v749 = vunpack.c.h.b16 %v583
        %v750 = vunpack.c.l.b16 %v584
        %v751 = vunpack.c.h.b16 %v584
        %v752 = vunpack.c.l.b16 %v585
        %v753 = vunpack.c.h.b16 %v585
        %v754 = vunpack.c.l.b16 %v586
        %v755 = vunpack.c.h.b16 %v586
        %v756 = vunpack.c.l.b16 %v587
        %v757 = vunpack.c.h.b16 %v587
        %v758 = vunpack.c.l.b16 %v588
        %v759 = vunpack.c.h.b16 %v588
        %v760 = vunpack.c.l.b16 %v589
        %v761 = vunpack.c.h.b16 %v589
        %v762 = vunpack.c.l.b16 %v590
        %v763 = vunpack.c.h.b16 %v590
        %v764 = vunpack.c.l.b16 %v591
        %v765 = vunpack.c.h.b16 %v591
        %v766 = vunpack.c.l.b16 %v592
        %v767 = vunpack.c.h.b16 %v592
        %v768 = vunpack.c.l.b16 %v593
        %v769 = vunpack.c.h.b16 %v593
        %v770 = vunpack.c.l.b16 %v594
        %v771 = vunpack.c.h.b16 %v594
        %v772 = vunpack.c.l.b16 %v595
        %v773 = vunpack.c.h.b16 %v595
        %v774 = vunpack.c.l.b16 %v596
        %v775 = vunpack.c.h.b16 %v596
        %v776 = vunpack.c.l.b16 %v597
        %v777 = vunpack.c.h.b16 %v597
        %v778 = vunpack.c.l.b16 %v598
        %v779 = vunpack.c.h.b16 %v598
        %v780 = vunpack.c.l.b16 %v599
        %v781 = vunpack.c.h.b16 %v599
        %v782 = vunpack.c.l.b16 %v600
        %v783 = vunpack.c.h.b16 %v600
        %v784 = vunpack.c.l.b16 %v601
        %v785 = vunpack.c.h.b16 %v601
        %v786 = vunpack.c.l.b16 %v602
        %v787 = vunpack.c.h.b16 %v602
        %v788 = vunpack.c.l.b16 %v603
        %v789 = vunpack.c.h.b16 %v603
        %v790 = vunpack.c.l.b16 %v604
        %v791 = vunpack.c.h.b16 %v604
        %v792 = vunpack.c.l.b16 %v605
        %v793 = vunpack.c.h.b16 %v605
        %v794 = vunpack.c.l.b16 %v606
        %v795 = vunpack.c.h.b16 %v606
        %v796 = vunpack.c.l.b16 %v607
        %v797 = vunpack.c.h.b16 %v607
        %v798 = vunpack.c.l.b16 %v608
        %v799 = vunpack.c.h.b16 %v608
        %v800 = vunpack.c.l.b16 %v609
        %v801 = vunpack.c.h.b16 %v609
        %v802 = vunpack.c.l.b16 %v610
        %v803 = vunpack.c.h.b16 %v610
        %v804 = vunpack.c.l.b16 %v611
        %v805 = vunpack.c.h.b16 %v611
        %v806 = vunpack.c.l.b16 %v612
        %v807 = vunpack.c.h.b16 %v612
        %v808 = vunpack.c.l.b16 %v613
        %v809 = vunpack.c.h.b16 %v613
        %v810 = vunpack.c.l.b16 %v614
        %v811 = vunpack.c.h.b16 %v614
        %v812 = vunpack.c.l.b16 %v615
        %v813 = vunpack.c.h.b16 %v615
        %v814 = vunpack.c.l.b16 %v616
        %v815 = vunpack.c.h.b16 %v616
        %v816 = vunpack.c.l.b16 %v617
        %v817 = vunpack.c.h.b16 %v617
        %v818 = vunpack.c.l.b16 %v618
        %v819 = vunpack.c.h.b16 %v618
        %v820 = vunpack.c.l.b16 %v619
        %v821 = vunpack.c.h.b16 %v619
        %v822 = vunpack.c.l.b16 %v620
        %v823 = vunpack.c.h.b16 %v620
        %v824 = vunpack.c.l.b16 %v621
        %v825 = vunpack.c.h.b16 %v621
        %v826 = vunpack.c.l.b16 %v622
        %v827 = vunpack.c.h.b16 %v622
        %v828 = vunpack.c.l.b16 %v623
        %v829 = vunpack.c.h.b16 %v623
        %v830 = vpack.c.b16 %v704, %v702
        %v831 = vpack.c.b16 %v705, %v703
        %v832 = vpack.c.b16 %v708, %v706
        %v833 = vpack.c.b16 %v709, %v707
        %v834 = vpack.c.b16 %v712, %v710
        %v835 = vpack.c.b16 %v713, %v711
        %v836 = vpack.c.b16 %v716, %v714
        %v837 = vpack.c.b16 %v717, %v715
        %v838 = vpack.c.b16 %v720, %v718
        %v839 = vpack.c.b16 %v721, %v719
        %v840 = vpack.c.b16 %v724, %v722
        %v841 = vpack.c.b16 %v725, %v723
        %v842 = vpack.c.b16 %v728, %v726
        %v843 = vpack.c.b16 %v729, %v727
        %v844 = vpack.c.b16 %v732, %v730
        %v845 = vpack.c.b16 %v733, %v731
        %v846 = vpack.c.b16 %v736, %v734
        %v847 = vpack.c.b16 %v737, %v735
        %v848 = vpack.c.b16 %v740, %v738
        %v849 = vpack.c.b16 %v741, %v739
        %v850 = vpack.c.b16 %v744, %v742
        %v851 = vpack.c.b16 %v745, %v743
        %v852 = vpack.c.b16 %v748, %v746
        %v853 = vpack.c.b16 %v749, %v747
        %v854 = vpack.c.b16 %v752, %v750
        %v855 = vpack.c.b16 %v753, %v751
        %v856 = vpack.c.b16 %v756, %v754
        %v857 = vpack.c.b16 %v757, %v755
        %v858 = vpack.c.b16 %v760, %v758
        %v859 = vpack.c.b16 %v761, %v759
        %v860 = vpack.c.b16 %v764, %v762
        %v861 = vpack.c.b16 %v765, %v763
        %v862 = vpack.c.b16 %v768, %v766
        %v863 = vpack.c.b16 %v769, %v767
        %v864 = vpack.c.b16 %v772, %v770
        %v865 = vpack.c.b16 %v773, %v771
        %v866 = vpack.c.b16 %v776, %v774
        %v867 = vpack.c.b16 %v777, %v775
        %v868 = vpack.c.b16 %v780, %v778
        %v869 = vpack.c.b16 %v781, %v779
        %v870 = vpack.c.b16 %v784, %v782
        %v871 = vpack.c.b16 %v785, %v783
        %v872 = vpack.c.b16 %v788, %v786
        %v873 = vpack.c.b16 %v789, %v787
        %v874 = vpack.c.b16 %v792, %v790
        %v875 = vpack.c.b16 %v793, %v791
        %v876 = vpack.c.b16 %v796, %v794
        %v877 = vpack.c.b16 %v797, %v795
        %v878 = vpack.c.b16 %v800, %v798
        %v879 = vpack.c.b16 %v801, %v799
        %v880 = vpack.c.b16 %v804, %v802
        %v881 = vpack.c.b16 %v805, %v803
        %v882 = vpack.c.b16 %v808, %v806
        %v883 = vpack.c.b16 %v809, %v807
        %v884 = vpack.c.b16 %v812, %v810
        %v885 = vpack.c.b16 %v813, %v811
        %v886 = vpack.c.b16 %v816, %v814
        %v887 = vpack.c.b16 %v817, %v815
        %v888 = vpack.c.b16 %v820, %v818
        %v889 = vpack.c.b16 %v821, %v819
        %v890 = vpack.c.b16 %v824, %v822
        %v891 = vpack.c.b16 %v825, %v823
        %v892 = vpack.c.b16 %v828, %v826
        %v893 = vpack.c.b16 %v829, %v827
        %958 = vmatprep.subr.bf16.mxu0 %v831
        %959 = vmatpush1.bf16.msra.mxu0 %v830
        %960 = vmatprep.subr.bf16.mxu0 %v833
        %961 = vmatpush1.bf16.msra.mxu0 %v832
        %962 = vmatprep.subr.bf16.mxu0 %v835
        %963 = vmatpush1.bf16.msra.mxu0 %v834
        %964 = vmatprep.subr.bf16.mxu0 %v837
        %965 = vmatpush1.bf16.msra.mxu0 %v836
        %966 = vmatprep.subr.bf16.mxu0 %v839
        %967 = vmatpush1.bf16.msra.mxu0 %v838
        %968 = vmatprep.subr.bf16.mxu0 %v841
        %969 = vmatpush1.bf16.msra.mxu0 %v840
        %970 = vmatprep.subr.bf16.mxu0 %v843
        %971 = vmatpush1.bf16.msra.mxu0 %v842
        %972 = vmatprep.subr.bf16.mxu0 %v845
        %973 = vmatpush1.bf16.msra.mxu0 %v844
        %974 = vmatprep.subr.bf16.mxu0 %v847
        %975 = vmatpush1.bf16.msra.mxu0 %v846
        %976 = vmatprep.subr.bf16.mxu0 %v849
        %977 = vmatpush1.bf16.msra.mxu0 %v848
        %978 = vmatprep.subr.bf16.mxu0 %v851
        %979 = vmatpush1.bf16.msra.mxu0 %v850
        %980 = vmatprep.subr.bf16.mxu0 %v853
        %981 = vmatpush1.bf16.msra.mxu0 %v852
        %982 = vmatprep.subr.bf16.mxu0 %v855
        %983 = vmatpush1.bf16.msra.mxu0 %v854
        %984 = vmatprep.subr.bf16.mxu0 %v857
        %985 = vmatpush1.bf16.msra.mxu0 %v856
        %986 = vmatprep.subr.bf16.mxu0 %v859
        %987 = vmatpush1.bf16.msra.mxu0 %v858
        %988 = vmatprep.subr.bf16.mxu0 %v861
        %989 = vmatpush1.bf16.msra.mxu0 %v860
        %990 = vmatprep.mubr.bf16.mxu0 %v631
        %991 = vmatmul.mubr.bf16.gmra.mrb[0].mxu0 %v630
        %v992 = vpop.f32.mrb[0].mxu0
        %v993 = vadd.f32 0.0, %v992
        %v994 = vpop.f32.mrb[0].mxu0
        %v995 = vadd.f32 0.0, %v994
        %v996 = vpop.f32.mrb[0].mxu0
        %v997 = vpop.f32.mrb[0].mxu0
        %998 = vdwg.mxu0
        %999 = vmatprep.subr.bf16.mxu0 %v863
        %1000 = vmatpush1.bf16.msra.mxu0 %v862
        %1001 = vmatprep.subr.bf16.mxu0 %v865
        %1002 = vmatpush1.bf16.msra.mxu0 %v864
        %1003 = vmatprep.subr.bf16.mxu0 %v867
        %1004 = vmatpush1.bf16.msra.mxu0 %v866
        %1005 = vmatprep.subr.bf16.mxu0 %v869
        %1006 = vmatpush1.bf16.msra.mxu0 %v868
        %1007 = vmatprep.subr.bf16.mxu0 %v871
        %1008 = vmatpush1.bf16.msra.mxu0 %v870
        %1009 = vmatprep.subr.bf16.mxu0 %v873
        %1010 = vmatpush1.bf16.msra.mxu0 %v872
        %1011 = vmatprep.subr.bf16.mxu0 %v875
        %1012 = vmatpush1.bf16.msra.mxu0 %v874
        %1013 = vmatprep.subr.bf16.mxu0 %v877
        %1014 = vmatpush1.bf16.msra.mxu0 %v876
        %1015 = vmatprep.subr.bf16.mxu0 %v879
        %1016 = vmatpush1.bf16.msra.mxu0 %v878
        %1017 = vmatprep.subr.bf16.mxu0 %v881
        %1018 = vmatpush1.bf16.msra.mxu0 %v880
        %1019 = vmatprep.subr.bf16.mxu0 %v883
        %1020 = vmatpush1.bf16.msra.mxu0 %v882
        %1021 = vmatprep.subr.bf16.mxu0 %v885
        %1022 = vmatpush1.bf16.msra.mxu0 %v884
        %1023 = vmatprep.subr.bf16.mxu0 %v887
        %1024 = vmatpush1.bf16.msra.mxu0 %v886
        %1025 = vmatprep.subr.bf16.mxu0 %v889
        %1026 = vmatpush1.bf16.msra.mxu0 %v888
        %1027 = vmatprep.subr.bf16.mxu0 %v891
        %1028 = vmatpush1.bf16.msra.mxu0 %v890
        %1029 = vmatprep.subr.bf16.mxu0 %v893
        %1030 = vmatpush1.bf16.msra.mxu0 %v892
        %1031 = vmatprep.mubr.bf16.mxu0 %v633
        %1032 = vmatmul.mubr.bf16.gmra.mrb[0].mxu0 %v632
        %v1033 = vpop.f32.mrb[0].mxu0
        %v1034 = vadd.f32 %v993, %v1033
        %v1035 = vpop.f32.mrb[0].mxu0
        %v1036 = vadd.f32 %v995, %v1035
        %v1037 = vpop.f32.mrb[0].mxu0
        %v1038 = vpop.f32.mrb[0].mxu0
        %1039 = vdwg.mxu0
        %v1040 = vadd.f32 %v556, %v1034
        %v1041 = vadd.f32 %v557, %v1036
        %1042 = vst [vmem:[#allocation2] sm:$0xff] %v1040
        %1043 = vst [vmem:[#allocation2 + $0x8] sm:$0xff] %v1041
        %p1044 = scmp.eq.s32.totalorder %s21, 7
        // Predicated region
        $region75: #{discriminator_forward.10} parent=65 // pred_check
          %p1045 = pneg %p1044
        $region76: #{discriminator_forward.10} parent=65 // pred_check_branch
          %1047 = sbr.rel (%p1045) target = $region78
        $region77: #{discriminator_forward.10} parent=65 // pred_region
          %v1048 = vld [vmem:[#allocation2] sm:$0xff]
          %v1049 = vld [vmem:[#allocation2 + $0x8] sm:$0xff]
          %v1050 = vld [vmem:[%s538] sm:$0x3]
          %v1052 = vlaneseq
          %v1053 = vshrl.u32 %v1052, 7
          %v1054 = vsub.s32 0, %v1053
          %v1055 = vrot.slane %v1050, %v1054
          %v1056 = vlaneseq
          %v1057 = vshrl.u32 %v1056, 7
          %v1058 = vsub.s32 1, %v1057
          %v1059 = vrot.slane %v1050, %v1058
          %v1062 = vadd.f32 %v1048, %v1055
          %v1063 = vadd.f32 %v1049, %v1059
          %v1064 = vmul.f32 %v1062, 0.2
          %v1065 = vmul.f32 %v1063, 0.2
          %v1066 = vmax.f32 %v1062, %v1064
          %v1067 = vmax.f32 %v1063, %v1065
          %v1068 = vmul.f32 %v1066, 1.4142135
          %v1069 = vmul.f32 %v1067, 1.4142135
          %1070 = vst [vmem:[%s548] sm:$0xff] %v1068
          %1071 = vst [vmem:[%s548 + $0x8] sm:$0xff] %v1069
        $region78: #{discriminator_forward.10} parent=65 // pred_fallthru
          _
        %s1072 = smul.u32 2, %s20
        %p1073 = scmp.lt.s32.totalorder %s19, 0
        %s1074 = scalar_select %p1073, %s19, 0
        %p1075 = scmp.lt.s32.totalorder %s1072, 7
        %s1076 = scalar_select %p1075, %s1072, 7
        %s1077 = smul.addr %s1074, 8
        %s1078 = sadd.s32 %s1076, %s1077
        %s1079 = smul.addr %s1078, 8
        %s1080 = scalar_lea.vmem %s3, %s1079
        // Predicated region
        $region79: #{discriminator_forward.10} parent=65 // pred_check
          %p1081 = pneg %p135
        $region80: #{discriminator_forward.10} parent=65 // pred_check_branch
          %1083 = sbr.rel (%p1081) target = $region82
        $region81: #{discriminator_forward.10} parent=65 // pred_region
          %s1084 = smul.u32 2, %s20
        $region82: #{discriminator_forward.10} parent=65 // pred_fallthru
          _
      $region66: #{discriminator_forward.10} parent=5 // pred_fallthru
        _
      %p1085 = scmp.le.s32.totalorder 2, %s9
      // Predicated region
      $region83: #{discriminator_forward.10} parent=5 // pred_check
        %p1086 = pneg %p1085
      $region84: #{discriminator_forward.10} parent=5 // pred_check_branch
        %1088 = sbr.rel (%p1086) target = $region86
      $region85: #{discriminator_forward.10} parent=5 // pred_region
        %s1089 = ssub.s32 %s9, 2
        // Predicated region
        $region87: #{discriminator_forward.10} parent=85 // pred_check
          %p1090 = pneg %p141
        $region88: #{discriminator_forward.10} parent=85 // pred_check_branch
          %1092 = sbr.rel (%p1090) target = $region90
        $region89: #{discriminator_forward.10} parent=85 // pred_region
          %s1093 = smul.u32 2, %s23
          %p1094 = scmp.lt.s32.totalorder %s22, 0
          %s1095 = scalar_select %p1094, %s22, 0
          %p1096 = scmp.lt.s32.totalorder %s1093, 7
          %s1097 = scalar_select %p1096, %s1093, 7
          %s1098 = smul.addr %s1095, 8
          %s1099 = sadd.s32 %s1097, %s1098
          %s1100 = smul.addr %s1099, 8
          %s1101 = scalar_lea.vmem %s3, %s1100
        $region90: #{discriminator_forward.10} parent=85 // pred_fallthru
          _
      $region86: #{discriminator_forward.10} parent=5 // pred_fallthru
        _
    $region6: #{discriminator_forward.10} parent=1 // loop_footer
      %s13 = sadd.s32 1, %s9
    $region7: #{discriminator_forward.10} parent=1 // loop_footer_branch
      %8 = sbr.rel target = $region3
    $region8: #{discriminator_forward.10} parent=1 // loop_exit
      _

// kernel: discriminator_forward.13
$region0: #{discriminator_forward.13}
  #allocation0 [shape = 'u32[]', space=smem, size = 0x4, offset = 0x4, fixed_abs, tag = 'smem constant byte address 0x4 - core index']
  #allocation1 [shape = 'u32[144,128]{1,0:T(1,128)}', space=vmem, size = 0x12000, scoped, tag = 'internal scratch']
  #allocation2 [shape = 'f32[8,128]{1,0:T(8,128)}', space=vmem, size = 0x1000, scoped, tag = 'scratch operand']
  %s0 = inlined_call_operand.vmem [shape: bf16[8,1024], index: 0, kind: input, shape index: {}]
  %s1 = inlined_call_operand.vmem [shape: bf16[1024,128], index: 1, kind: input, shape index: {}]
  %s2 = inlined_call_operand.vmem [shape: f32[1,128], index: 2, kind: input, shape index: {}]
  %s3 = inlined_call_operand.vmem [shape: f32[8,128], index: 3, kind: output, shape index: {}]
  %s4 = sld [smem:[#allocation0]]
  $region53: #{discriminator_forward.13} parent=0
    _
  %s6 = ssub.s32 1, %s4
  %s7 = scalar_select 0, %s6, %s4
  loop: start=0, step=1, limit=4
  $region2: #{discriminator_forward.13} parent=0 // loop_pre_header
    _
  $region3: #{discriminator_forward.13} parent=0 // loop_header
    %s9 = sphi 0, %s13
    %p10 = scmp.ge.s32.totalorder %s9, 4
    %s16 = sphi 0, %s35
    %s17 = sphi 0, %s31
    %s18 = sphi 0, %s27
    %s19 = sphi 0, %s16
    %s20 = sphi 0, %s17
    %s21 = sphi 0, %s18
    %s22 = sphi 0, %s19
    %s23 = sphi 0, %s20
    %s24 = sphi 0, %s21
    %s40 = sphi 0, %s42
    %s43 = sphi 0, %s40
    %s44 = sphi 0, %s43
    %s60 = sphi 0, %s44
    %s68 = sphi 0, %s70
    %s71 = sphi 0, %s68
    %s72 = sphi 0, %s71
    %s88 = sphi 0, %s72
    %s94 = sphi 0, %s96
    %s97 = sphi 0, %s94
    %s98 = sphi 0, %s97
    %s114 = sphi 0, %s98
    %s122 = sphi 0, %s124
    %s125 = sphi 0, %s122
    %s126 = sphi 0, %s125
    %s142 = sphi 0, %s126
  $region4: #{discriminator_forward.13} parent=0 // loop_header_branch
    %12 = sbr.rel (%p10) target = $region8
  $region5: #{discriminator_forward.13} parent=0 // loop_body
    %s14 = ssub.s32 %s9, 1
    %s15 = ssub.s32 %s9, 2
    %s25 = sadd.s32 1, %s18
    %p26 = scmp.ge.s32.totalorder %s25, 2
    %s27 = scalar_select %p26, 0, %s25
    %s28 = sadd.s32 1, %s17
    %s29 = scalar_select %p26, %s28, %s17
    %p30 = scmp.ge.s32.totalorder %s29, 1
    %s31 = scalar_select %p30, 0, %s29
    %s32 = sadd.s32 1, %s16
    %s33 = scalar_select %p30, %s32, %s16
    %p34 = scmp.ge.s32.totalorder %s33, 1
    %s35 = scalar_select %p34, 0, %s33
    %s36 = ssub.s32 %s16, %s35
    %s37 = ssub.s32 %s18, %s27
    %s38 = sor.u32 %s36, %s37
    %p39 = scmp.eq.s32.totalorder %s38, 0
    %s41 = sadd.s32 %s40, 1
    %s42 = scalar_select %p39, %s40, %s41
    %p45 = pneg %p39
    %p46 = scmp.eq.s32.totalorder %s9, 1
    %p47 = por %p45, %p46
    %p48 = scmp.ne.s32.totalorder %s40, %s43
    %p49 = scmp.eq.s32.totalorder %s9, 0
    %p50 = por %p48, %p49
    %p51 = scmp.ne.s32.totalorder %s40, %s43
    %p52 = scmp.eq.s32.totalorder %s14, 1
    %p53 = por %p51, %p52
    %p54 = scmp.ne.s32.totalorder %s43, %s44
    %p55 = scmp.eq.s32.totalorder %s14, 0
    %p56 = por %p54, %p55
    %p57 = scmp.ne.s32.totalorder %s43, %s44
    %p58 = scmp.eq.s32.totalorder %s15, 1
    %p59 = por %p57, %p58
    %p61 = scmp.ne.s32.totalorder %s44, %s60
    %p62 = scmp.eq.s32.totalorder %s15, 0
    %p63 = por %p61, %p62
    %s64 = ssub.s32 %s18, %s27
    %s65 = ssub.s32 %s17, %s31
    %s66 = sor.u32 %s64, %s65
    %p67 = scmp.eq.s32.totalorder %s66, 0
    %s69 = sadd.s32 %s68, 1
    %s70 = scalar_select %p67, %s68, %s69
    %p73 = pneg %p67
    %p74 = scmp.eq.s32.totalorder %s9, 1
    %p75 = por %p73, %p74
    %p76 = scmp.ne.s32.totalorder %s68, %s71
    %p77 = scmp.eq.s32.totalorder %s9, 0
    %p78 = por %p76, %p77
    %p79 = scmp.ne.s32.totalorder %s68, %s71
    %p80 = scmp.eq.s32.totalorder %s14, 1
    %p81 = por %p79, %p80
    %p82 = scmp.ne.s32.totalorder %s71, %s72
    %p83 = scmp.eq.s32.totalorder %s14, 0
    %p84 = por %p82, %p83
    %p85 = scmp.ne.s32.totalorder %s71, %s72
    %p86 = scmp.eq.s32.totalorder %s15, 1
    %p87 = por %p85, %p86
    %p89 = scmp.ne.s32.totalorder %s72, %s88
    %p90 = scmp.eq.s32.totalorder %s15, 0
    %p91 = por %p89, %p90
    %s92 = ssub.s32 %s17, %s31
    %p93 = scmp.eq.s32.totalorder %s92, 0
    %s95 = sadd.s32 %s94, 1
    %s96 = scalar_select %p93, %s94, %s95
    %p99 = pneg %p93
    %p100 = scmp.eq.s32.totalorder %s9, 1
    %p101 = por %p99, %p100
    %p102 = scmp.ne.s32.totalorder %s94, %s97
    %p103 = scmp.eq.s32.totalorder %s9, 0
    %p104 = por %p102, %p103
    %p105 = scmp.ne.s32.totalorder %s94, %s97
    %p106 = scmp.eq.s32.totalorder %s14, 1
    %p107 = por %p105, %p106
    %p108 = scmp.ne.s32.totalorder %s97, %s98
    %p109 = scmp.eq.s32.totalorder %s14, 0
    %p110 = por %p108, %p109
    %p111 = scmp.ne.s32.totalorder %s97, %s98
    %p112 = scmp.eq.s32.totalorder %s15, 1
    %p113 = por %p111, %p112
    %p115 = scmp.ne.s32.totalorder %s98, %s114
    %p116 = scmp.eq.s32.totalorder %s15, 0
    %p117 = por %p115, %p116
    %s118 = ssub.s32 %s16, %s35
    %s119 = ssub.s32 %s17, %s31
    %s120 = sor.u32 %s118, %s119
    %p121 = scmp.eq.s32.totalorder %s120, 0
    %s123 = sadd.s32 %s122, 1
    %s124 = scalar_select %p121, %s122, %s123
    %p127 = pneg %p121
    %p128 = scmp.eq.s32.totalorder %s9, 1
    %p129 = por %p127, %p128
    %p130 = scmp.ne.s32.totalorder %s122, %s125
    %p131 = scmp.eq.s32.totalorder %s9, 0
    %p132 = por %p130, %p131
    %p133 = scmp.ne.s32.totalorder %s122, %s125
    %p134 = scmp.eq.s32.totalorder %s14, 1
    %p135 = por %p133, %p134
    %p136 = scmp.ne.s32.totalorder %s125, %s126
    %p137 = scmp.eq.s32.totalorder %s14, 0
    %p138 = por %p136, %p137
    %p139 = scmp.ne.s32.totalorder %s125, %s126
    %p140 = scmp.eq.s32.totalorder %s15, 1
    %p141 = por %p139, %p140
    %p143 = scmp.ne.s32.totalorder %s126, %s142
    %p144 = scmp.eq.s32.totalorder %s15, 0
    %p145 = por %p143, %p144
    %p146 = scmp.le.s32.totalorder 1, %s9
    %p147 = scmp.lt.s32.totalorder %s9, 3
    %p148 = pnand %p146, %p147
    %p149 = pneg %p148
    // Predicated region
    $region9: #{discriminator_forward.13} parent=5 // pred_check
      _
    $region10: #{discriminator_forward.13} parent=5 // pred_check_branch
      %151 = sbr.rel (%p148) target = $region12
    $region11: #{discriminator_forward.13} parent=5 // pred_region
      %s152 = ssub.s32 %s9, 1
      // Predicated region
      $region13: #{discriminator_forward.13} parent=11 // pred_check
        %p153 = pneg %p110
      $region14: #{discriminator_forward.13} parent=11 // pred_check_branch
        %155 = sbr.rel (%p153) target = $region16
      $region15: #{discriminator_forward.13} parent=11 // pred_region
        %p156 = scmp.lt.s32.totalorder %s20, 0
        %s157 = scalar_select %p156, %s20, 0
        %s158 = scalar_lea.vmem %s2, %s157
      $region16: #{discriminator_forward.13} parent=11 // pred_fallthru
        _
    $region12: #{discriminator_forward.13} parent=5 // pred_fallthru
      _
    %p159 = scmp.lt.s32.totalorder %s9, 2
    // Predicated region
    $region17: #{discriminator_forward.13} parent=5 // pred_check
      %p160 = pneg %p159
    $region18: #{discriminator_forward.13} parent=5 // pred_check_branch
      %162 = sbr.rel (%p160) target = $region20
    $region19: #{discriminator_forward.13} parent=5 // pred_region
      // Predicated region
      $region21: #{discriminator_forward.13} parent=19 // pred_check
        %p163 = pneg %p50
      $region22: #{discriminator_forward.13} parent=19 // pred_check_branch
        %165 = sbr.rel (%p163) target = $region24
      $region23: #{discriminator_forward.13} parent=19 // pred_region
        %s166 = smul.u32 4, %s18
        %p167 = scmp.lt.s32.totalorder %s16, 0
        %s168 = scalar_select %p167, %s16, 0
        %p169 = scmp.lt.s32.totalorder %s166, 7
        %s170 = scalar_select %p169, %s166, 7
        %s171 = smul.addr %s168, 8
        %s172 = sadd.s32 %s170, %s171
        %s173 = smul.addr %s172, 4
        %s174 = scalar_lea.vmem %s0, %s173
        %s175 = smul.u32 4, %s18
      $region24: #{discriminator_forward.13} parent=19 // pred_fallthru
        _
      // Predicated region
      $region25: #{discriminator_forward.13} parent=19 // pred_check
        %p176 = pneg %p78
      $region26: #{discriminator_forward.13} parent=19 // pred_check_branch
        %178 = sbr.rel (%p176) target = $region28
      $region27: #{discriminator_forward.13} parent=19 // pred_region
        %s179 = smul.u32 64, %s18
        %p180 = scmp.lt.s32.totalorder %s179, 127
        %s181 = scalar_select %p180, %s179, 127
        %p182 = scmp.lt.s32.totalorder %s17, 0
        %s183 = scalar_select %p182, %s17, 0
        %s184 = sadd.s32 %s183, %s181
        %s185 = smul.addr %s184, 4
        %s186 = scalar_lea.vmem %s1, %s185
        %s187 = smul.u32 64, %s18
      $region28: #{discriminator_forward.13} parent=19 // pred_fallthru
        _
    $region20: #{discriminator_forward.13} parent=5 // pred_fallthru
      _
    %p188 = scmp.le.s32.totalorder 1, %s9
    %p189 = scmp.lt.s32.totalorder %s9, 3
    %p190 = pnand %p188, %p189
    %p191 = pneg %p190
    // Predicated region
    $region29: #{discriminator_forward.13} parent=5 // pred_check
      _
    $region30: #{discriminator_forward.13} parent=5 // pred_check_branch
      %193 = sbr.rel (%p190) target = $region32
    $region31: #{discriminator_forward.13} parent=5 // pred_region
      %s194 = ssub.s32 %s9, 1
      %s195 = smul.u32 4, %s21
      %p196 = scmp.lt.s32.totalorder %s19, 0
      %s197 = scalar_select %p196, %s19, 0
      %p198 = scmp.lt.s32.totalorder %s195, 7
      %s199 = scalar_select %p198, %s195, 7
      %s200 = smul.addr %s197, 8
      %s201 = sadd.s32 %s199, %s200
      %s202 = smul.addr %s201, 4
      %s203 = scalar_lea.vmem %s0, %s202
      %p204 = pneg %p56
      %p205 = pneg %p53
      %s206 = smul.u32 64, %s21
      %p207 = scmp.lt.s32.totalorder %s206, 127
      %s208 = scalar_select %p207, %s206, 127
      %p209 = scmp.lt.s32.totalorder %s20, 0
      %s210 = scalar_select %p209, %s20, 0
      %s211 = sadd.s32 %s210, %s208
      %s212 = smul.addr %s211, 4
      %s213 = scalar_lea.vmem %s1, %s212
      %p214 = pneg %p84
      %p215 = pneg %p81
      %p216 = scmp.lt.s32.totalorder %s20, 0
      %s217 = scalar_select %p216, %s20, 0
      %s218 = scalar_lea.vmem %s2, %s217
      %p219 = pneg %p110
      %p220 = pneg %p107
      %p221 = pneg %p138
      %p222 = pneg %p135
      %p223 = scmp.lt.s32.totalorder %s19, 0
      %s224 = scalar_select %p223, %s19, 0
      %p225 = scmp.lt.s32.totalorder %s20, 0
      %s226 = scalar_select %p225, %s20, 0
      %s227 = sadd.s32 %s226, %s224
      %s228 = smul.addr %s227, 8
      %s229 = scalar_lea.vmem %s3, %s228
      %s230 = smul.u32 4, %s21
      %p231 = scmp.lt.s32.totalorder %s19, 0
      %s232 = scalar_select %p231, %s19, 0
      %p233 = scmp.lt.s32.totalorder %s230, 7
      %s234 = scalar_select %p233, %s230, 7
      %s235 = smul.addr %s232, 8
      %s236 = sadd.s32 %s234, %s235
      %s237 = smul.addr %s236, 4
      %s238 = scalar_lea.vmem %s0, %s237
      %s239 = smul.u32 4, %s21
      %s240 = smul.u32 64, %s21
      %p241 = scmp.lt.s32.totalorder %s240, 127
      %s242 = scalar_select %p241, %s240, 127
      %p243 = scmp.lt.s32.totalorder %s20, 0
      %s244 = scalar_select %p243, %s20, 0
      %s245 = sadd.s32 %s244, %s242
      %s246 = smul.addr %s245, 4
      %s247 = scalar_lea.vmem %s1, %s246
      %s248 = smul.u32 64, %s21
      %p249 = scmp.lt.s32.totalorder %s20, 0
      %s250 = scalar_select %p249, %s20, 0
      %s251 = scalar_lea.vmem %s2, %s250
      %p252 = scmp.lt.s32.totalorder %s19, 0
      %s253 = scalar_select %p252, %s19, 0
      %p254 = scmp.lt.s32.totalorder %s20, 0
      %s255 = scalar_select %p254, %s20, 0
      %s256 = sadd.s32 %s255, %s253
      %s257 = smul.addr %s256, 8
      %s258 = scalar_lea.vmem %s3, %s257
      %p260 = scmp.eq.s32.totalorder %s21, 0
      // Predicated region
      $region33: #{discriminator_forward.13} parent=31 // pred_check
        %p261 = pneg %p260
      $region34: #{discriminator_forward.13} parent=31 // pred_check_branch
        %263 = sbr.rel (%p261) target = $region36
      $region35: #{discriminator_forward.13} parent=31 // pred_region
        %264 = vst [vmem:[#allocation2] sm:$0xff] 0.0
      $region36: #{discriminator_forward.13} parent=31 // pred_fallthru
        _
      %v265 = vld [vmem:[#allocation2] sm:$0xff]
      %v266 = vld [vmem:[%s238] sm:$0xff]
      %v267 = vld [vmem:[%s238 + $0x8] sm:$0xff]
      %v268 = vld [vmem:[%s247] sm:$0xf]
      %v269 = vld [vmem:[%s247 + $0x4] sm:$0xf]
      %v270 = vld [vmem:[%s247 + $0x8] sm:$0xf]
      %v271 = vld [vmem:[%s247 + $0xc] sm:$0xf]
      %v272 = vld [vmem:[%s247 + $0x10] sm:$0xf]
      %v273 = vld [vmem:[%s247 + $0x14] sm:$0xf]
      %v274 = vld [vmem:[%s247 + $0x18] sm:$0xf]
      %v275 = vld [vmem:[%s247 + $0x1c] sm:$0xf]
      %v276 = vld [vmem:[%s247 + $0x20] sm:$0xf]
      %v277 = vld [vmem:[%s247 + $0x24] sm:$0xf]
      %v278 = vld [vmem:[%s247 + $0x28] sm:$0xf]
      %v279 = vld [vmem:[%s247 + $0x2c] sm:$0xf]
      %v280 = vld [vmem:[%s247 + $0x30] sm:$0xf]
      %v281 = vld [vmem:[%s247 + $0x34] sm:$0xf]
      %v282 = vld [vmem:[%s247 + $0x38] sm:$0xf]
      %v283 = vld [vmem:[%s247 + $0x3c] sm:$0xf]
      %v284 = vld [vmem:[%s247 + $0x40] sm:$0xf]
      %v285 = vld [vmem:[%s247 + $0x44] sm:$0xf]
      %v286 = vld [vmem:[%s247 + $0x48] sm:$0xf]
      %v287 = vld [vmem:[%s247 + $0x4c] sm:$0xf]
      %v288 = vld [vmem:[%s247 + $0x50] sm:$0xf]
      %v289 = vld [vmem:[%s247 + $0x54] sm:$0xf]
      %v290 = vld [vmem:[%s247 + $0x58] sm:$0xf]
      %v291 = vld [vmem:[%s247 + $0x5c] sm:$0xf]
      %v292 = vld [vmem:[%s247 + $0x60] sm:$0xf]
      %v293 = vld [vmem:[%s247 + $0x64] sm:$0xf]
      %v294 = vld [vmem:[%s247 + $0x68] sm:$0xf]
      %v295 = vld [vmem:[%s247 + $0x6c] sm:$0xf]
      %v296 = vld [vmem:[%s247 + $0x70] sm:$0xf]
      %v297 = vld [vmem:[%s247 + $0x74] sm:$0xf]
      %v298 = vld [vmem:[%s247 + $0x78] sm:$0xf]
      %v299 = vld [vmem:[%s247 + $0x7c] sm:$0xf]
      %v300 = vld [vmem:[%s247 + $0x80] sm:$0xf]
      %v301 = vld [vmem:[%s247 + $0x84] sm:$0xf]
      %v302 = vld [vmem:[%s247 + $0x88] sm:$0xf]
      %v303 = vld [vmem:[%s247 + $0x8c] sm:$0xf]
      %v304 = vld [vmem:[%s247 + $0x90] sm:$0xf]
      %v305 = vld [vmem:[%s247 + $0x94] sm:$0xf]
      %v306 = vld [vmem:[%s247 + $0x98] sm:$0xf]
      %v307 = vld [vmem:[%s247 + $0x9c] sm:$0xf]
      %v308 = vld [vmem:[%s247 + $0xa0] sm:$0xf]
      %v309 = vld [vmem:[%s247 + $0xa4] sm:$0xf]
      %v310 = vld [vmem:[%s247 + $0xa8] sm:$0xf]
      %v311 = vld [vmem:[%s247 + $0xac] sm:$0xf]
      %v312 = vld [vmem:[%s247 + $0xb0] sm:$0xf]
      %v313 = vld [vmem:[%s247 + $0xb4] sm:$0xf]
      %v314 = vld [vmem:[%s247 + $0xb8] sm:$0xf]
      %v315 = vld [vmem:[%s247 + $0xbc] sm:$0xf]
      %v316 = vld [vmem:[%s247 + $0xc0] sm:$0xf]
      %v317 = vld [vmem:[%s247 + $0xc4] sm:$0xf]
      %v318 = vld [vmem:[%s247 + $0xc8] sm:$0xf]
      %v319 = vld [vmem:[%s247 + $0xcc] sm:$0xf]
      %v320 = vld [vmem:[%s247 + $0xd0] sm:$0xf]
      %v321 = vld [vmem:[%s247 + $0xd4] sm:$0xf]
      %v322 = vld [vmem:[%s247 + $0xd8] sm:$0xf]
      %v323 = vld [vmem:[%s247 + $0xdc] sm:$0xf]
      %v324 = vld [vmem:[%s247 + $0xe0] sm:$0xf]
      %v325 = vld [vmem:[%s247 + $0xe4] sm:$0xf]
      %v326 = vld [vmem:[%s247 + $0xe8] sm:$0xf]
      %v327 = vld [vmem:[%s247 + $0xec] sm:$0xf]
      %v328 = vld [vmem:[%s247 + $0xf0] sm:$0xf]
      %v329 = vld [vmem:[%s247 + $0xf4] sm:$0xf]
      %v330 = vld [vmem:[%s247 + $0xf8] sm:$0xf]
      %v331 = vld [vmem:[%s247 + $0xfc] sm:$0xf]
      %v334 = vunpack.c.l.b16 %v266
      %v335 = vunpack.c.h.b16 %v266
      %v336 = vunpack.c.l.b16 %v267
      %v337 = vunpack.c.h.b16 %v267
      %v338 = vpack.c.b16 %v334, %v334
      %v339 = vpack.c.b16 %v335, %v335
      %v340 = vpack.c.b16 %v336, %v336
      %v341 = vpack.c.b16 %v337, %v337
      %v410 = vunpack.c.l.b16 %v268
      %v411 = vunpack.c.l.b16 %v269
      %v412 = vunpack.c.l.b16 %v270
      %v413 = vunpack.c.l.b16 %v271
      %v414 = vunpack.c.l.b16 %v272
      %v415 = vunpack.c.l.b16 %v273
      %v416 = vunpack.c.l.b16 %v274
      %v417 = vunpack.c.l.b16 %v275
      %v418 = vunpack.c.l.b16 %v276
      %v419 = vunpack.c.l.b16 %v277
      %v420 = vunpack.c.l.b16 %v278
      %v421 = vunpack.c.l.b16 %v279
      %v422 = vunpack.c.l.b16 %v280
      %v423 = vunpack.c.l.b16 %v281
      %v424 = vunpack.c.l.b16 %v282
      %v425 = vunpack.c.l.b16 %v283
      %v426 = vunpack.c.l.b16 %v284
      %v427 = vunpack.c.l.b16 %v285
      %v428 = vunpack.c.l.b16 %v286
      %v429 = vunpack.c.l.b16 %v287
      %v430 = vunpack.c.l.b16 %v288
      %v431 = vunpack.c.l.b16 %v289
      %v432 = vunpack.c.l.b16 %v290
      %v433 = vunpack.c.l.b16 %v291
      %v434 = vunpack.c.l.b16 %v292
      %v435 = vunpack.c.l.b16 %v293
      %v436 = vunpack.c.l.b16 %v294
      %v437 = vunpack.c.l.b16 %v295
      %v438 = vunpack.c.l.b16 %v296
      %v439 = vunpack.c.l.b16 %v297
      %v440 = vunpack.c.l.b16 %v298
      %v441 = vunpack.c.l.b16 %v299
      %v442 = vunpack.c.l.b16 %v300
      %v443 = vunpack.c.l.b16 %v301
      %v444 = vunpack.c.l.b16 %v302
      %v445 = vunpack.c.l.b16 %v303
      %v446 = vunpack.c.l.b16 %v304
      %v447 = vunpack.c.l.b16 %v305
      %v448 = vunpack.c.l.b16 %v306
      %v449 = vunpack.c.l.b16 %v307
      %v450 = vunpack.c.l.b16 %v308
      %v451 = vunpack.c.l.b16 %v309
      %v452 = vunpack.c.l.b16 %v310
      %v453 = vunpack.c.l.b16 %v311
      %v454 = vunpack.c.l.b16 %v312
      %v455 = vunpack.c.l.b16 %v313
      %v456 = vunpack.c.l.b16 %v314
      %v457 = vunpack.c.l.b16 %v315
      %v458 = vunpack.c.l.b16 %v316
      %v459 = vunpack.c.l.b16 %v317
      %v460 = vunpack.c.l.b16 %v318
      %v461 = vunpack.c.l.b16 %v319
      %v462 = vunpack.c.l.b16 %v320
      %v463 = vunpack.c.l.b16 %v321
      %v464 = vunpack.c.l.b16 %v322
      %v465 = vunpack.c.l.b16 %v323
      %v466 = vunpack.c.l.b16 %v324
      %v467 = vunpack.c.l.b16 %v325
      %v468 = vunpack.c.l.b16 %v326
      %v469 = vunpack.c.l.b16 %v327
      %v470 = vunpack.c.l.b16 %v328
      %v471 = vunpack.c.l.b16 %v329
      %v472 = vunpack.c.l.b16 %v330
      %v473 = vunpack.c.l.b16 %v331
      %v474 = vpack.c.b16 %v411, %v410
      %v475 = vpack.c.b16 %v413, %v412
      %v476 = vpack.c.b16 %v415, %v414
      %v477 = vpack.c.b16 %v417, %v416
      %v478 = vpack.c.b16 %v419, %v418
      %v479 = vpack.c.b16 %v421, %v420
      %v480 = vpack.c.b16 %v423, %v422
      %v481 = vpack.c.b16 %v425, %v424
      %v482 = vpack.c.b16 %v427, %v426
      %v483 = vpack.c.b16 %v429, %v428
      %v484 = vpack.c.b16 %v431, %v430
      %v485 = vpack.c.b16 %v433, %v432
      %v486 = vpack.c.b16 %v435, %v434
      %v487 = vpack.c.b16 %v437, %v436
      %v488 = vpack.c.b16 %v439, %v438
      %v489 = vpack.c.b16 %v441, %v440
      %v490 = vpack.c.b16 %v443, %v442
      %v491 = vpack.c.b16 %v445, %v444
      %v492 = vpack.c.b16 %v447, %v446
      %v493 = vpack.c.b16 %v449, %v448
      %v494 = vpack.c.b16 %v451, %v450
      %v495 = vpack.c.b16 %v453, %v452
      %v496 = vpack.c.b16 %v455, %v454
      %v497 = vpack.c.b16 %v457, %v456
      %v498 = vpack.c.b16 %v459, %v458
      %v499 = vpack.c.b16 %v461, %v460
      %v500 = vpack.c.b16 %v463, %v462
      %v501 = vpack.c.b16 %v465, %v464
      %v502 = vpack.c.b16 %v467, %v466
      %v503 = vpack.c.b16 %v469, %v468
      %v504 = vpack.c.b16 %v471, %v470
      %v505 = vpack.c.b16 %v473, %v472
      %538 = vmatprep.subr.bf16.mxu0 0
      %539 = vmatpush1.bf16.msra.mxu0 %v474
      %540 = vmatprep.subr.bf16.mxu0 0
      %541 = vmatpush1.bf16.msra.mxu0 %v475
      %542 = vmatprep.subr.bf16.mxu0 0
      %543 = vmatpush1.bf16.msra.mxu0 %v476
      %544 = vmatprep.subr.bf16.mxu0 0
      %545 = vmatpush1.bf16.msra.mxu0 %v477
      %546 = vmatprep.subr.bf16.mxu0 0
      %547 = vmatpush1.bf16.msra.mxu0 %v478
      %548 = vmatprep.subr.bf16.mxu0 0
      %549 = vmatpush1.bf16.msra.mxu0 %v479
      %550 = vmatprep.subr.bf16.mxu0 0
      %551 = vmatpush1.bf16.msra.mxu0 %v480
      %552 = vmatprep.subr.bf16.mxu0 0
      %553 = vmatpush1.bf16.msra.mxu0 %v481
      %554 = vmatprep.subr.bf16.mxu0 0
      %555 = vmatpush1.bf16.msra.mxu0 %v482
      %556 = vmatprep.subr.bf16.mxu0 0
      %557 = vmatpush1.bf16.msra.mxu0 %v483
      %558 = vmatprep.subr.bf16.mxu0 0
      %559 = vmatpush1.bf16.msra.mxu0 %v484
      %560 = vmatprep.subr.bf16.mxu0 0
      %561 = vmatpush1.bf16.msra.mxu0 %v485
      %562 = vmatprep.subr.bf16.mxu0 0
      %563 = vmatpush1.bf16.msra.mxu0 %v486
      %564 = vmatprep.subr.bf16.mxu0 0
      %565 = vmatpush1.bf16.msra.mxu0 %v487
      %566 = vmatprep.subr.bf16.mxu0 0
      %567 = vmatpush1.bf16.msra.mxu0 %v488
      %568 = vmatprep.subr.bf16.mxu0 0
      %569 = vmatpush1.bf16.msra.mxu0 %v489
      %570 = vmatprep.mubr.bf16.mxu0 %v339
      %571 = vmatmul.mubr.bf16.gmra.mrb[0].mxu0 %v338
      %v572 = vpop.f32.mrb[0].mxu0
      %v573 = vadd.f32 0.0, %v572
      %v574 = vpop.f32.mrb[0].mxu0
      %v575 = vpop.f32.mrb[0].mxu0
      %v576 = vpop.f32.mrb[0].mxu0
      %577 = vdwg.mxu0
      %578 = vmatprep.subr.bf16.mxu0 0
      %579 = vmatpush1.bf16.msra.mxu0 %v490
      %580 = vmatprep.subr.bf16.mxu0 0
      %581 = vmatpush1.bf16.msra.mxu0 %v491
      %582 = vmatprep.subr.bf16.mxu0 0
      %583 = vmatpush1.bf16.msra.mxu0 %v492
      %584 = vmatprep.subr.bf16.mxu0 0
      %585 = vmatpush1.bf16.msra.mxu0 %v493
      %586 = vmatprep.subr.bf16.mxu0 0
      %587 = vmatpush1.bf16.msra.mxu0 %v494
      %588 = vmatprep.subr.bf16.mxu0 0
      %589 = vmatpush1.bf16.msra.mxu0 %v495
      %590 = vmatprep.subr.bf16.mxu0 0
      %591 = vmatpush1.bf16.msra.mxu0 %v496
      %592 = vmatprep.subr.bf16.mxu0 0
      %593 = vmatpush1.bf16.msra.mxu0 %v497
      %594 = vmatprep.subr.bf16.mxu0 0
      %595 = vmatpush1.bf16.msra.mxu0 %v498
      %596 = vmatprep.subr.bf16.mxu0 0
      %597 = vmatpush1.bf16.msra.mxu0 %v499
      %598 = vmatprep.subr.bf16.mxu0 0
      %599 = vmatpush1.bf16.msra.mxu0 %v500
      %600 = vmatprep.subr.bf16.mxu0 0
      %601 = vmatpush1.bf16.msra.mxu0 %v501
      %602 = vmatprep.subr.bf16.mxu0 0
      %603 = vmatpush1.bf16.msra.mxu0 %v502
      %604 = vmatprep.subr.bf16.mxu0 0
      %605 = vmatpush1.bf16.msra.mxu0 %v503
      %606 = vmatprep.subr.bf16.mxu0 0
      %607 = vmatpush1.bf16.msra.mxu0 %v504
      %608 = vmatprep.subr.bf16.mxu0 0
      %609 = vmatpush1.bf16.msra.mxu0 %v505
      %610 = vmatprep.mubr.bf16.mxu0 %v341
      %611 = vmatmul.mubr.bf16.gmra.mrb[0].mxu0 %v340
      %v612 = vpop.f32.mrb[0].mxu0
      %v613 = vadd.f32 %v573, %v612
      %v614 = vpop.f32.mrb[0].mxu0
      %v615 = vpop.f32.mrb[0].mxu0
      %v616 = vpop.f32.mrb[0].mxu0
      %617 = vdwg.mxu0
      %v618 = vadd.f32 %v265, %v613
      %619 = vst [vmem:[#allocation2] sm:$0xff] %v618
      %p620 = scmp.eq.s32.totalorder %s21, 1
      // Predicated region
      $region37: #{discriminator_forward.13} parent=31 // pred_check
        %p621 = pneg %p620
      $region38: #{discriminator_forward.13} parent=31 // pred_check_branch
        %623 = sbr.rel (%p621) target = $region40
      $region39: #{discriminator_forward.13} parent=31 // pred_region
        %v624 = vld [vmem:[#allocation2] sm:$0xff]
        %v625 = vld [vmem:[%s251] sm:$0x1]
        %v627 = vlaneseq
        %v628 = vshrl.u32 %v627, 7
        %v629 = vsub.s32 0, %v628
        %v630 = vrot.slane %v625, %v629
        %v632 = vadd.f32 %v624, %v630
        %633 = vst [vmem:[%s258] sm:$0xff] %v632
      $region40: #{discriminator_forward.13} parent=31 // pred_fallthru
        _
      %p634 = scmp.lt.s32.totalorder %s19, 0
      %s635 = scalar_select %p634, %s19, 0
      %p636 = scmp.lt.s32.totalorder %s20, 0
      %s637 = scalar_select %p636, %s20, 0
      %s638 = sadd.s32 %s637, %s635
      %s639 = smul.addr %s638, 8
      %s640 = scalar_lea.vmem %s3, %s639
      // Predicated region
      $region41: #{discriminator_forward.13} parent=31 // pred_check
        %p641 = pneg %p135
      $region42: #{discriminator_forward.13} parent=31 // pred_check_branch
        %643 = sbr.rel (%p641) target = $region44
      $region43: #{discriminator_forward.13} parent=31 // pred_region
        _
      $region44: #{discriminator_forward.13} parent=31 // pred_fallthru
        _
      // Predicated region
      $region45: #{discriminator_forward.13} parent=31 // pred_check
        %p644 = pneg %p135
      $region46: #{discriminator_forward.13} parent=31 // pred_check_branch
        %646 = sbr.rel (%p644) target = $region48
      $region47: #{discriminator_forward.13} parent=31 // pred_region
        %p647 = scmp.lt.s32.totalorder %s19, 0
        %s648 = scalar_select %p647, %s19, 0
        %p649 = scmp.lt.s32.totalorder %s20, 0
        %s650 = scalar_select %p649, %s20, 0
        %s651 = sadd.s32 %s650, %s648
        %s652 = smul.addr %s651, 8
        %s653 = scalar_lea.vmem %s3, %s652
      $region48: #{discriminator_forward.13} parent=31 // pred_fallthru
        _
    $region32: #{discriminator_forward.13} parent=5 // pred_fallthru
      _
    %p654 = scmp.le.s32.totalorder 2, %s9
    // Predicated region
    $region49: #{discriminator_forward.13} parent=5 // pred_check
      %p655 = pneg %p654
    $region50: #{discriminator_forward.13} parent=5 // pred_check_branch
      %657 = sbr.rel (%p655) target = $region52
    $region51: #{discriminator_forward.13} parent=5 // pred_region
      %s658 = ssub.s32 %s9, 2
    $region52: #{discriminator_forward.13} parent=5 // pred_fallthru
      _
  $region6: #{discriminator_forward.13} parent=0 // loop_footer
    %s13 = sadd.s32 1, %s9
  $region7: #{discriminator_forward.13} parent=0 // loop_footer_branch
    %8 = sbr.rel target = $region3
  $region8: #{discriminator_forward.13} parent=0 // loop_exit
    _

</llo_original>
